<compile_context>
chip_gen: v7x
topology: tpu7x:2x2x1
jax: 0.10.0
libtpu: 0.0.40
codegen_flags: <defaults>
</compile_context>

<pallas_src>
import functools

import jax
import jax.numpy as jnp
from jax import lax
from jax.experimental import pallas as pl
from jax.experimental.pallas import tpu as pltpu

VIEW = 2  # opt.args.view


# ------------------------------ sizing helpers -------------------------------

def _vmem_limit_bytes():
    """Generation-aware scoped-VMEM request with ~25% headroom."""
    try:
        cap = int(pltpu.get_tpu_info().vmem_capacity_bytes)
    except Exception:
        return 64 * 1024 * 1024  # known-safe fallback
    return max(32 * 1024 * 1024, min(cap * 3 // 4, 110 * 1024 * 1024))


def _pick_tile(n_pad, vmem_limit):
    """Row-tile size: largest of {128, 256, 512} dividing the padded N such
    that the heaviest kernel (~8 live double-buffered (tm, N) f32 tiles) fits
    well inside the scoped-VMEM limit."""
    if n_pad <= 128:
        return n_pad
    budget = int(vmem_limit * 0.7)
    best = 128
    for t in (128, 256, 512):
        if n_pad % t == 0 and 8 * t * n_pad * 4 <= budget:
            best = t
    return best


def _pad_rows(x, n_pad):
    pad = n_pad - x.shape[0]
    return x if pad == 0 else jnp.pad(x, ((0, pad), (0, 0)))


def _pad_square(x, n_pad):
    pad = n_pad - x.shape[0]
    return x if pad == 0 else jnp.pad(x, ((0, pad), (0, pad)))


def _scalar_rows(*vals):
    """Pack scalar partial sums into rows 0..k-1 of an (8, 128) f32 tile
    (lane-dense store; keeps the grid axis 'parallel' instead of serializing
    on an SMEM accumulator)."""
    rows = lax.broadcasted_iota(jnp.int32, (8, 128), 0)
    out = jnp.zeros((8, 128), jnp.float32)
    for r, v in enumerate(vals):
        out = out + jnp.where(rows == r, v, 0.0)
    return out


# ------------------------------ GAE encoder ----------------------------------

def _encoder_kernel(xw_ref, adj_ref, z_ref):
    # z_tile = adj_tile @ XW ; XW = x @ W_enc is precomputed outside so each
    # grid step only runs the big streaming matmul.
    z_ref[...] = jnp.dot(adj_ref[...], xw_ref[...],
                         preferred_element_type=jnp.float32)


def gcn_encode(xw, adj, *, tm, vmem_limit):
    n, zdim = xw.shape
    gm = n // tm
    return pl.pallas_call(
        _encoder_kernel,
        out_shape=jax.ShapeDtypeStruct((n, zdim), jnp.float32),
        grid=(gm,),
        in_specs=[
            pl.BlockSpec((n, zdim), lambda i: (0, 0)),   # XW (resident, tiny)
            pl.BlockSpec((tm, n), lambda i: (i, 0)),     # adj row tile
        ],
        out_specs=pl.BlockSpec((tm, zdim), lambda i: (i, 0)),
        compiler_params=pltpu.CompilerParams(
            dimension_semantics=("parallel",),
            vmem_limit_bytes=vmem_limit),
    )(xw, adj)


# --------------------- fused decoder + reconstruction loss -------------------

def _recon_single_kernel(l_full_ref, l_tile_ref, lw_ref, x_ref, adj_ref,
                         part_ref, *, n_real):
    i = pl.program_id(0)
    tm, n_pad = adj_ref.shape

    # decoder: x_hat_tile = adj_tile @ (L @ W_dec)   (LW precomputed outside)
    x_hat = jnp.dot(adj_ref[...], lw_ref[...], preferred_element_type=jnp.float32)
    dx = x_ref[...] - x_hat
    sum_x = jnp.sum(dx * dx)

    # A_hat_tile = sigmoid(L[rows] @ L^T); decoder A_hat == encoder/fusion
    # adj_hat, so (A_hat + a)/2 in the reference is just this quantity.
    a_hat = jax.nn.sigmoid(
        lax.dot_general(l_tile_ref[...], l_full_ref[...],
                        (((1,), (1,)), ((), ())),
                        preferred_element_type=jnp.float32))
    da = adj_ref[...] - a_hat
    if n_pad != n_real:  # mask zero-padded rows/cols (sigmoid(0) = 0.5 there)
        rows = i * tm + lax.broadcasted_iota(jnp.int32, (tm, n_pad), 0)
        cols = lax.broadcasted_iota(jnp.int32, (tm, n_pad), 1)
        da = jnp.where((rows < n_real) & (cols < n_real), da, 0.0)
    sum_a = jnp.sum(da * da)

    part_ref[0] = _scalar_rows(sum_x, sum_a)


def _recon_pair_kernel(l_full_ref, l_tile_ref, lwf_ref, lws_ref, x_ref,
                       adjf_ref, adjs_ref, part_ref, *, n_real):
    i = pl.program_id(0)
    tm, n_pad = adjf_ref.shape

    # Shared latent => a_hat is identical for the feature and spatial graphs;
    # compute sigmoid(L L^T) once per tile (halves EUP + L L^T MXU work).
    a_hat = jax.nn.sigmoid(
        lax.dot_general(l_tile_ref[...], l_full_ref[...],
                        (((1,), (1,)), ((), ())),
                        preferred_element_type=jnp.float32))

    x_hat_f = jnp.dot(adjf_ref[...], lwf_ref[...], preferred_element_type=jnp.float32)
    x_hat_s = jnp.dot(adjs_ref[...], lws_ref[...], preferred_element_type=jnp.float32)
    dx_f = x_ref[...] - x_hat_f
    dx_s = x_ref[...] - x_hat_s
    sum_x = jnp.sum(dx_f * dx_f) + jnp.sum(dx_s * dx_s)

    da_f = adjf_ref[...] - a_hat
    da_s = adjs_ref[...] - a_hat
    if n_pad != n_real:
        rows = i * tm + lax.broadcasted_iota(jnp.int32, (tm, n_pad), 0)
        cols = lax.broadcasted_iota(jnp.int32, (tm, n_pad), 1)
        valid = (rows < n_real) & (cols < n_real)
        da_f = jnp.where(valid, da_f, 0.0)
        da_s = jnp.where(valid, da_s, 0.0)
    sum_a = jnp.sum(da_f * da_f) + jnp.sum(da_s * da_s)

    part_ref[0] = _scalar_rows(sum_x, sum_a)


def recon_loss_single(latent, w_dec, x, adj, *, n_real, tm, vmem_limit):
    """MSE(x, adj @ (L W_dec)) + MSE(adj, sigmoid(L L^T)), row-tiled."""
    n_pad, zdim = latent.shape
    d = x.shape[1]
    gm = n_pad // tm
    lw = jnp.dot(latent, w_dec)  # hoisted L @ W_dec (tiny, once in XLA)
    part = pl.pallas_call(
        functools.partial(_recon_single_kernel, n_real=n_real),
        out_shape=jax.ShapeDtypeStruct((gm, 8, 128), jnp.float32),
        grid=(gm,),
        in_specs=[
            pl.BlockSpec((n_pad, zdim), lambda i: (0, 0)),  # L (resident)
            pl.BlockSpec((tm, zdim), lambda i: (i, 0)),     # L row tile
            pl.BlockSpec((n_pad, d), lambda i: (0, 0)),     # LW (resident)
            pl.BlockSpec((tm, d), lambda i: (i, 0)),        # x row tile
            pl.BlockSpec((tm, n_pad), lambda i: (i, 0)),    # adj row tile
        ],
        out_specs=pl.BlockSpec((1, 8, 128), lambda i: (i, 0, 0)),
        compiler_params=pltpu.CompilerParams(
            dimension_semantics=("parallel",),
            vmem_limit_bytes=vmem_limit),
    )(latent, latent, lw, x, adj)
    sum_x = jnp.sum(part[:, 0, 0])
    sum_a = jnp.sum(part[:, 1, 0])
    return sum_x / (n_real * d) + sum_a / (n_real * n_real)


def recon_loss_pair(latent, w_dec_f, w_dec_s, x, adj_f, adj_s,
                    *, n_real, tm, vmem_limit):
    """Fused feature+spatial reconstruction losses sharing one latent."""
    n_pad, zdim = latent.shape
    d = x.shape[1]
    gm = n_pad // tm
    lw_f = jnp.dot(latent, w_dec_f)
    lw_s = jnp.dot(latent, w_dec_s)
    part = pl.pallas_call(
        functools.partial(_recon_pair_kernel, n_real=n_real),
        out_shape=jax.ShapeDtypeStruct((gm, 8, 128), jnp.float32),
        grid=(gm,),
        in_specs=[
            pl.BlockSpec((n_pad, zdim), lambda i: (0, 0)),  # L (resident)
            pl.BlockSpec((tm, zdim), lambda i: (i, 0)),     # L row tile
            pl.BlockSpec((n_pad, d), lambda i: (0, 0)),     # LW_f (resident)
            pl.BlockSpec((n_pad, d), lambda i: (0, 0)),     # LW_s (resident)
            pl.BlockSpec((tm, d), lambda i: (i, 0)),        # x row tile
            pl.BlockSpec((tm, n_pad), lambda i: (i, 0)),    # adj_f row tile
            pl.BlockSpec((tm, n_pad), lambda i: (i, 0)),    # adj_s row tile
        ],
        out_specs=pl.BlockSpec((1, 8, 128), lambda i: (i, 0, 0)),
        compiler_params=pltpu.CompilerParams(
            dimension_semantics=("parallel",),
            vmem_limit_bytes=vmem_limit),
    )(latent, latent, lw_f, lw_s, x, adj_f, adj_s)
    sum_x = jnp.sum(part[:, 0, 0])
    sum_a = jnp.sum(part[:, 1, 0])
    return sum_x / (n_real * d) + sum_a / (n_real * n_real)


# --------------------------- stage-2 self-expression -------------------------

def _selfexpr_kernel(c1_full_ref, c1_tile_ref,
                     h1_full_ref, h1_tile_ref,
                     h2_full_ref, h2_tile_ref,
                     g1_ref, g2_ref,
                     d1_ref, d2_ref,
                     sh1_ref, sh2_ref, a_ref, part_ref):
    i = pl.program_id(0)
    tm, n = d1_ref.shape

    # Per-tile off-diagonal mask (pad rows/cols of D are zero already).
    rows = i * tm + lax.broadcasted_iota(jnp.int32, (tm, n), 0)
    cols = lax.broadcasted_iota(jnp.int32, (tm, n), 1)
    off = rows != cols
    d1 = jnp.where(off, d1_ref[...], 0.0)
    d2 = jnp.where(off, d2_ref[...], 0.0)

    # SH = (D + C) H decomposed as D @ H + C1_tile @ (C1^T H); the grams are
    # precomputed outside, so D @ H does not wait on c_tile and the tm x n
    # add is off the MXU critical path.
    sh1 = (jnp.dot(d1, h1_full_ref[...], preferred_element_type=jnp.float32)
           + jnp.dot(c1_tile_ref[...], g1_ref[...],
                     preferred_element_type=jnp.float32))
    sh2 = (jnp.dot(d2, h2_full_ref[...], preferred_element_type=jnp.float32)
           + jnp.dot(c1_tile_ref[...], g2_ref[...],
                     preferred_element_type=jnp.float32))
    sh1_ref[...] = sh1
    sh2_ref[...] = sh2

    # Unsymmetrized A = C + (1/view)(D1 + D2); S = 0.5*(A + A^T) outside is
    # exact because C1 C1^T is symmetric -> no column tiles / XLU transposes.
    c_tile = lax.dot_general(c1_tile_ref[...], c1_full_ref[...],
                             (((1,), (1,)), ((), ())),
                             preferred_element_type=jnp.float32)
    a_ref[...] = c_tile + (1.0 / float(VIEW)) * (d1 + d2)

    diff1 = sh1 - h1_tile_ref[...]
    diff2 = sh2 - h2_tile_ref[...]
    part_ref[0] = _scalar_rows(
        jnp.sum(diff1 * diff1),      # self-expression, omics1
        jnp.sum(diff2 * diff2),      # self-expression, omics2
        jnp.sum(d1 * d1),            # ||D1||^2
        jnp.sum(d2 * d2),            # ||D2||^2
        jnp.sum(jnp.abs(d1 * d2)),   # discriminative L1
    )


def self_expression(H1, H2, D1, D2, C1, *, n_real, tm, vmem_limit):
    n_pad, zdim = H1.shape
    ranks = C1.shape[1]
    gm = n_pad // tm
    g1 = jnp.dot(C1.T, H1)  # (ranks, zdim) grams, precomputed once
    g2 = jnp.dot(C1.T, H2)

    sh1, sh2, a_mat, part = pl.pallas_call(
        _selfexpr_kernel,
        out_shape=(jax.ShapeDtypeStruct((n_pad, zdim), jnp.float32),
                   jax.ShapeDtypeStruct((n_pad, zdim), jnp.float32),
                   jax.ShapeDtypeStruct((n_pad, n_pad), jnp.float32),
                   jax.ShapeDtypeStruct((gm, 8, 128), jnp.float32)),
        grid=(gm,),
        in_specs=[
            pl.BlockSpec((n_pad, ranks), lambda i: (0, 0)),  # C1 (resident)
            pl.BlockSpec((tm, ranks), lambda i: (i, 0)),     # C1 row tile
            pl.BlockSpec((n_pad, zdim), lambda i: (0, 0)),   # H1 (resident)
            pl.BlockSpec((tm, zdim), lambda i: (i, 0)),      # H1 row tile
            pl.BlockSpec((n_pad, zdim), lambda i: (0, 0)),   # H2 (resident)
            pl.BlockSpec((tm, zdim), lambda i: (i, 0)),      # H2 row tile
            pl.BlockSpec((ranks, zdim), lambda i: (0, 0)),   # C1^T H1
            pl.BlockSpec((ranks, zdim), lambda i: (0, 0)),   # C1^T H2
            pl.BlockSpec((tm, n_pad), lambda i: (i, 0)),     # D1 row tile
            pl.BlockSpec((tm, n_pad), lambda i: (i, 0)),     # D2 row tile
        ],
        out_specs=(pl.BlockSpec((tm, zdim), lambda i: (i, 0)),
                   pl.BlockSpec((tm, zdim), lambda i: (i, 0)),
                   pl.BlockSpec((tm, n_pad), lambda i: (i, 0)),
                   pl.BlockSpec((1, 8, 128), lambda i: (i, 0, 0))),
        compiler_params=pltpu.CompilerParams(
            dimension_semantics=("parallel",),
            vmem_limit_bytes=vmem_limit),
    )(C1, C1, H1, H1, H2, H2, g1, g2, D1, D2)

    sums = jnp.sum(part[:, :5, 0], axis=0)
    view = float(VIEW)
    csq = jnp.sum(jnp.square(jnp.dot(C1.T, C1)))  # ||C1 C1^T||_F^2 exactly
    loss_self = (sums[0] + sums[1]) / (view * n_real * zdim)
    loss_reg = (csq + sums[2] + sums[3]) / (view + 1.0)
    loss_dis = sums[4]

    a_real = a_mat[:n_real, :n_real]
    s_mat = 0.5 * (a_real + a_real.T)  # exact symmetrization of the reference S
    return sh1, sh2, s_mat, loss_self, loss_reg, loss_dis


# ------------------------------- model wrapper -------------------------------

@functools.partial(jax.jit, static_argnames=('stage',))
def spamics_forward(params, omics_1, omics_2, adj_f1, adj_f2, adj_s1, adj_s2,
                    stage=0):
    n_real = omics_1.shape[0]
    n1, n2 = omics_1.shape[1], omics_2.shape[1]
    beta1 = n2 / (n1 + n2)   # compute_weights
    beta2 = n1 / (n1 + n2)

    n_pad = ((n_real + 127) // 128) * 128
    vmem_limit = _vmem_limit_bytes()
    tm = _pick_tile(n_pad, vmem_limit)

    x1 = _pad_rows(omics_1, n_pad)
    x2 = _pad_rows(omics_2, n_pad)
    af1 = _pad_square(adj_f1, n_pad)
    af2 = _pad_square(adj_f2, n_pad)
    as1 = _pad_square(adj_s1, n_pad)
    as2 = _pad_square(adj_s2, n_pad)

    # Hoisted XW = x @ W_enc (tiny (N, gcn_z) matmuls, done once in XLA).
    z1f = gcn_encode(jnp.dot(x1, params['w_enc_f1']), af1, tm=tm, vmem_limit=vmem_limit)
    z2f = gcn_encode(jnp.dot(x2, params['w_enc_f2']), af2, tm=tm, vmem_limit=vmem_limit)
    z1s = gcn_encode(jnp.dot(x1, params['w_enc_s1']), as1, tm=tm, vmem_limit=vmem_limit)
    z2s = gcn_encode(jnp.dot(x2, params['w_enc_s2']), as2, tm=tm, vmem_limit=vmem_limit)

    kw = dict(n_real=n_real, tm=tm, vmem_limit=vmem_limit)

    if stage == 0:
        l1 = (recon_loss_single(z1f, params['w_dec_f1'], x1, af1, **kw)
              + recon_loss_single(z1s, params['w_dec_s1'], x1, as1, **kw))
        l2 = (recon_loss_single(z2f, params['w_dec_f2'], x2, af2, **kw)
              + recon_loss_single(z2s, params['w_dec_s2'], x2, as2, **kw))
        return beta1 * l1 + beta2 * l2

    # WeightFusion: tiny (N, gcn_z) elementwise combine -> plain jnp.
    fw1 = jax.nn.softmax(params['fusion_w1'], axis=0)
    fw2 = jax.nn.softmax(params['fusion_w2'], axis=0)
    H1 = fw1[0] * z1f + fw1[1] * z1s
    H2 = fw2[0] * z2f + fw2[1] * z2s

    def rec_pair(lat1, lat2):
        r1 = recon_loss_pair(lat1, params['w_dec_f1'], params['w_dec_s1'],
                             x1, af1, as1, **kw)
        r2 = recon_loss_pair(lat2, params['w_dec_f2'], params['w_dec_s2'],
                             x2, af2, as2, **kw)
        return beta1 * r1 + beta2 * r2

    if stage == 1:
        return rec_pair(H1, H2)

    # stage == 2
    D1 = _pad_square(params['D_omics1'], n_pad)
    D2 = _pad_square(params['D_omics2'], n_pad)
    C1 = _pad_rows(params['C1'], n_pad)
    SH1, SH2, S, loss_self, loss_reg, loss_dis = self_expression(
        H1, H2, D1, D2, C1, n_real=n_real, tm=tm, vmem_limit=vmem_limit)
    loss_rec = rec_pair(SH1, SH2)
    return loss_rec, loss_self, loss_reg, loss_dis, S


def init_params(key, num_sample, n_omics1, n_omics2, gcn_z, ranks, view=VIEW):
    keys = jax.random.split(key, 8)

    def he(k, fan_in, shape):
        return (jax.random.normal(k, shape, jnp.float32)
                * jnp.sqrt(2.0 / fan_in)).astype(jnp.float32)

    return {
        'w_enc_f1': he(keys[0], n_omics1, (n_omics1, gcn_z)),
        'w_dec_f1': he(keys[1], gcn_z, (gcn_z, n_omics1)),
        'w_enc_f2': he(keys[2], n_omics2, (n_omics2, gcn_z)),
        'w_dec_f2': he(keys[3], gcn_z, (gcn_z, n_omics2)),
        'w_enc_s1': he(keys[4], n_omics1, (n_omics1, gcn_z)),
        'w_dec_s1': he(keys[5], gcn_z, (gcn_z, n_omics1)),
        'w_enc_s2': he(keys[6], n_omics2, (n_omics2, gcn_z)),
        'w_dec_s2': he(keys[7], gcn_z, (gcn_z, n_omics2)),
        'D_omics1': 1e-4 * jnp.ones((num_sample, num_sample), jnp.float32),
        'D_omics2': 1e-4 * jnp.ones((num_sample, num_sample), jnp.float32),
        'C1': 1e-4 * jnp.ones((num_sample, ranks), jnp.float32),
        'fusion_w1': jnp.ones((view, gcn_z), jnp.float32),
        'fusion_w2': jnp.ones((view, gcn_z), jnp.float32),
    }


if __name__ == "__main__":
    # N = 384 exercises a real 3-step row-tile grid (tm = 128, no padding).
    N, n_omics1, n_omics2, gcn_z, ranks = 384, 32, 24, 8, 4

    key = jax.random.PRNGKey(0)
    k_par, k1, k2, ka1, ka2, ka3, ka4 = jax.random.split(key, 7)
    params = init_params(k_par, N, n_omics1, n_omics2, gcn_z, ranks)

    omics_1 = jax.random.normal(k1, (N, n_omics1), jnp.float32)
    omics_2 = jax.random.normal(k2, (N, n_omics2), jnp.float32)

    def rand_adj(k):
        a = jax.random.uniform(k, (N, N), jnp.float32)
        a = 0.5 * (a + a.T)
        return a / jnp.sum(a, axis=1, keepdims=True)

    adj_f1, adj_f2 = rand_adj(ka1), rand_adj(ka2)
    adj_s1, adj_s2 = rand_adj(ka3), rand_adj(ka4)

    loss_stage0 = spamics_forward(params, omics_1, omics_2,
                                  adj_f1, adj_f2, adj_s1, adj_s2, stage=0)
    loss_stage1 = spamics_forward(params, omics_1, omics_2,
                                  adj_f1, adj_f2, adj_s1, adj_s2, stage=1)
    loss_rec, loss_self, loss_reg, loss_dis, S = spamics_forward(
        params, omics_1, omics_2, adj_f1, adj_f2, adj_s1, adj_s2, stage=2)

    jax.block_until_ready(
        (loss_stage0, loss_stage1, loss_rec, loss_self, loss_reg, loss_dis, S))
    print("KERNEL_OK")
</pallas_src>

<mosaic_0001>
module attributes {stable_mosaic.version = 11 : i64} {
  func.func @_encoder_kernel(%arg0: i32, %arg1: memref<384x8xf32, #tpu.memory_space<vmem>>, %arg2: memref<128x384xf32, #tpu.memory_space<vmem>>, %arg3: memref<128x8xf32, #tpu.memory_space<vmem>>) attributes {dimension_semantics = [#tpu.dimension_semantics<parallel>], iteration_bounds = array<i64: 3>, scalar_prefetch = 0 : i64, scratch_operands = 0 : i64, tpu.core_type = #tpu.core_type<tc>, window_params = [{pipeline_mode = #tpu.pipeline_mode<synchronous>, transform_indices = @transform_0, window_bounds = array<i64: 384, 8>}, {transform_indices = @transform_1, window_bounds = array<i64: 128, 384>}, {transform_indices = @transform_2, window_bounds = array<i64: 128, 8>}]} {
    %c0 = arith.constant 0 : index
    %c0_0 = arith.constant 0 : index
    %0 = vector.load %arg2[%c0, %c0_0] : memref<128x384xf32, #tpu.memory_space<vmem>>, vector<128x384xf32>
    %c0_1 = arith.constant 0 : index
    %c0_2 = arith.constant 0 : index
    %1 = vector.load %arg1[%c0_1, %c0_2] : memref<384x8xf32, #tpu.memory_space<vmem>>, vector<384x8xf32>
    %cst = arith.constant dense<0.000000e+00> : vector<128x8xf32>
    %2 = tpu.matmul %0, %1, %cst {dimension_numbers = #tpu.dot_dimension_numbers<[1], [0], [0], [1], [0, 0, 1, 1], [], []>} : vector<128x384xf32>, vector<384x8xf32>, vector<128x8xf32> -> vector<128x8xf32>
    %c0_3 = arith.constant 0 : index
    %c0_4 = arith.constant 0 : index
    %3 = vector.load %arg3[%c0_3, %c0_4] : memref<128x8xf32, #tpu.memory_space<vmem>>, vector<128x8xf32>
    tpu.vector_store %arg3[%c0_3, %c0_4], %2 {strides = array<i32>} : memref<128x8xf32, #tpu.memory_space<vmem>>, vector<128x8xf32>,
    return
  }
  func.func @transform_0(%arg0: i32) -> (i32, i32) {
    %c0_i32 = arith.constant 0 : i32
    %c0_i32_0 = arith.constant 0 : i32
    %c0_i32_1 = arith.constant 0 : i32
    return %c0_i32, %c0_i32_0 : i32, i32
  }
  func.func @transform_1(%arg0: i32) -> (i32, i32) {
    %c0_i32 = arith.constant 0 : i32
    %c0_i32_0 = arith.constant 0 : i32
    return %arg0, %c0_i32 : i32, i32
  }
  func.func @transform_2(%arg0: i32) -> (i32, i32) {
    %c0_i32 = arith.constant 0 : i32
    %c0_i32_0 = arith.constant 0 : i32
    return %arg0, %c0_i32 : i32, i32
  }
}

module attributes {stable_mosaic.version = 11 : i64} {
  func.func @_recon_single_kernel(%arg0: i32, %arg1: memref<384x8xf32, #tpu.memory_space<vmem>>, %arg2: memref<128x8xf32, #tpu.memory_space<vmem>>, %arg3: memref<384x32xf32, #tpu.memory_space<vmem>>, %arg4: memref<128x32xf32, #tpu.memory_space<vmem>>, %arg5: memref<128x384xf32, #tpu.memory_space<vmem>>, %arg6: memref<1x8x128xf32, #tpu.memory_space<vmem>>) attributes {dimension_semantics = [#tpu.dimension_semantics<parallel>], iteration_bounds = array<i64: 3>, scalar_prefetch = 0 : i64, scratch_operands = 0 : i64, tpu.core_type = #tpu.core_type<tc>, window_params = [{pipeline_mode = #tpu.pipeline_mode<synchronous>, transform_indices = @transform_0, window_bounds = array<i64: 384, 8>}, {transform_indices = @transform_1, window_bounds = array<i64: 128, 8>}, {pipeline_mode = #tpu.pipeline_mode<synchronous>, transform_indices = @transform_2, window_bounds = array<i64: 384, 32>}, {transform_indices = @transform_3, window_bounds = array<i64: 128, 32>}, {transform_indices = @transform_4, window_bounds = array<i64: 128, 384>}, {transform_indices = @transform_5, window_bounds = array<i64: 1, 8, 128>}]} {
    %c0 = arith.constant 0 : index
    %c0_0 = arith.constant 0 : index
    %0 = vector.load %arg5[%c0, %c0_0] : memref<128x384xf32, #tpu.memory_space<vmem>>, vector<128x384xf32>
    %c0_1 = arith.constant 0 : index
    %c0_2 = arith.constant 0 : index
    %1 = vector.load %arg3[%c0_1, %c0_2] : memref<384x32xf32, #tpu.memory_space<vmem>>, vector<384x32xf32>
    %cst = arith.constant dense<0.000000e+00> : vector<128x32xf32>
    %2 = tpu.matmul %0, %1, %cst {dimension_numbers = #tpu.dot_dimension_numbers<[1], [0], [0], [1], [0, 0, 1, 1], [], []>} : vector<128x384xf32>, vector<384x32xf32>, vector<128x32xf32> -> vector<128x32xf32>
    %c0_3 = arith.constant 0 : index
    %c0_4 = arith.constant 0 : index
    %3 = vector.load %arg4[%c0_3, %c0_4] : memref<128x32xf32, #tpu.memory_space<vmem>>, vector<128x32xf32>
    %4 = arith.subf %3, %2 : vector<128x32xf32>
    %5 = arith.mulf %4, %4 : vector<128x32xf32>
    %6 = vector.shape_cast %5 : vector<128x32xf32> to vector<1x128x32xf32>
    %cst_5 = arith.constant dense<0.000000e+00> : vector<1xf32>
    %7 = vector.multi_reduction <add>, %6, %cst_5 [1, 2] : vector<1x128x32xf32> to vector<1xf32>
    %8 = vector.shape_cast %7 : vector<1xf32> to vector<1x1x1xf32>
    %9 = vector.extract %8[0, 0, 0] : f32 from vector<1x1x1xf32>
    %c0_6 = arith.constant 0 : index
    %c0_7 = arith.constant 0 : index
    %10 = vector.load %arg2[%c0_6, %c0_7] : memref<128x8xf32, #tpu.memory_space<vmem>>, vector<128x8xf32>
    %c0_8 = arith.constant 0 : index
    %c0_9 = arith.constant 0 : index
    %11 = vector.load %arg1[%c0_8, %c0_9] : memref<384x8xf32, #tpu.memory_space<vmem>>, vector<384x8xf32>
    %cst_10 = arith.constant dense<0.000000e+00> : vector<128x384xf32>
    %12 = tpu.matmul %10, %11, %cst_10 {dimension_numbers = #tpu.dot_dimension_numbers<[1], [1], [0], [0], [0, 0, 1, 0], [], []>} : vector<128x8xf32>, vector<384x8xf32>, vector<128x384xf32> -> vector<128x384xf32>
    %13 = arith.negf %12 : vector<128x384xf32>
    %14 = math.exp %13 : vector<128x384xf32>
    %cst_11 = arith.constant 1.000000e+00 : f32
    %15 = vector.broadcast %cst_11 : f32 to vector<128x384xf32>
    %16 = arith.addf %15, %14 : vector<128x384xf32>
    %17 = arith.divf %15, %16 : vector<128x384xf32>
    %c0_12 = arith.constant 0 : index
    %c0_13 = arith.constant 0 : index
    %18 = vector.load %arg5[%c0_12, %c0_13] : memref<128x384xf32, #tpu.memory_space<vmem>>, vector<128x384xf32>
    %19 = arith.subf %18, %17 : vector<128x384xf32>
    %20 = arith.mulf %19, %19 : vector<128x384xf32>
    %21 = vector.shape_cast %20 : vector<128x384xf32> to vector<1x128x384xf32>
    %cst_14 = arith.constant dense<0.000000e+00> : vector<1xf32>
    %22 = vector.multi_reduction <add>, %21, %cst_14 [1, 2] : vector<1x128x384xf32> to vector<1xf32>
    %23 = vector.shape_cast %22 : vector<1xf32> to vector<1x1x1xf32>
    %24 = vector.extract %23[0, 0, 0] : f32 from vector<1x1x1xf32>
    %25 = tpu.iota {dimensions = array<i32: 0>} : vector<8x128xi32>
    %cst_15 = arith.constant 0.000000e+00 : f32
    %26 = vector.broadcast %cst_15 : f32 to vector<8x128xf32>
    %c0_i32 = arith.constant 0 : i32
    %27 = vector.broadcast %c0_i32 : i32 to vector<8x128xi32>
    %28 = arith.cmpi eq, %25, %27 : vector<8x128xi32>
    %cst_16 = arith.constant 0.000000e+00 : f32
    %29 = vector.broadcast %9 : f32 to vector<8x128xf32>
    %30 = vector.broadcast %cst_16 : f32 to vector<8x128xf32>
    %31 = arith.select %28, %29, %30 : vector<8x128xi1>, vector<8x128xf32>
    %32 = arith.addf %26, %31 : vector<8x128xf32>
    %c1_i32 = arith.constant 1 : i32
    %33 = vector.broadcast %c1_i32 : i32 to vector<8x128xi32>
    %34 = arith.cmpi eq, %25, %33 : vector<8x128xi32>
    %cst_17 = arith.constant 0.000000e+00 : f32
    %35 = vector.broadcast %24 : f32 to vector<8x128xf32>
    %36 = vector.broadcast %cst_17 : f32 to vector<8x128xf32>
    %37 = arith.select %34, %35, %36 : vector<8x128xi1>, vector<8x128xf32>
    %38 = arith.addf %32, %37 : vector<8x128xf32>
    %c0_18 = arith.constant 0 : index
    %c0_19 = arith.constant 0 : index
    %c0_20 = arith.constant 0 : index
    %39 = vector.load %arg6[%c0_18, %c0_19, %c0_20] : memref<1x8x128xf32, #tpu.memory_space<vmem>>, vector<1x8x128xf32>
    %40 = vector.shape_cast %39 : vector<1x8x128xf32> to vector<8x128xf32>
    %41 = vector.shape_cast %38 : vector<8x128xf32> to vector<1x8x128xf32>
    tpu.vector_store %arg6[%c0_18, %c0_19, %c0_20], %41 {strides = array<i32>} : memref<1x8x128xf32, #tpu.memory_space<vmem>>, vector<1x8x128xf32>,
    return
  }
  func.func @transform_0(%arg0: i32) -> (i32, i32) {
    %c0_i32 = arith.constant 0 : i32
    %c0_i32_0 = arith.constant 0 : i32
    %c0_i32_1 = arith.constant 0 : i32
    return %c0_i32, %c0_i32_0 : i32, i32
  }
  func.func @transform_1(%arg0: i32) -> (i32, i32) {
    %c0_i32 = arith.constant 0 : i32
    %c0_i32_0 = arith.constant 0 : i32
    return %arg0, %c0_i32 : i32, i32
  }
  func.func @transform_2(%arg0: i32) -> (i32, i32) {
    %c0_i32 = arith.constant 0 : i32
    %c0_i32_0 = arith.constant 0 : i32
    %c0_i32_1 = arith.constant 0 : i32
    return %c0_i32, %c0_i32_0 : i32, i32
  }
  func.func @transform_3(%arg0: i32) -> (i32, i32) {
    %c0_i32 = arith.constant 0 : i32
    %c0_i32_0 = arith.constant 0 : i32
    return %arg0, %c0_i32 : i32, i32
  }
  func.func @transform_4(%arg0: i32) -> (i32, i32) {
    %c0_i32 = arith.constant 0 : i32
    %c0_i32_0 = arith.constant 0 : i32
    return %arg0, %c0_i32 : i32, i32
  }
  func.func @transform_5(%arg0: i32) -> (i32, i32, i32) {
    %c0_i32 = arith.constant 0 : i32
    %c0_i32_0 = arith.constant 0 : i32
    %c0_i32_1 = arith.constant 0 : i32
    return %arg0, %c0_i32, %c0_i32_0 : i32, i32, i32
  }
}

module attributes {stable_mosaic.version = 11 : i64} {
  func.func @_recon_single_kernel(%arg0: i32, %arg1: memref<384x8xf32, #tpu.memory_space<vmem>>, %arg2: memref<128x8xf32, #tpu.memory_space<vmem>>, %arg3: memref<384x24xf32, #tpu.memory_space<vmem>>, %arg4: memref<128x24xf32, #tpu.memory_space<vmem>>, %arg5: memref<128x384xf32, #tpu.memory_space<vmem>>, %arg6: memref<1x8x128xf32, #tpu.memory_space<vmem>>) attributes {dimension_semantics = [#tpu.dimension_semantics<parallel>], iteration_bounds = array<i64: 3>, scalar_prefetch = 0 : i64, scratch_operands = 0 : i64, tpu.core_type = #tpu.core_type<tc>, window_params = [{pipeline_mode = #tpu.pipeline_mode<synchronous>, transform_indices = @transform_0, window_bounds = array<i64: 384, 8>}, {transform_indices = @transform_1, window_bounds = array<i64: 128, 8>}, {pipeline_mode = #tpu.pipeline_mode<synchronous>, transform_indices = @transform_2, window_bounds = array<i64: 384, 24>}, {transform_indices = @transform_3, window_bounds = array<i64: 128, 24>}, {transform_indices = @transform_4, window_bounds = array<i64: 128, 384>}, {transform_indices = @transform_5, window_bounds = array<i64: 1, 8, 128>}]} {
    %c0 = arith.constant 0 : index
    %c0_0 = arith.constant 0 : index
    %0 = vector.load %arg5[%c0, %c0_0] : memref<128x384xf32, #tpu.memory_space<vmem>>, vector<128x384xf32>
    %c0_1 = arith.constant 0 : index
    %c0_2 = arith.constant 0 : index
    %1 = vector.load %arg3[%c0_1, %c0_2] : memref<384x24xf32, #tpu.memory_space<vmem>>, vector<384x24xf32>
    %cst = arith.constant dense<0.000000e+00> : vector<128x24xf32>
    %2 = tpu.matmul %0, %1, %cst {dimension_numbers = #tpu.dot_dimension_numbers<[1], [0], [0], [1], [0, 0, 1, 1], [], []>} : vector<128x384xf32>, vector<384x24xf32>, vector<128x24xf32> -> vector<128x24xf32>
    %c0_3 = arith.constant 0 : index
    %c0_4 = arith.constant 0 : index
    %3 = vector.load %arg4[%c0_3, %c0_4] : memref<128x24xf32, #tpu.memory_space<vmem>>, vector<128x24xf32>
    %4 = arith.subf %3, %2 : vector<128x24xf32>
    %5 = arith.mulf %4, %4 : vector<128x24xf32>
    %6 = vector.shape_cast %5 : vector<128x24xf32> to vector<1x128x24xf32>
    %cst_5 = arith.constant dense<0.000000e+00> : vector<1xf32>
    %7 = vector.multi_reduction <add>, %6, %cst_5 [1, 2] : vector<1x128x24xf32> to vector<1xf32>
    %8 = vector.shape_cast %7 : vector<1xf32> to vector<1x1x1xf32>
    %9 = vector.extract %8[0, 0, 0] : f32 from vector<1x1x1xf32>
    %c0_6 = arith.constant 0 : index
    %c0_7 = arith.constant 0 : index
    %10 = vector.load %arg2[%c0_6, %c0_7] : memref<128x8xf32, #tpu.memory_space<vmem>>, vector<128x8xf32>
    %c0_8 = arith.constant 0 : index
    %c0_9 = arith.constant 0 : index
    %11 = vector.load %arg1[%c0_8, %c0_9] : memref<384x8xf32, #tpu.memory_space<vmem>>, vector<384x8xf32>
    %cst_10 = arith.constant dense<0.000000e+00> : vector<128x384xf32>
    %12 = tpu.matmul %10, %11, %cst_10 {dimension_numbers = #tpu.dot_dimension_numbers<[1], [1], [0], [0], [0, 0, 1, 0], [], []>} : vector<128x8xf32>, vector<384x8xf32>, vector<128x384xf32> -> vector<128x384xf32>
    %13 = arith.negf %12 : vector<128x384xf32>
    %14 = math.exp %13 : vector<128x384xf32>
    %cst_11 = arith.constant 1.000000e+00 : f32
    %15 = vector.broadcast %cst_11 : f32 to vector<128x384xf32>
    %16 = arith.addf %15, %14 : vector<128x384xf32>
    %17 = arith.divf %15, %16 : vector<128x384xf32>
    %c0_12 = arith.constant 0 : index
    %c0_13 = arith.constant 0 : index
    %18 = vector.load %arg5[%c0_12, %c0_13] : memref<128x384xf32, #tpu.memory_space<vmem>>, vector<128x384xf32>
    %19 = arith.subf %18, %17 : vector<128x384xf32>
    %20 = arith.mulf %19, %19 : vector<128x384xf32>
    %21 = vector.shape_cast %20 : vector<128x384xf32> to vector<1x128x384xf32>
    %cst_14 = arith.constant dense<0.000000e+00> : vector<1xf32>
    %22 = vector.multi_reduction <add>, %21, %cst_14 [1, 2] : vector<1x128x384xf32> to vector<1xf32>
    %23 = vector.shape_cast %22 : vector<1xf32> to vector<1x1x1xf32>
    %24 = vector.extract %23[0, 0, 0] : f32 from vector<1x1x1xf32>
    %25 = tpu.iota {dimensions = array<i32: 0>} : vector<8x128xi32>
    %cst_15 = arith.constant 0.000000e+00 : f32
    %26 = vector.broadcast %cst_15 : f32 to vector<8x128xf32>
    %c0_i32 = arith.constant 0 : i32
    %27 = vector.broadcast %c0_i32 : i32 to vector<8x128xi32>
    %28 = arith.cmpi eq, %25, %27 : vector<8x128xi32>
    %cst_16 = arith.constant 0.000000e+00 : f32
    %29 = vector.broadcast %9 : f32 to vector<8x128xf32>
    %30 = vector.broadcast %cst_16 : f32 to vector<8x128xf32>
    %31 = arith.select %28, %29, %30 : vector<8x128xi1>, vector<8x128xf32>
    %32 = arith.addf %26, %31 : vector<8x128xf32>
    %c1_i32 = arith.constant 1 : i32
    %33 = vector.broadcast %c1_i32 : i32 to vector<8x128xi32>
    %34 = arith.cmpi eq, %25, %33 : vector<8x128xi32>
    %cst_17 = arith.constant 0.000000e+00 : f32
    %35 = vector.broadcast %24 : f32 to vector<8x128xf32>
    %36 = vector.broadcast %cst_17 : f32 to vector<8x128xf32>
    %37 = arith.select %34, %35, %36 : vector<8x128xi1>, vector<8x128xf32>
    %38 = arith.addf %32, %37 : vector<8x128xf32>
    %c0_18 = arith.constant 0 : index
    %c0_19 = arith.constant 0 : index
    %c0_20 = arith.constant 0 : index
    %39 = vector.load %arg6[%c0_18, %c0_19, %c0_20] : memref<1x8x128xf32, #tpu.memory_space<vmem>>, vector<1x8x128xf32>
    %40 = vector.shape_cast %39 : vector<1x8x128xf32> to vector<8x128xf32>
    %41 = vector.shape_cast %38 : vector<8x128xf32> to vector<1x8x128xf32>
    tpu.vector_store %arg6[%c0_18, %c0_19, %c0_20], %41 {strides = array<i32>} : memref<1x8x128xf32, #tpu.memory_space<vmem>>, vector<1x8x128xf32>,
    return
  }
  func.func @transform_0(%arg0: i32) -> (i32, i32) {
    %c0_i32 = arith.constant 0 : i32
    %c0_i32_0 = arith.constant 0 : i32
    %c0_i32_1 = arith.constant 0 : i32
    return %c0_i32, %c0_i32_0 : i32, i32
  }
  func.func @transform_1(%arg0: i32) -> (i32, i32) {
    %c0_i32 = arith.constant 0 : i32
    %c0_i32_0 = arith.constant 0 : i32
    return %arg0, %c0_i32 : i32, i32
  }
  func.func @transform_2(%arg0: i32) -> (i32, i32) {
    %c0_i32 = arith.constant 0 : i32
    %c0_i32_0 = arith.constant 0 : i32
    %c0_i32_1 = arith.constant 0 : i32
    return %c0_i32, %c0_i32_0 : i32, i32
  }
  func.func @transform_3(%arg0: i32) -> (i32, i32) {
    %c0_i32 = arith.constant 0 : i32
    %c0_i32_0 = arith.constant 0 : i32
    return %arg0, %c0_i32 : i32, i32
  }
  func.func @transform_4(%arg0: i32) -> (i32, i32) {
    %c0_i32 = arith.constant 0 : i32
    %c0_i32_0 = arith.constant 0 : i32
    return %arg0, %c0_i32 : i32, i32
  }
  func.func @transform_5(%arg0: i32) -> (i32, i32, i32) {
    %c0_i32 = arith.constant 0 : i32
    %c0_i32_0 = arith.constant 0 : i32
    %c0_i32_1 = arith.constant 0 : i32
    return %arg0, %c0_i32, %c0_i32_0 : i32, i32, i32
  }
}

</mosaic_0001>

<llo_original>
// kernel: spamics_forward.11
$region0: #{spamics_forward.11}
  #allocation0 [shape = 'u32[]', space=smem, size = 0x4, offset = 0x4, fixed_abs, tag = 'smem constant byte address 0x4 - core index']
  #allocation1 [shape = 'u32[144,128]{1,0:T(1,128)}', space=vmem, size = 0x12000, scoped, tag = 'internal scratch']
  %s0 = inlined_call_operand.hbm [shape: f32[384,8], index: 0, kind: input, shape index: {}]
  %s1 = inlined_call_operand.hbm [shape: f32[384,384], index: 1, kind: input, shape index: {}]
  %s2 = inlined_call_operand.hbm [shape: f32[384,8], index: 2, kind: output, shape index: {}]
  %s3 = sld [smem:[#allocation0]]
  $region49: #{spamics_forward.11} parent=0
    _
  %s5 = ssub.s32 1, %s3
  %s6 = scalar_select 0, %s5, %s3
  $region1: #{spamics_forward.11} parent=0
    #allocation2 [shape = 'u8[196608]{0}', space=vmem, size = 0x30000, scoped, tag = 'input window, operand 0, single buffered']
    #allocation3 [shape = 's32[2]{0}', space=sflag, size = 0x8, scoped, tag = 'scoped memory for spamics_forward.11']
    #allocation4 [shape = 's32[2]{0}', space=sflag, size = 0x8, scoped, tag = 'scoped memory for spamics_forward.11']
    #allocation5 [shape = 'u8[393216]{0}', space=vmem, size = 0x60000, scoped, tag = 'input window, operand 1']
    #allocation6 [shape = 's32[2]{0}', space=sflag, size = 0x8, scoped, tag = 'scoped memory for spamics_forward.11']
    #allocation7 [shape = 'u8[131072]{0}', space=vmem, size = 0x20000, scoped, tag = 'output window, operand 0']
    %7 = vsyncpa [#allocation3], 0
    %8 = vsyncpa [#allocation6], 0
    %s9 = scalar_lea.sflag [#allocation6], 1
    %10 = vsyncpa %s9, 0
    %11 = vsyncpa [#allocation4], 0
    %s12 = scalar_lea.sflag [#allocation4], 1
    %13 = vsyncpa %s12, 0
    loop: start=0, step=1, limit=5
    $region2: #{spamics_forward.11} parent=1 // loop_pre_header
      _
    $region3: #{spamics_forward.11} parent=1 // loop_header
      %s15 = sphi 0, %s19
      %p16 = scmp.ge.s32.totalorder %s15, 5
      %s23 = sphi 0, %s23
      %s25 = sphi 0, %s23
      %s26 = sphi 0, %s25
      %s40 = sphi 0, %s26
      %s46 = sphi 0, %s48
      %s49 = sphi 0, %s46
      %s50 = sphi 0, %s49
      %s66 = sphi 0, %s50
      %s72 = sphi 0, %s74
      %s75 = sphi 0, %s72
      %s76 = sphi 0, %s75
      %s92 = sphi 0, %s76
    $region4: #{spamics_forward.11} parent=1 // loop_header_branch
      %18 = sbr.rel (%p16) target = $region8
    $region5: #{spamics_forward.11} parent=1 // loop_body
      %s20 = ssub.s32 %s15, 1
      %s21 = ssub.s32 %s15, 2
      %s22 = sadd.s32 %s15, 1
      %s24 = sadd.s32 %s23, 1
      %p27 = scmp.eq.s32.totalorder %s15, 2
      %p28 = scmp.ne.s32.totalorder %s23, %s25
      %p29 = scmp.eq.s32.totalorder %s15, 0
      %p30 = por %p28, %p29
      %p31 = scmp.ne.s32.totalorder %s23, %s25
      %p32 = scmp.eq.s32.totalorder %s20, 2
      %p33 = por %p31, %p32
      %p34 = scmp.ne.s32.totalorder %s25, %s26
      %p35 = scmp.eq.s32.totalorder %s20, 0
      %p36 = por %p34, %p35
      %p37 = scmp.ne.s32.totalorder %s25, %s26
      %p38 = scmp.eq.s32.totalorder %s21, 2
      %p39 = por %p37, %p38
      %p41 = scmp.ne.s32.totalorder %s26, %s40
      %p42 = scmp.eq.s32.totalorder %s21, 0
      %p43 = por %p41, %p42
      %s44 = ssub.s32 %s15, %s22
      %p45 = scmp.eq.s32.totalorder %s44, 0
      %s47 = sadd.s32 %s46, 1
      %s48 = scalar_select %p45, %s46, %s47
      %p51 = pneg %p45
      %p52 = scmp.eq.s32.totalorder %s15, 2
      %p53 = por %p51, %p52
      %p54 = scmp.ne.s32.totalorder %s46, %s49
      %p55 = scmp.eq.s32.totalorder %s15, 0
      %p56 = por %p54, %p55
      %p57 = scmp.ne.s32.totalorder %s46, %s49
      %p58 = scmp.eq.s32.totalorder %s20, 2
      %p59 = por %p57, %p58
      %p60 = scmp.ne.s32.totalorder %s49, %s50
      %p61 = scmp.eq.s32.totalorder %s20, 0
      %p62 = por %p60, %p61
      %p63 = scmp.ne.s32.totalorder %s49, %s50
      %p64 = scmp.eq.s32.totalorder %s21, 2
      %p65 = por %p63, %p64
      %p67 = scmp.ne.s32.totalorder %s50, %s66
      %p68 = scmp.eq.s32.totalorder %s21, 0
      %p69 = por %p67, %p68
      %s70 = ssub.s32 %s15, %s22
      %p71 = scmp.eq.s32.totalorder %s70, 0
      %s73 = sadd.s32 %s72, 1
      %s74 = scalar_select %p71, %s72, %s73
      %p77 = pneg %p71
      %p78 = scmp.eq.s32.totalorder %s15, 2
      %p79 = por %p77, %p78
      %p80 = scmp.ne.s32.totalorder %s72, %s75
      %p81 = scmp.eq.s32.totalorder %s15, 0
      %p82 = por %p80, %p81
      %p83 = scmp.ne.s32.totalorder %s72, %s75
      %p84 = scmp.eq.s32.totalorder %s20, 2
      %p85 = por %p83, %p84
      %p86 = scmp.ne.s32.totalorder %s75, %s76
      %p87 = scmp.eq.s32.totalorder %s20, 0
      %p88 = por %p86, %p87
      %p89 = scmp.ne.s32.totalorder %s75, %s76
      %p90 = scmp.eq.s32.totalorder %s21, 2
      %p91 = por %p89, %p90
      %p93 = scmp.ne.s32.totalorder %s76, %s92
      %p94 = scmp.eq.s32.totalorder %s21, 0
      %p95 = por %p93, %p94
      %p96 = scmp.le.s32.totalorder 1, %s15
      %p97 = scmp.lt.s32.totalorder %s15, 4
      %p98 = pnand %p96, %p97
      %p99 = pneg %p98
      // Predicated region
      $region9: #{spamics_forward.11} parent=5 // pred_check
        _
      $region10: #{spamics_forward.11} parent=5 // pred_check_branch
        %101 = sbr.rel (%p98) target = $region12
      $region11: #{spamics_forward.11} parent=5 // pred_region
        %s102 = ssub.s32 %s15, 1
        // Predicated region
        $region13: #{spamics_forward.11} parent=11 // pred_check
          %p103 = pneg %p36
        $region14: #{spamics_forward.11} parent=11 // pred_check_branch
          %105 = sbr.rel (%p103) target = $region16
        $region15: #{spamics_forward.11} parent=11 // pred_region
          %s107 = ssub.s32 6144, 6144
          %108 = vsyncadd [#allocation3], %s107
          %s109 = sshll.u32 [#allocation2], 4
          %s110 = int_to_ptr.vmem [resolvable:$true] %s109
          %115 = dma.hbm_to_vmem [thread:$0]  %s0, 6144, %s110, [#allocation3], 128, 128, 8
        $region16: #{spamics_forward.11} parent=11 // pred_fallthru
          _
      $region12: #{spamics_forward.11} parent=5 // pred_fallthru
        _
      %p116 = scmp.lt.s32.totalorder %s15, 3
      // Predicated region
      $region17: #{spamics_forward.11} parent=5 // pred_check
        %p117 = pneg %p116
      $region18: #{spamics_forward.11} parent=5 // pred_check_branch
        %119 = sbr.rel (%p117) target = $region20
      $region19: #{spamics_forward.11} parent=5 // pred_region
        // Predicated region
        $region21: #{spamics_forward.11} parent=19 // pred_check
          %p120 = pneg %p56
        $region22: #{spamics_forward.11} parent=19 // pred_check_branch
          %122 = sbr.rel (%p120) target = $region24
        $region23: #{spamics_forward.11} parent=19 // pred_region
          %s123 = sand.u32 %s46, 1
          %s124 = scalar_lea.sflag [#allocation6], %s123
          %s125 = sand.u32 %s46, 1
          %s126 = smul.addr %s125, 384
          %s127 = scalar_lea.vmem [#allocation5], %s126
          %s128 = smul.u32 16, %s15
          %s130 = ssub.s32 6144, 6144
          %131 = vsyncadd %s124, %s130
          %s132 = smul.addr %s128, 3
          %s133 = smul.addr %s132, 128
          %s134 = scalar_lea.hbm %s1, %s133
          %s135 = sshll.u32 %s127, 4
          %s136 = int_to_ptr.vmem [resolvable:$true] %s135
          %141 = dma.hbm_to_vmem [thread:$0]  %s134, 6144, %s136, %s124, 384, 384, 24
        $region24: #{spamics_forward.11} parent=19 // pred_fallthru
          _
      $region20: #{spamics_forward.11} parent=5 // pred_fallthru
        _
      %p142 = scmp.le.s32.totalorder 1, %s15
      %p143 = scmp.lt.s32.totalorder %s15, 4
      %p144 = pnand %p142, %p143
      %p145 = pneg %p144
      // Predicated region
      $region25: #{spamics_forward.11} parent=5 // pred_check
        _
      $region26: #{spamics_forward.11} parent=5 // pred_check_branch
        %147 = sbr.rel (%p144) target = $region28
      $region27: #{spamics_forward.11} parent=5 // pred_region
        %s148 = ssub.s32 %s15, 1
        // Predicated region
        $region29: #{spamics_forward.11} parent=27 // pred_check
          %p149 = pneg %p36
        $region30: #{spamics_forward.11} parent=27 // pred_check_branch
          %151 = sbr.rel (%p149) target = $region32
        $region31: #{spamics_forward.11} parent=27 // pred_region
          %152 = dma.done [#allocation3], 6144
        $region32: #{spamics_forward.11} parent=27 // pred_fallthru
          _
        %s153 = sand.u32 %s49, 1
        %s154 = scalar_lea.sflag [#allocation6], %s153
        %s155 = sand.u32 %s49, 1
        %s156 = smul.addr %s155, 384
        %s157 = scalar_lea.vmem [#allocation5], %s156
        // Predicated region
        $region33: #{spamics_forward.11} parent=27 // pred_check
          %p158 = pneg %p62
        $region34: #{spamics_forward.11} parent=27 // pred_check_branch
          %160 = sbr.rel (%p158) target = $region36
        $region35: #{spamics_forward.11} parent=27 // pred_region
          %161 = dma.done %s154, 6144
        $region36: #{spamics_forward.11} parent=27 // pred_fallthru
          _
        %p162 = pneg %p36
        %p163 = pneg %p33
        %s164 = sand.u32 %s49, 1
        %s165 = scalar_lea.sflag [#allocation6], %s164
        %s166 = sand.u32 %s49, 1
        %s167 = smul.addr %s166, 384
        %s168 = scalar_lea.vmem [#allocation5], %s167
        %p169 = pneg %p62
        %p170 = pneg %p59
        %p171 = pneg %p88
        %p172 = pneg %p85
        %s173 = sand.u32 %s75, 1
        %s174 = scalar_lea.sflag [#allocation4], %s173
        %s175 = sand.u32 %s75, 1
        %s176 = smul.addr %s175, 128
        %s177 = scalar_lea.vmem [#allocation7], %s176
        %s178 = smul.u32 16, %s20
        %s179 = smul.u32 16, %s20
        %v180 = vld [vmem:[%s157] sm:$0xff]
        %v181 = vld [vmem:[%s157 + $0x8] sm:$0xff]
        %v182 = vld [vmem:[%s157 + $0x10] sm:$0xff]
        %v183 = vld [vmem:[%s157 + $0x18] sm:$0xff]
        %v184 = vld [vmem:[%s157 + $0x20] sm:$0xff]
        %v185 = vld [vmem:[%s157 + $0x28] sm:$0xff]
        %v186 = vld [vmem:[%s157 + $0x30] sm:$0xff]
        %v187 = vld [vmem:[%s157 + $0x38] sm:$0xff]
        %v188 = vld [vmem:[%s157 + $0x40] sm:$0xff]
        %v189 = vld [vmem:[%s157 + $0x48] sm:$0xff]
        %v190 = vld [vmem:[%s157 + $0x50] sm:$0xff]
        %v191 = vld [vmem:[%s157 + $0x58] sm:$0xff]
        %v192 = vld [vmem:[%s157 + $0x60] sm:$0xff]
        %v193 = vld [vmem:[%s157 + $0x68] sm:$0xff]
        %v194 = vld [vmem:[%s157 + $0x70] sm:$0xff]
        %v195 = vld [vmem:[%s157 + $0x78] sm:$0xff]
        %v196 = vld [vmem:[%s157 + $0x80] sm:$0xff]
        %v197 = vld [vmem:[%s157 + $0x88] sm:$0xff]
        %v198 = vld [vmem:[%s157 + $0x90] sm:$0xff]
        %v199 = vld [vmem:[%s157 + $0x98] sm:$0xff]
        %v200 = vld [vmem:[%s157 + $0xa0] sm:$0xff]
        %v201 = vld [vmem:[%s157 + $0xa8] sm:$0xff]
        %v202 = vld [vmem:[%s157 + $0xb0] sm:$0xff]
        %v203 = vld [vmem:[%s157 + $0xb8] sm:$0xff]
        %v204 = vld [vmem:[%s157 + $0xc0] sm:$0xff]
        %v205 = vld [vmem:[%s157 + $0xc8] sm:$0xff]
        %v206 = vld [vmem:[%s157 + $0xd0] sm:$0xff]
        %v207 = vld [vmem:[%s157 + $0xd8] sm:$0xff]
        %v208 = vld [vmem:[%s157 + $0xe0] sm:$0xff]
        %v209 = vld [vmem:[%s157 + $0xe8] sm:$0xff]
        %v210 = vld [vmem:[%s157 + $0xf0] sm:$0xff]
        %v211 = vld [vmem:[%s157 + $0xf8] sm:$0xff]
        %v212 = vld [vmem:[%s157 + $0x100] sm:$0xff]
        %v213 = vld [vmem:[%s157 + $0x108] sm:$0xff]
        %v214 = vld [vmem:[%s157 + $0x110] sm:$0xff]
        %v215 = vld [vmem:[%s157 + $0x118] sm:$0xff]
        %v216 = vld [vmem:[%s157 + $0x120] sm:$0xff]
        %v217 = vld [vmem:[%s157 + $0x128] sm:$0xff]
        %v218 = vld [vmem:[%s157 + $0x130] sm:$0xff]
        %v219 = vld [vmem:[%s157 + $0x138] sm:$0xff]
        %v220 = vld [vmem:[%s157 + $0x140] sm:$0xff]
        %v221 = vld [vmem:[%s157 + $0x148] sm:$0xff]
        %v222 = vld [vmem:[%s157 + $0x150] sm:$0xff]
        %v223 = vld [vmem:[%s157 + $0x158] sm:$0xff]
        %v224 = vld [vmem:[%s157 + $0x160] sm:$0xff]
        %v225 = vld [vmem:[%s157 + $0x168] sm:$0xff]
        %v226 = vld [vmem:[%s157 + $0x170] sm:$0xff]
        %v227 = vld [vmem:[%s157 + $0x178] sm:$0xff]
        %v228 = vld [vmem:[#allocation2] sm:$0xff]
        %v229 = vld [vmem:[#allocation2 + $0x8] sm:$0xff]
        %v230 = vld [vmem:[#allocation2 + $0x10] sm:$0xff]
        %v231 = vld [vmem:[#allocation2 + $0x18] sm:$0xff]
        %v232 = vld [vmem:[#allocation2 + $0x20] sm:$0xff]
        %v233 = vld [vmem:[#allocation2 + $0x28] sm:$0xff]
        %v234 = vld [vmem:[#allocation2 + $0x30] sm:$0xff]
        %v235 = vld [vmem:[#allocation2 + $0x38] sm:$0xff]
        %v236 = vld [vmem:[#allocation2 + $0x40] sm:$0xff]
        %v237 = vld [vmem:[#allocation2 + $0x48] sm:$0xff]
        %v238 = vld [vmem:[#allocation2 + $0x50] sm:$0xff]
        %v239 = vld [vmem:[#allocation2 + $0x58] sm:$0xff]
        %v240 = vld [vmem:[#allocation2 + $0x60] sm:$0xff]
        %v241 = vld [vmem:[#allocation2 + $0x68] sm:$0xff]
        %v242 = vld [vmem:[#allocation2 + $0x70] sm:$0xff]
        %v243 = vld [vmem:[#allocation2 + $0x78] sm:$0xff]
        %v244 = vld [vmem:[#allocation2 + $0x80] sm:$0xff]
        %v245 = vld [vmem:[#allocation2 + $0x88] sm:$0xff]
        %v246 = vld [vmem:[#allocation2 + $0x90] sm:$0xff]
        %v247 = vld [vmem:[#allocation2 + $0x98] sm:$0xff]
        %v248 = vld [vmem:[#allocation2 + $0xa0] sm:$0xff]
        %v249 = vld [vmem:[#allocation2 + $0xa8] sm:$0xff]
        %v250 = vld [vmem:[#allocation2 + $0xb0] sm:$0xff]
        %v251 = vld [vmem:[#allocation2 + $0xb8] sm:$0xff]
        %v252 = vld [vmem:[#allocation2 + $0xc0] sm:$0xff]
        %v253 = vld [vmem:[#allocation2 + $0xc8] sm:$0xff]
        %v254 = vld [vmem:[#allocation2 + $0xd0] sm:$0xff]
        %v255 = vld [vmem:[#allocation2 + $0xd8] sm:$0xff]
        %v256 = vld [vmem:[#allocation2 + $0xe0] sm:$0xff]
        %v257 = vld [vmem:[#allocation2 + $0xe8] sm:$0xff]
        %v258 = vld [vmem:[#allocation2 + $0xf0] sm:$0xff]
        %v259 = vld [vmem:[#allocation2 + $0xf8] sm:$0xff]
        %v260 = vld [vmem:[#allocation2 + $0x100] sm:$0xff]
        %v261 = vld [vmem:[#allocation2 + $0x108] sm:$0xff]
        %v262 = vld [vmem:[#allocation2 + $0x110] sm:$0xff]
        %v263 = vld [vmem:[#allocation2 + $0x118] sm:$0xff]
        %v264 = vld [vmem:[#allocation2 + $0x120] sm:$0xff]
        %v265 = vld [vmem:[#allocation2 + $0x128] sm:$0xff]
        %v266 = vld [vmem:[#allocation2 + $0x130] sm:$0xff]
        %v267 = vld [vmem:[#allocation2 + $0x138] sm:$0xff]
        %v268 = vld [vmem:[#allocation2 + $0x140] sm:$0xff]
        %v269 = vld [vmem:[#allocation2 + $0x148] sm:$0xff]
        %v270 = vld [vmem:[#allocation2 + $0x150] sm:$0xff]
        %v271 = vld [vmem:[#allocation2 + $0x158] sm:$0xff]
        %v272 = vld [vmem:[#allocation2 + $0x160] sm:$0xff]
        %v273 = vld [vmem:[#allocation2 + $0x168] sm:$0xff]
        %v274 = vld [vmem:[#allocation2 + $0x170] sm:$0xff]
        %v275 = vld [vmem:[#allocation2 + $0x178] sm:$0xff]
        %276 = vmatprep.subr.mxu0 0.0
        %277 = vmatpush1.msra.mxu0 %v228
        %278 = vmatprep.subr.mxu0 0.0
        %279 = vmatpush1.msra.mxu0 %v229
        %280 = vmatprep.subr.mxu0 0.0
        %281 = vmatpush1.msra.mxu0 %v230
        %282 = vmatprep.subr.mxu0 0.0
        %283 = vmatpush1.msra.mxu0 %v231
        %284 = vmatprep.subr.mxu0 0.0
        %285 = vmatpush1.msra.mxu0 %v232
        %286 = vmatprep.subr.mxu0 0.0
        %287 = vmatpush1.msra.mxu0 %v233
        %288 = vmatprep.subr.mxu0 0.0
        %289 = vmatpush1.msra.mxu0 %v234
        %290 = vmatprep.subr.mxu0 0.0
        %291 = vmatpush1.msra.mxu0 %v235
        %292 = vmatprep.subr.mxu0 0.0
        %293 = vmatpush1.msra.mxu0 %v236
        %294 = vmatprep.subr.mxu0 0.0
        %295 = vmatpush1.msra.mxu0 %v237
        %296 = vmatprep.subr.mxu0 0.0
        %297 = vmatpush1.msra.mxu0 %v238
        %298 = vmatprep.subr.mxu0 0.0
        %299 = vmatpush1.msra.mxu0 %v239
        %300 = vmatprep.subr.mxu0 0.0
        %301 = vmatpush1.msra.mxu0 %v240
        %302 = vmatprep.subr.mxu0 0.0
        %303 = vmatpush1.msra.mxu0 %v241
        %304 = vmatprep.subr.mxu0 0.0
        %305 = vmatpush1.msra.mxu0 %v242
        %306 = vmatprep.subr.mxu0 0.0
        %307 = vmatpush1.msra.mxu0 %v243
        %308 = vmatprep.subr.mxu0 0.0
        %309 = vmatpush1.msra.mxu0 %v244
        %310 = vmatprep.subr.mxu0 0.0
        %311 = vmatpush1.msra.mxu0 %v245
        %312 = vmatprep.subr.mxu0 0.0
        %313 = vmatpush1.msra.mxu0 %v246
        %314 = vmatprep.subr.mxu0 0.0
        %315 = vmatpush1.msra.mxu0 %v247
        %316 = vmatprep.subr.mxu0 0.0
        %317 = vmatpush1.msra.mxu0 %v248
        %318 = vmatprep.subr.mxu0 0.0
        %319 = vmatpush1.msra.mxu0 %v249
        %320 = vmatprep.subr.mxu0 0.0
        %321 = vmatpush1.msra.mxu0 %v250
        %322 = vmatprep.subr.mxu0 0.0
        %323 = vmatpush1.msra.mxu0 %v251
        %324 = vmatprep.subr.mxu0 0.0
        %325 = vmatpush1.msra.mxu0 %v252
        %326 = vmatprep.subr.mxu0 0.0
        %327 = vmatpush1.msra.mxu0 %v253
        %328 = vmatprep.subr.mxu0 0.0
        %329 = vmatpush1.msra.mxu0 %v254
        %330 = vmatprep.subr.mxu0 0.0
        %331 = vmatpush1.msra.mxu0 %v255
        %332 = vmatprep.subr.mxu0 0.0
        %333 = vmatpush1.msra.mxu0 %v256
        %334 = vmatprep.subr.mxu0 0.0
        %335 = vmatpush1.msra.mxu0 %v257
        %336 = vmatprep.subr.mxu0 0.0
        %337 = vmatpush1.msra.mxu0 %v258
        %338 = vmatprep.subr.mxu0 0.0
        %339 = vmatpush1.msra.mxu0 %v259
        %340 = vmatprep.mubr.f32.mxu0 %v181
        %341 = vmatmul.mubr.f32.gmra.mrb[0].mxu0 %v180
        %v342 = vpop.f32.mrb[0].mxu0
        %v343 = vadd.f32 0.0, %v342
        %v344 = vpop.f32.mrb[0].mxu0
        %345 = vmatprep.mubr.f32.mxu0 %v184
        %346 = vmatmul.mubr.f32.gmra.mrb[0].mxu0 %v183
        %v347 = vpop.f32.mrb[0].mxu0
        %v348 = vadd.f32 0.0, %v347
        %v349 = vpop.f32.mrb[0].mxu0
        %350 = vmatprep.mubr.f32.mxu0 %v187
        %351 = vmatmul.mubr.f32.gmra.mrb[0].mxu0 %v186
        %v352 = vpop.f32.mrb[0].mxu0
        %v353 = vadd.f32 0.0, %v352
        %v354 = vpop.f32.mrb[0].mxu0
        %355 = vmatprep.mubr.f32.mxu0 %v190
        %356 = vmatmul.mubr.f32.gmra.mrb[0].mxu0 %v189
        %v357 = vpop.f32.mrb[0].mxu0
        %v358 = vadd.f32 0.0, %v357
        %v359 = vpop.f32.mrb[0].mxu0
        %360 = vmatprep.mubr.f32.mxu0 %v193
        %361 = vmatmul.mubr.f32.gmra.mrb[0].mxu0 %v192
        %v362 = vpop.f32.mrb[0].mxu0
        %v363 = vadd.f32 0.0, %v362
        %v364 = vpop.f32.mrb[0].mxu0
        %365 = vmatprep.mubr.f32.mxu0 %v196
        %366 = vmatmul.mubr.f32.gmra.mrb[0].mxu0 %v195
        %v367 = vpop.f32.mrb[0].mxu0
        %v368 = vadd.f32 0.0, %v367
        %v369 = vpop.f32.mrb[0].mxu0
        %370 = vmatprep.mubr.f32.mxu0 %v199
        %371 = vmatmul.mubr.f32.gmra.mrb[0].mxu0 %v198
        %v372 = vpop.f32.mrb[0].mxu0
        %v373 = vadd.f32 0.0, %v372
        %v374 = vpop.f32.mrb[0].mxu0
        %375 = vmatprep.mubr.f32.mxu0 %v202
        %376 = vmatmul.mubr.f32.gmra.mrb[0].mxu0 %v201
        %v377 = vpop.f32.mrb[0].mxu0
        %v378 = vadd.f32 0.0, %v377
        %v379 = vpop.f32.mrb[0].mxu0
        %380 = vmatprep.mubr.f32.mxu0 %v205
        %381 = vmatmul.mubr.f32.gmra.mrb[0].mxu0 %v204
        %v382 = vpop.f32.mrb[0].mxu0
        %v383 = vadd.f32 0.0, %v382
        %v384 = vpop.f32.mrb[0].mxu0
        %385 = vmatprep.mubr.f32.mxu0 %v208
        %386 = vmatmul.mubr.f32.gmra.mrb[0].mxu0 %v207
        %v387 = vpop.f32.mrb[0].mxu0
        %v388 = vadd.f32 0.0, %v387
        %v389 = vpop.f32.mrb[0].mxu0
        %390 = vmatprep.mubr.f32.mxu0 %v211
        %391 = vmatmul.mubr.f32.gmra.mrb[0].mxu0 %v210
        %v392 = vpop.f32.mrb[0].mxu0
        %v393 = vadd.f32 0.0, %v392
        %v394 = vpop.f32.mrb[0].mxu0
        %395 = vmatprep.mubr.f32.mxu0 %v214
        %396 = vmatmul.mubr.f32.gmra.mrb[0].mxu0 %v213
        %v397 = vpop.f32.mrb[0].mxu0
        %v398 = vadd.f32 0.0, %v397
        %v399 = vpop.f32.mrb[0].mxu0
        %400 = vmatprep.mubr.f32.mxu0 %v217
        %401 = vmatmul.mubr.f32.gmra.mrb[0].mxu0 %v216
        %v402 = vpop.f32.mrb[0].mxu0
        %v403 = vadd.f32 0.0, %v402
        %v404 = vpop.f32.mrb[0].mxu0
        %405 = vmatprep.mubr.f32.mxu0 %v220
        %406 = vmatmul.mubr.f32.gmra.mrb[0].mxu0 %v219
        %v407 = vpop.f32.mrb[0].mxu0
        %v408 = vadd.f32 0.0, %v407
        %v409 = vpop.f32.mrb[0].mxu0
        %410 = vmatprep.mubr.f32.mxu0 %v223
        %411 = vmatmul.mubr.f32.gmra.mrb[0].mxu0 %v222
        %v412 = vpop.f32.mrb[0].mxu0
        %v413 = vadd.f32 0.0, %v412
        %v414 = vpop.f32.mrb[0].mxu0
        %415 = vmatprep.mubr.f32.mxu0 %v226
        %416 = vmatmul.mubr.f32.gmra.mrb[0].mxu0 %v225
        %v417 = vpop.f32.mrb[0].mxu0
        %v418 = vadd.f32 0.0, %v417
        %v419 = vpop.f32.mrb[0].mxu0
        %420 = vdwg.mxu0
        %421 = vmatprep.subr.mxu0 0.0
        %422 = vmatpush1.msra.mxu0 %v260
        %423 = vmatprep.subr.mxu0 0.0
        %424 = vmatpush1.msra.mxu0 %v261
        %425 = vmatprep.subr.mxu0 0.0
        %426 = vmatpush1.msra.mxu0 %v262
        %427 = vmatprep.subr.mxu0 0.0
        %428 = vmatpush1.msra.mxu0 %v263
        %429 = vmatprep.subr.mxu0 0.0
        %430 = vmatpush1.msra.mxu0 %v264
        %431 = vmatprep.subr.mxu0 0.0
        %432 = vmatpush1.msra.mxu0 %v265
        %433 = vmatprep.subr.mxu0 0.0
        %434 = vmatpush1.msra.mxu0 %v266
        %435 = vmatprep.subr.mxu0 0.0
        %436 = vmatpush1.msra.mxu0 %v267
        %437 = vmatprep.subr.mxu0 0.0
        %438 = vmatpush1.msra.mxu0 %v268
        %439 = vmatprep.subr.mxu0 0.0
        %440 = vmatpush1.msra.mxu0 %v269
        %441 = vmatprep.subr.mxu0 0.0
        %442 = vmatpush1.msra.mxu0 %v270
        %443 = vmatprep.subr.mxu0 0.0
        %444 = vmatpush1.msra.mxu0 %v271
        %445 = vmatprep.subr.mxu0 0.0
        %446 = vmatpush1.msra.mxu0 %v272
        %447 = vmatprep.subr.mxu0 0.0
        %448 = vmatpush1.msra.mxu0 %v273
        %449 = vmatprep.subr.mxu0 0.0
        %450 = vmatpush1.msra.mxu0 %v274
        %451 = vmatprep.subr.mxu0 0.0
        %452 = vmatpush1.msra.mxu0 %v275
        %453 = vmatprep.subr.mxu0 0.0
        %454 = vmatpush1.msra.mxu0 0.0
        %455 = vmatprep.subr.mxu0 0.0
        %456 = vmatpush1.msra.mxu0 0.0
        %457 = vmatprep.subr.mxu0 0.0
        %458 = vmatpush1.msra.mxu0 0.0
        %459 = vmatprep.subr.mxu0 0.0
        %460 = vmatpush1.msra.mxu0 0.0
        %461 = vmatprep.subr.mxu0 0.0
        %462 = vmatpush1.msra.mxu0 0.0
        %463 = vmatprep.subr.mxu0 0.0
        %464 = vmatpush1.msra.mxu0 0.0
        %465 = vmatprep.subr.mxu0 0.0
        %466 = vmatpush1.msra.mxu0 0.0
        %467 = vmatprep.subr.mxu0 0.0
        %468 = vmatpush1.msra.mxu0 0.0
        %469 = vmatprep.subr.mxu0 0.0
        %470 = vmatpush1.msra.mxu0 0.0
        %471 = vmatprep.subr.mxu0 0.0
        %472 = vmatpush1.msra.mxu0 0.0
        %473 = vmatprep.subr.mxu0 0.0
        %474 = vmatpush1.msra.mxu0 0.0
        %475 = vmatprep.subr.mxu0 0.0
        %476 = vmatpush1.msra.mxu0 0.0
        %477 = vmatprep.subr.mxu0 0.0
        %478 = vmatpush1.msra.mxu0 0.0
        %479 = vmatprep.subr.mxu0 0.0
        %480 = vmatpush1.msra.mxu0 0.0
        %481 = vmatprep.subr.mxu0 0.0
        %482 = vmatpush1.msra.mxu0 0.0
        %483 = vmatprep.subr.mxu0 0.0
        %484 = vmatpush1.msra.mxu0 0.0
        %485 = vmatprep.mubr.f32.mxu0 0.0
        %486 = vmatmul.mubr.f32.gmra.mrb[0].mxu0 %v182
        %v487 = vpop.f32.mrb[0].mxu0
        %v488 = vadd.f32 %v343, %v487
        %v489 = vpop.f32.mrb[0].mxu0
        %490 = vmatprep.mubr.f32.mxu0 0.0
        %491 = vmatmul.mubr.f32.gmra.mrb[0].mxu0 %v185
        %v492 = vpop.f32.mrb[0].mxu0
        %v493 = vadd.f32 %v348, %v492
        %v494 = vpop.f32.mrb[0].mxu0
        %495 = vmatprep.mubr.f32.mxu0 0.0
        %496 = vmatmul.mubr.f32.gmra.mrb[0].mxu0 %v188
        %v497 = vpop.f32.mrb[0].mxu0
        %v498 = vadd.f32 %v353, %v497
        %v499 = vpop.f32.mrb[0].mxu0
        %500 = vmatprep.mubr.f32.mxu0 0.0
        %501 = vmatmul.mubr.f32.gmra.mrb[0].mxu0 %v191
        %v502 = vpop.f32.mrb[0].mxu0
        %v503 = vadd.f32 %v358, %v502
        %v504 = vpop.f32.mrb[0].mxu0
        %505 = vmatprep.mubr.f32.mxu0 0.0
        %506 = vmatmul.mubr.f32.gmra.mrb[0].mxu0 %v194
        %v507 = vpop.f32.mrb[0].mxu0
        %v508 = vadd.f32 %v363, %v507
        %v509 = vpop.f32.mrb[0].mxu0
        %510 = vmatprep.mubr.f32.mxu0 0.0
        %511 = vmatmul.mubr.f32.gmra.mrb[0].mxu0 %v197
        %v512 = vpop.f32.mrb[0].mxu0
        %v513 = vadd.f32 %v368, %v512
        %v514 = vpop.f32.mrb[0].mxu0
        %515 = vmatprep.mubr.f32.mxu0 0.0
        %516 = vmatmul.mubr.f32.gmra.mrb[0].mxu0 %v200
        %v517 = vpop.f32.mrb[0].mxu0
        %v518 = vadd.f32 %v373, %v517
        %v519 = vpop.f32.mrb[0].mxu0
        %520 = vmatprep.mubr.f32.mxu0 0.0
        %521 = vmatmul.mubr.f32.gmra.mrb[0].mxu0 %v203
        %v522 = vpop.f32.mrb[0].mxu0
        %v523 = vadd.f32 %v378, %v522
        %v524 = vpop.f32.mrb[0].mxu0
        %525 = vmatprep.mubr.f32.mxu0 0.0
        %526 = vmatmul.mubr.f32.gmra.mrb[0].mxu0 %v206
        %v527 = vpop.f32.mrb[0].mxu0
        %v528 = vadd.f32 %v383, %v527
        %v529 = vpop.f32.mrb[0].mxu0
        %530 = vmatprep.mubr.f32.mxu0 0.0
        %531 = vmatmul.mubr.f32.gmra.mrb[0].mxu0 %v209
        %v532 = vpop.f32.mrb[0].mxu0
        %v533 = vadd.f32 %v388, %v532
        %v534 = vpop.f32.mrb[0].mxu0
        %535 = vmatprep.mubr.f32.mxu0 0.0
        %536 = vmatmul.mubr.f32.gmra.mrb[0].mxu0 %v212
        %v537 = vpop.f32.mrb[0].mxu0
        %v538 = vadd.f32 %v393, %v537
        %v539 = vpop.f32.mrb[0].mxu0
        %540 = vmatprep.mubr.f32.mxu0 0.0
        %541 = vmatmul.mubr.f32.gmra.mrb[0].mxu0 %v215
        %v542 = vpop.f32.mrb[0].mxu0
        %v543 = vadd.f32 %v398, %v542
        %v544 = vpop.f32.mrb[0].mxu0
        %545 = vmatprep.mubr.f32.mxu0 0.0
        %546 = vmatmul.mubr.f32.gmra.mrb[0].mxu0 %v218
        %v547 = vpop.f32.mrb[0].mxu0
        %v548 = vadd.f32 %v403, %v547
        %v549 = vpop.f32.mrb[0].mxu0
        %550 = vmatprep.mubr.f32.mxu0 0.0
        %551 = vmatmul.mubr.f32.gmra.mrb[0].mxu0 %v221
        %v552 = vpop.f32.mrb[0].mxu0
        %v553 = vadd.f32 %v408, %v552
        %v554 = vpop.f32.mrb[0].mxu0
        %555 = vmatprep.mubr.f32.mxu0 0.0
        %556 = vmatmul.mubr.f32.gmra.mrb[0].mxu0 %v224
        %v557 = vpop.f32.mrb[0].mxu0
        %v558 = vadd.f32 %v413, %v557
        %v559 = vpop.f32.mrb[0].mxu0
        %560 = vmatprep.mubr.f32.mxu0 0.0
        %561 = vmatmul.mubr.f32.gmra.mrb[0].mxu0 %v227
        %v562 = vpop.f32.mrb[0].mxu0
        %v563 = vadd.f32 %v418, %v562
        %v564 = vpop.f32.mrb[0].mxu0
        %565 = vdwg.mxu0
        %vm566 = vcmask 64512
        %567 = vst.msk [vmem:[%s177] sm:$0xff] %vm566, %v488
        %568 = vst.msk [vmem:[%s177 + $0x8] sm:$0xff] %vm566, %v493
        %569 = vst.msk [vmem:[%s177 + $0x10] sm:$0xff] %vm566, %v498
        %570 = vst.msk [vmem:[%s177 + $0x18] sm:$0xff] %vm566, %v503
        %571 = vst.msk [vmem:[%s177 + $0x20] sm:$0xff] %vm566, %v508
        %572 = vst.msk [vmem:[%s177 + $0x28] sm:$0xff] %vm566, %v513
        %573 = vst.msk [vmem:[%s177 + $0x30] sm:$0xff] %vm566, %v518
        %574 = vst.msk [vmem:[%s177 + $0x38] sm:$0xff] %vm566, %v523
        %575 = vst.msk [vmem:[%s177 + $0x40] sm:$0xff] %vm566, %v528
        %576 = vst.msk [vmem:[%s177 + $0x48] sm:$0xff] %vm566, %v533
        %577 = vst.msk [vmem:[%s177 + $0x50] sm:$0xff] %vm566, %v538
        %578 = vst.msk [vmem:[%s177 + $0x58] sm:$0xff] %vm566, %v543
        %579 = vst.msk [vmem:[%s177 + $0x60] sm:$0xff] %vm566, %v548
        %580 = vst.msk [vmem:[%s177 + $0x68] sm:$0xff] %vm566, %v553
        %581 = vst.msk [vmem:[%s177 + $0x70] sm:$0xff] %vm566, %v558
        %582 = vst.msk [vmem:[%s177 + $0x78] sm:$0xff] %vm566, %v563
        %s583 = sand.u32 %s75, 1
        %s584 = scalar_lea.sflag [#allocation4], %s583
        %s585 = sand.u32 %s75, 1
        %s586 = smul.addr %s585, 128
        %s587 = scalar_lea.vmem [#allocation7], %s586
        // Predicated region
        $region37: #{spamics_forward.11} parent=27 // pred_check
          %p588 = pneg %p85
        $region38: #{spamics_forward.11} parent=27 // pred_check_branch
          %590 = sbr.rel (%p588) target = $region40
        $region39: #{spamics_forward.11} parent=27 // pred_region
          %s591 = smul.u32 16, %s20
          %s593 = ssub.s32 2048, 2048
          %594 = vsyncadd %s584, %s593
          %s595 = smul.addr %s591, 128
          %s596 = scalar_lea.hbm %s2, %s595
          %s597 = sshll.u32 %s587, 4
          %s598 = int_to_ptr.vmem [resolvable:$true] %s597
          %603 = dma.vmem_to_hbm [thread:$0]  %s598, 2048, %s596, %s584, 128, 128, 8
        $region40: #{spamics_forward.11} parent=27 // pred_fallthru
          _
      $region28: #{spamics_forward.11} parent=5 // pred_fallthru
        _
      %p604 = scmp.le.s32.totalorder 2, %s15
      // Predicated region
      $region41: #{spamics_forward.11} parent=5 // pred_check
        %p605 = pneg %p604
      $region42: #{spamics_forward.11} parent=5 // pred_check_branch
        %607 = sbr.rel (%p605) target = $region44
      $region43: #{spamics_forward.11} parent=5 // pred_region
        %s608 = ssub.s32 %s15, 2
        // Predicated region
        $region45: #{spamics_forward.11} parent=43 // pred_check
          %p609 = pneg %p91
        $region46: #{spamics_forward.11} parent=43 // pred_check_branch
          %611 = sbr.rel (%p609) target = $region48
        $region47: #{spamics_forward.11} parent=43 // pred_region
          %s612 = sand.u32 %s76, 1
          %s613 = scalar_lea.sflag [#allocation4], %s612
          %s614 = sand.u32 %s76, 1
          %s615 = smul.addr %s614, 128
          %s616 = scalar_lea.vmem [#allocation7], %s615
          %617 = dma.done %s613, 2048
        $region48: #{spamics_forward.11} parent=43 // pred_fallthru
          _
      $region44: #{spamics_forward.11} parent=5 // pred_fallthru
        _
    $region6: #{spamics_forward.11} parent=1 // loop_footer
      %s19 = sadd.s32 1, %s15
    $region7: #{spamics_forward.11} parent=1 // loop_footer_branch
      %14 = sbr.rel target = $region3
    $region8: #{spamics_forward.11} parent=1 // loop_exit
      _
    %618 = vsyncpa [#allocation3], 1
    %s619 = scalar_lea.sflag [#allocation3], 1
    %620 = vsyncpa %s619, 1
    %621 = vsyncpa [#allocation6], 1
    %s622 = scalar_lea.sflag [#allocation6], 1
    %623 = vsyncpa %s622, 1
    %624 = vsyncpa [#allocation4], 1
    %s625 = scalar_lea.sflag [#allocation4], 1
    %626 = vsyncpa %s625, 1

// kernel: spamics_forward.13
$region0: #{spamics_forward.13}
  #allocation0 [shape = 'u32[]', space=smem, size = 0x4, offset = 0x4, fixed_abs, tag = 'smem constant byte address 0x4 - core index']
  #allocation1 [shape = 'u32[144,128]{1,0:T(1,128)}', space=vmem, size = 0x12000, scoped, tag = 'internal scratch']
  %s0 = inlined_call_operand.hbm [shape: f32[384,8], index: 0, kind: input, shape index: {}, may-alias: {0,1}]
  %s1 = inlined_call_operand.hbm [shape: f32[384,8], index: 1, kind: input, shape index: {}, may-alias: {0,1}]
  %s2 = inlined_call_operand.hbm [shape: f32[384,32], index: 2, kind: input, shape index: {}]
  %s3 = inlined_call_operand.hbm [shape: f32[384,32], index: 3, kind: input, shape index: {}]
  %s4 = inlined_call_operand.hbm [shape: f32[384,384], index: 4, kind: input, shape index: {}]
  %s5 = inlined_call_operand.hbm [shape: f32[3,8,128], index: 5, kind: output, shape index: {}]
  %s6 = sld [smem:[#allocation0]]
  $region73: #{spamics_forward.13} parent=0
    _
  %s8 = ssub.s32 1, %s6
  %s9 = scalar_select 0, %s8, %s6
  $region1: #{spamics_forward.13} parent=0
    #allocation2 [shape = 'u8[196608]{0}', space=vmem, size = 0x30000, scoped, tag = 'input window, operand 0, single buffered']
    #allocation3 [shape = 's32[2]{0}', space=sflag, size = 0x8, scoped, tag = 'scoped memory for spamics_forward.13']
    #allocation4 [shape = 's32[2]{0}', space=sflag, size = 0x8, scoped, tag = 'scoped memory for spamics_forward.13']
    #allocation5 [shape = 'u8[131072]{0}', space=vmem, size = 0x20000, scoped, tag = 'input window, operand 1']
    #allocation6 [shape = 's32[2]{0}', space=sflag, size = 0x8, scoped, tag = 'scoped memory for spamics_forward.13']
    #allocation7 [shape = 'u8[196608]{0}', space=vmem, size = 0x30000, scoped, tag = 'input window, operand 2, single buffered']
    #allocation8 [shape = 'u8[131072]{0}', space=vmem, size = 0x20000, scoped, tag = 'input window, operand 3']
    #allocation9 [shape = 's32[2]{0}', space=sflag, size = 0x8, scoped, tag = 'scoped memory for spamics_forward.13']
    #allocation10 [shape = 'u8[393216]{0}', space=vmem, size = 0x60000, scoped, tag = 'input window, operand 4']
    #allocation11 [shape = 'u8[8192]{0}', space=vmem, size = 0x2000, scoped, tag = 'output window, operand 0']
    %10 = vsyncpa [#allocation3], 0
    %11 = vsyncpa [#allocation6], 0
    %s12 = scalar_lea.sflag [#allocation6], 1
    %13 = vsyncpa %s12, 0
    %14 = vsyncpa [#allocation9], 0
    %s15 = scalar_lea.sflag [#allocation9], 1
    %16 = vsyncpa %s15, 0
    %17 = vsyncpa [#allocation4], 0
    %s18 = scalar_lea.sflag [#allocation4], 1
    %19 = vsyncpa %s18, 0
    loop: start=0, step=1, limit=5
    $region2: #{spamics_forward.13} parent=1 // loop_pre_header
      _
    $region3: #{spamics_forward.13} parent=1 // loop_header
      %s21 = sphi 0, %s25
      %p22 = scmp.ge.s32.totalorder %s21, 5
      %s29 = sphi 0, %s29
      %s31 = sphi 0, %s29
      %s32 = sphi 0, %s31
      %s46 = sphi 0, %s32
      %s52 = sphi 0, %s54
      %s55 = sphi 0, %s52
      %s56 = sphi 0, %s55
      %s72 = sphi 0, %s56
      %s76 = sphi 0, %s76
      %s78 = sphi 0, %s76
      %s79 = sphi 0, %s78
      %s93 = sphi 0, %s79
      %s99 = sphi 0, %s101
      %s102 = sphi 0, %s99
      %s103 = sphi 0, %s102
      %s119 = sphi 0, %s103
      %s125 = sphi 0, %s127
      %s128 = sphi 0, %s125
      %s129 = sphi 0, %s128
      %s145 = sphi 0, %s129
      %s151 = sphi 0, %s153
      %s154 = sphi 0, %s151
      %s155 = sphi 0, %s154
      %s171 = sphi 0, %s155
    $region4: #{spamics_forward.13} parent=1 // loop_header_branch
      %24 = sbr.rel (%p22) target = $region8
    $region5: #{spamics_forward.13} parent=1 // loop_body
      %s26 = ssub.s32 %s21, 1
      %s27 = ssub.s32 %s21, 2
      %s28 = sadd.s32 %s21, 1
      %s30 = sadd.s32 %s29, 1
      %p33 = scmp.eq.s32.totalorder %s21, 2
      %p34 = scmp.ne.s32.totalorder %s29, %s31
      %p35 = scmp.eq.s32.totalorder %s21, 0
      %p36 = por %p34, %p35
      %p37 = scmp.ne.s32.totalorder %s29, %s31
      %p38 = scmp.eq.s32.totalorder %s26, 2
      %p39 = por %p37, %p38
      %p40 = scmp.ne.s32.totalorder %s31, %s32
      %p41 = scmp.eq.s32.totalorder %s26, 0
      %p42 = por %p40, %p41
      %p43 = scmp.ne.s32.totalorder %s31, %s32
      %p44 = scmp.eq.s32.totalorder %s27, 2
      %p45 = por %p43, %p44
      %p47 = scmp.ne.s32.totalorder %s32, %s46
      %p48 = scmp.eq.s32.totalorder %s27, 0
      %p49 = por %p47, %p48
      %s50 = ssub.s32 %s21, %s28
      %p51 = scmp.eq.s32.totalorder %s50, 0
      %s53 = sadd.s32 %s52, 1
      %s54 = scalar_select %p51, %s52, %s53
      %p57 = pneg %p51
      %p58 = scmp.eq.s32.totalorder %s21, 2
      %p59 = por %p57, %p58
      %p60 = scmp.ne.s32.totalorder %s52, %s55
      %p61 = scmp.eq.s32.totalorder %s21, 0
      %p62 = por %p60, %p61
      %p63 = scmp.ne.s32.totalorder %s52, %s55
      %p64 = scmp.eq.s32.totalorder %s26, 2
      %p65 = por %p63, %p64
      %p66 = scmp.ne.s32.totalorder %s55, %s56
      %p67 = scmp.eq.s32.totalorder %s26, 0
      %p68 = por %p66, %p67
      %p69 = scmp.ne.s32.totalorder %s55, %s56
      %p70 = scmp.eq.s32.totalorder %s27, 2
      %p71 = por %p69, %p70
      %p73 = scmp.ne.s32.totalorder %s56, %s72
      %p74 = scmp.eq.s32.totalorder %s27, 0
      %p75 = por %p73, %p74
      %s77 = sadd.s32 %s76, 1
      %p80 = scmp.eq.s32.totalorder %s21, 2
      %p81 = scmp.ne.s32.totalorder %s76, %s78
      %p82 = scmp.eq.s32.totalorder %s21, 0
      %p83 = por %p81, %p82
      %p84 = scmp.ne.s32.totalorder %s76, %s78
      %p85 = scmp.eq.s32.totalorder %s26, 2
      %p86 = por %p84, %p85
      %p87 = scmp.ne.s32.totalorder %s78, %s79
      %p88 = scmp.eq.s32.totalorder %s26, 0
      %p89 = por %p87, %p88
      %p90 = scmp.ne.s32.totalorder %s78, %s79
      %p91 = scmp.eq.s32.totalorder %s27, 2
      %p92 = por %p90, %p91
      %p94 = scmp.ne.s32.totalorder %s79, %s93
      %p95 = scmp.eq.s32.totalorder %s27, 0
      %p96 = por %p94, %p95
      %s97 = ssub.s32 %s21, %s28
      %p98 = scmp.eq.s32.totalorder %s97, 0
      %s100 = sadd.s32 %s99, 1
      %s101 = scalar_select %p98, %s99, %s100
      %p104 = pneg %p98
      %p105 = scmp.eq.s32.totalorder %s21, 2
      %p106 = por %p104, %p105
      %p107 = scmp.ne.s32.totalorder %s99, %s102
      %p108 = scmp.eq.s32.totalorder %s21, 0
      %p109 = por %p107, %p108
      %p110 = scmp.ne.s32.totalorder %s99, %s102
      %p111 = scmp.eq.s32.totalorder %s26, 2
      %p112 = por %p110, %p111
      %p113 = scmp.ne.s32.totalorder %s102, %s103
      %p114 = scmp.eq.s32.totalorder %s26, 0
      %p115 = por %p113, %p114
      %p116 = scmp.ne.s32.totalorder %s102, %s103
      %p117 = scmp.eq.s32.totalorder %s27, 2
      %p118 = por %p116, %p117
      %p120 = scmp.ne.s32.totalorder %s103, %s119
      %p121 = scmp.eq.s32.totalorder %s27, 0
      %p122 = por %p120, %p121
      %s123 = ssub.s32 %s21, %s28
      %p124 = scmp.eq.s32.totalorder %s123, 0
      %s126 = sadd.s32 %s125, 1
      %s127 = scalar_select %p124, %s125, %s126
      %p130 = pneg %p124
      %p131 = scmp.eq.s32.totalorder %s21, 2
      %p132 = por %p130, %p131
      %p133 = scmp.ne.s32.totalorder %s125, %s128
      %p134 = scmp.eq.s32.totalorder %s21, 0
      %p135 = por %p133, %p134
      %p136 = scmp.ne.s32.totalorder %s125, %s128
      %p137 = scmp.eq.s32.totalorder %s26, 2
      %p138 = por %p136, %p137
      %p139 = scmp.ne.s32.totalorder %s128, %s129
      %p140 = scmp.eq.s32.totalorder %s26, 0
      %p141 = por %p139, %p140
      %p142 = scmp.ne.s32.totalorder %s128, %s129
      %p143 = scmp.eq.s32.totalorder %s27, 2
      %p144 = por %p142, %p143
      %p146 = scmp.ne.s32.totalorder %s129, %s145
      %p147 = scmp.eq.s32.totalorder %s27, 0
      %p148 = por %p146, %p147
      %s149 = ssub.s32 %s21, %s28
      %p150 = scmp.eq.s32.totalorder %s149, 0
      %s152 = sadd.s32 %s151, 1
      %s153 = scalar_select %p150, %s151, %s152
      %p156 = pneg %p150
      %p157 = scmp.eq.s32.totalorder %s21, 2
      %p158 = por %p156, %p157
      %p159 = scmp.ne.s32.totalorder %s151, %s154
      %p160 = scmp.eq.s32.totalorder %s21, 0
      %p161 = por %p159, %p160
      %p162 = scmp.ne.s32.totalorder %s151, %s154
      %p163 = scmp.eq.s32.totalorder %s26, 2
      %p164 = por %p162, %p163
      %p165 = scmp.ne.s32.totalorder %s154, %s155
      %p166 = scmp.eq.s32.totalorder %s26, 0
      %p167 = por %p165, %p166
      %p168 = scmp.ne.s32.totalorder %s154, %s155
      %p169 = scmp.eq.s32.totalorder %s27, 2
      %p170 = por %p168, %p169
      %p172 = scmp.ne.s32.totalorder %s155, %s171
      %p173 = scmp.eq.s32.totalorder %s27, 0
      %p174 = por %p172, %p173
      %p175 = scmp.le.s32.totalorder 1, %s21
      %p176 = scmp.lt.s32.totalorder %s21, 4
      %p177 = pnand %p175, %p176
      %p178 = pneg %p177
      // Predicated region
      $region9: #{spamics_forward.13} parent=5 // pred_check
        _
      $region10: #{spamics_forward.13} parent=5 // pred_check_branch
        %180 = sbr.rel (%p177) target = $region12
      $region11: #{spamics_forward.13} parent=5 // pred_region
        %s181 = ssub.s32 %s21, 1
        // Predicated region
        $region13: #{spamics_forward.13} parent=11 // pred_check
          %p182 = pneg %p42
        $region14: #{spamics_forward.13} parent=11 // pred_check_branch
          %184 = sbr.rel (%p182) target = $region16
        $region15: #{spamics_forward.13} parent=11 // pred_region
          %s186 = ssub.s32 6144, 6144
          %187 = vsyncadd [#allocation3], %s186
          %s188 = sshll.u32 [#allocation2], 4
          %s189 = int_to_ptr.vmem [resolvable:$true] %s188
          %194 = dma.hbm_to_vmem [thread:$0]  %s0, 6144, %s189, [#allocation3], 128, 128, 8
        $region16: #{spamics_forward.13} parent=11 // pred_fallthru
          _
        // Predicated region
        $region17: #{spamics_forward.13} parent=11 // pred_check
          %p195 = pneg %p89
        $region18: #{spamics_forward.13} parent=11 // pred_check_branch
          %197 = sbr.rel (%p195) target = $region20
        $region19: #{spamics_forward.13} parent=11 // pred_region
          %s199 = ssub.s32 6144, 6144
          %200 = vsyncadd [#allocation6], %s199
          %s201 = sshll.u32 [#allocation7], 4
          %s202 = int_to_ptr.vmem [resolvable:$true] %s201
          %207 = dma.hbm_to_vmem [thread:$0]  %s2, 6144, %s202, [#allocation6], 128, 128, 8
        $region20: #{spamics_forward.13} parent=11 // pred_fallthru
          _
      $region12: #{spamics_forward.13} parent=5 // pred_fallthru
        _
      %p208 = scmp.lt.s32.totalorder %s21, 3
      // Predicated region
      $region21: #{spamics_forward.13} parent=5 // pred_check
        %p209 = pneg %p208
      $region22: #{spamics_forward.13} parent=5 // pred_check_branch
        %211 = sbr.rel (%p209) target = $region24
      $region23: #{spamics_forward.13} parent=5 // pred_region
        // Predicated region
        $region25: #{spamics_forward.13} parent=23 // pred_check
          %p212 = pneg %p62
        $region26: #{spamics_forward.13} parent=23 // pred_check_branch
          %214 = sbr.rel (%p212) target = $region28
        $region27: #{spamics_forward.13} parent=23 // pred_region
          %s215 = sand.u32 %s21, 1
          %s216 = scalar_lea.sflag [#allocation6], %s215
          %s217 = sand.u32 %s52, 1
          %s218 = smul.addr %s217, 128
          %s219 = scalar_lea.vmem [#allocation5], %s218
          %s220 = smul.u32 16, %s21
          %s222 = ssub.s32 2048, 2048
          %223 = vsyncadd %s216, %s222
          %s224 = smul.addr %s220, 128
          %s225 = scalar_lea.hbm %s1, %s224
          %s226 = sshll.u32 %s219, 4
          %s227 = int_to_ptr.vmem [resolvable:$true] %s226
          %232 = dma.hbm_to_vmem [thread:$0]  %s225, 2048, %s227, %s216, 128, 128, 8
        $region28: #{spamics_forward.13} parent=23 // pred_fallthru
          _
        // Predicated region
        $region29: #{spamics_forward.13} parent=23 // pred_check
          %p233 = pneg %p109
        $region30: #{spamics_forward.13} parent=23 // pred_check_branch
          %235 = sbr.rel (%p233) target = $region32
        $region31: #{spamics_forward.13} parent=23 // pred_region
          %s236 = sand.u32 %s21, 1
          %s237 = scalar_lea.sflag [#allocation9], %s236
          %s238 = sand.u32 %s99, 1
          %s239 = smul.addr %s238, 128
          %s240 = scalar_lea.vmem [#allocation8], %s239
          %s241 = smul.u32 16, %s21
          %s243 = ssub.s32 2048, 2048
          %244 = vsyncadd %s237, %s243
          %s245 = smul.addr %s241, 128
          %s246 = scalar_lea.hbm %s3, %s245
          %s247 = sshll.u32 %s240, 4
          %s248 = int_to_ptr.vmem [resolvable:$true] %s247
          %253 = dma.hbm_to_vmem [thread:$0]  %s246, 2048, %s248, %s237, 128, 128, 8
        $region32: #{spamics_forward.13} parent=23 // pred_fallthru
          _
        // Predicated region
        $region33: #{spamics_forward.13} parent=23 // pred_check
          %p254 = pneg %p135
        $region34: #{spamics_forward.13} parent=23 // pred_check_branch
          %256 = sbr.rel (%p254) target = $region36
        $region35: #{spamics_forward.13} parent=23 // pred_region
          %s257 = sand.u32 %s21, 1
          %s258 = scalar_lea.sflag [#allocation9], %s257
          %s259 = sand.u32 %s125, 1
          %s260 = smul.addr %s259, 384
          %s261 = scalar_lea.vmem [#allocation10], %s260
          %s262 = smul.u32 16, %s21
          %s264 = ssub.s32 6144, 6144
          %265 = vsyncadd %s258, %s264
          %s266 = smul.addr %s262, 3
          %s267 = smul.addr %s266, 128
          %s268 = scalar_lea.hbm %s4, %s267
          %s269 = sshll.u32 %s261, 4
          %s270 = int_to_ptr.vmem [resolvable:$true] %s269
          %275 = dma.hbm_to_vmem [thread:$0]  %s268, 6144, %s270, %s258, 384, 384, 24
        $region36: #{spamics_forward.13} parent=23 // pred_fallthru
          _
      $region24: #{spamics_forward.13} parent=5 // pred_fallthru
        _
      %p276 = scmp.le.s32.totalorder 1, %s21
      %p277 = scmp.lt.s32.totalorder %s21, 4
      %p278 = pnand %p276, %p277
      %p279 = pneg %p278
      // Predicated region
      $region37: #{spamics_forward.13} parent=5 // pred_check
        _
      $region38: #{spamics_forward.13} parent=5 // pred_check_branch
        %281 = sbr.rel (%p278) target = $region40
      $region39: #{spamics_forward.13} parent=5 // pred_region
        %s282 = ssub.s32 %s21, 1
        // Predicated region
        $region41: #{spamics_forward.13} parent=39 // pred_check
          %p283 = pneg %p42
        $region42: #{spamics_forward.13} parent=39 // pred_check_branch
          %285 = sbr.rel (%p283) target = $region44
        $region43: #{spamics_forward.13} parent=39 // pred_region
          %286 = dma.done [#allocation3], 6144
        $region44: #{spamics_forward.13} parent=39 // pred_fallthru
          _
        %s287 = sand.u32 %s26, 1
        %s288 = scalar_lea.sflag [#allocation6], %s287
        %s289 = sand.u32 %s55, 1
        %s290 = smul.addr %s289, 128
        %s291 = scalar_lea.vmem [#allocation5], %s290
        // Predicated region
        $region45: #{spamics_forward.13} parent=39 // pred_check
          %p292 = pneg %p68
        $region46: #{spamics_forward.13} parent=39 // pred_check_branch
          %294 = sbr.rel (%p292) target = $region48
        $region47: #{spamics_forward.13} parent=39 // pred_region
          %295 = dma.done %s288, 2048
        $region48: #{spamics_forward.13} parent=39 // pred_fallthru
          _
        // Predicated region
        $region49: #{spamics_forward.13} parent=39 // pred_check
          %p296 = pneg %p89
        $region50: #{spamics_forward.13} parent=39 // pred_check_branch
          %298 = sbr.rel (%p296) target = $region52
        $region51: #{spamics_forward.13} parent=39 // pred_region
          %299 = dma.done [#allocation6], 6144
        $region52: #{spamics_forward.13} parent=39 // pred_fallthru
          _
        %s300 = sand.u32 %s26, 1
        %s301 = scalar_lea.sflag [#allocation9], %s300
        %s302 = sand.u32 %s102, 1
        %s303 = smul.addr %s302, 128
        %s304 = scalar_lea.vmem [#allocation8], %s303
        // Predicated region
        $region53: #{spamics_forward.13} parent=39 // pred_check
          %p305 = pneg %p115
        $region54: #{spamics_forward.13} parent=39 // pred_check_branch
          %307 = sbr.rel (%p305) target = $region56
        $region55: #{spamics_forward.13} parent=39 // pred_region
          %308 = dma.done %s301, 2048
        $region56: #{spamics_forward.13} parent=39 // pred_fallthru
          _
        %s309 = sand.u32 %s26, 1
        %s310 = scalar_lea.sflag [#allocation9], %s309
        %s311 = sand.u32 %s128, 1
        %s312 = smul.addr %s311, 384
        %s313 = scalar_lea.vmem [#allocation10], %s312
        // Predicated region
        $region57: #{spamics_forward.13} parent=39 // pred_check
          %p314 = pneg %p141
        $region58: #{spamics_forward.13} parent=39 // pred_check_branch
          %316 = sbr.rel (%p314) target = $region60
        $region59: #{spamics_forward.13} parent=39 // pred_region
          %317 = dma.done %s310, 6144
        $region60: #{spamics_forward.13} parent=39 // pred_fallthru
          _
        %p318 = pneg %p42
        %p319 = pneg %p39
        %s320 = sand.u32 %s26, 1
        %s321 = scalar_lea.sflag [#allocation6], %s320
        %s322 = sand.u32 %s55, 1
        %s323 = smul.addr %s322, 128
        %s324 = scalar_lea.vmem [#allocation5], %s323
        %p325 = pneg %p68
        %p326 = pneg %p65
        %p327 = pneg %p89
        %p328 = pneg %p86
        %s329 = sand.u32 %s26, 1
        %s330 = scalar_lea.sflag [#allocation9], %s329
        %s331 = sand.u32 %s102, 1
        %s332 = smul.addr %s331, 128
        %s333 = scalar_lea.vmem [#allocation8], %s332
        %p334 = pneg %p115
        %p335 = pneg %p112
        %s336 = sand.u32 %s26, 1
        %s337 = scalar_lea.sflag [#allocation9], %s336
        %s338 = sand.u32 %s128, 1
        %s339 = smul.addr %s338, 384
        %s340 = scalar_lea.vmem [#allocation10], %s339
        %p341 = pneg %p141
        %p342 = pneg %p138
        %p343 = pneg %p167
        %p344 = pneg %p164
        %s345 = sand.u32 %s154, 1
        %s346 = scalar_lea.sflag [#allocation4], %s345
        %s347 = sand.u32 %s154, 1
        %s348 = smul.addr %s347, 8
        %s349 = scalar_lea.vmem [#allocation11], %s348
        %s350 = smul.u32 16, %s26
        %s351 = smul.u32 16, %s26
        %s352 = smul.u32 16, %s26
        %v353 = vld [vmem:[%s313] sm:$0xff]
        %v354 = vld [vmem:[%s313 + $0x8] sm:$0xff]
        %v355 = vld [vmem:[%s313 + $0x10] sm:$0xff]
        %v356 = vld [vmem:[%s313 + $0x18] sm:$0xff]
        %v357 = vld [vmem:[%s313 + $0x20] sm:$0xff]
        %v358 = vld [vmem:[%s313 + $0x28] sm:$0xff]
        %v359 = vld [vmem:[%s313 + $0x30] sm:$0xff]
        %v360 = vld [vmem:[%s313 + $0x38] sm:$0xff]
        %v361 = vld [vmem:[%s313 + $0x40] sm:$0xff]
        %v362 = vld [vmem:[%s313 + $0x48] sm:$0xff]
        %v363 = vld [vmem:[%s313 + $0x50] sm:$0xff]
        %v364 = vld [vmem:[%s313 + $0x58] sm:$0xff]
        %v365 = vld [vmem:[%s313 + $0x60] sm:$0xff]
        %v366 = vld [vmem:[%s313 + $0x68] sm:$0xff]
        %v367 = vld [vmem:[%s313 + $0x70] sm:$0xff]
        %v368 = vld [vmem:[%s313 + $0x78] sm:$0xff]
        %v369 = vld [vmem:[%s313 + $0x80] sm:$0xff]
        %v370 = vld [vmem:[%s313 + $0x88] sm:$0xff]
        %v371 = vld [vmem:[%s313 + $0x90] sm:$0xff]
        %v372 = vld [vmem:[%s313 + $0x98] sm:$0xff]
        %v373 = vld [vmem:[%s313 + $0xa0] sm:$0xff]
        %v374 = vld [vmem:[%s313 + $0xa8] sm:$0xff]
        %v375 = vld [vmem:[%s313 + $0xb0] sm:$0xff]
        %v376 = vld [vmem:[%s313 + $0xb8] sm:$0xff]
        %v377 = vld [vmem:[%s313 + $0xc0] sm:$0xff]
        %v378 = vld [vmem:[%s313 + $0xc8] sm:$0xff]
        %v379 = vld [vmem:[%s313 + $0xd0] sm:$0xff]
        %v380 = vld [vmem:[%s313 + $0xd8] sm:$0xff]
        %v381 = vld [vmem:[%s313 + $0xe0] sm:$0xff]
        %v382 = vld [vmem:[%s313 + $0xe8] sm:$0xff]
        %v383 = vld [vmem:[%s313 + $0xf0] sm:$0xff]
        %v384 = vld [vmem:[%s313 + $0xf8] sm:$0xff]
        %v385 = vld [vmem:[%s313 + $0x100] sm:$0xff]
        %v386 = vld [vmem:[%s313 + $0x108] sm:$0xff]
        %v387 = vld [vmem:[%s313 + $0x110] sm:$0xff]
        %v388 = vld [vmem:[%s313 + $0x118] sm:$0xff]
        %v389 = vld [vmem:[%s313 + $0x120] sm:$0xff]
        %v390 = vld [vmem:[%s313 + $0x128] sm:$0xff]
        %v391 = vld [vmem:[%s313 + $0x130] sm:$0xff]
        %v392 = vld [vmem:[%s313 + $0x138] sm:$0xff]
        %v393 = vld [vmem:[%s313 + $0x140] sm:$0xff]
        %v394 = vld [vmem:[%s313 + $0x148] sm:$0xff]
        %v395 = vld [vmem:[%s313 + $0x150] sm:$0xff]
        %v396 = vld [vmem:[%s313 + $0x158] sm:$0xff]
        %v397 = vld [vmem:[%s313 + $0x160] sm:$0xff]
        %v398 = vld [vmem:[%s313 + $0x168] sm:$0xff]
        %v399 = vld [vmem:[%s313 + $0x170] sm:$0xff]
        %v400 = vld [vmem:[%s313 + $0x178] sm:$0xff]
        %v401 = vld [vmem:[#allocation7] sm:$0xff]
        %v402 = vld [vmem:[#allocation7 + $0x8] sm:$0xff]
        %v403 = vld [vmem:[#allocation7 + $0x10] sm:$0xff]
        %v404 = vld [vmem:[#allocation7 + $0x18] sm:$0xff]
        %v405 = vld [vmem:[#allocation7 + $0x20] sm:$0xff]
        %v406 = vld [vmem:[#allocation7 + $0x28] sm:$0xff]
        %v407 = vld [vmem:[#allocation7 + $0x30] sm:$0xff]
        %v408 = vld [vmem:[#allocation7 + $0x38] sm:$0xff]
        %v409 = vld [vmem:[#allocation7 + $0x40] sm:$0xff]
        %v410 = vld [vmem:[#allocation7 + $0x48] sm:$0xff]
        %v411 = vld [vmem:[#allocation7 + $0x50] sm:$0xff]
        %v412 = vld [vmem:[#allocation7 + $0x58] sm:$0xff]
        %v413 = vld [vmem:[#allocation7 + $0x60] sm:$0xff]
        %v414 = vld [vmem:[#allocation7 + $0x68] sm:$0xff]
        %v415 = vld [vmem:[#allocation7 + $0x70] sm:$0xff]
        %v416 = vld [vmem:[#allocation7 + $0x78] sm:$0xff]
        %v417 = vld [vmem:[#allocation7 + $0x80] sm:$0xff]
        %v418 = vld [vmem:[#allocation7 + $0x88] sm:$0xff]
        %v419 = vld [vmem:[#allocation7 + $0x90] sm:$0xff]
        %v420 = vld [vmem:[#allocation7 + $0x98] sm:$0xff]
        %v421 = vld [vmem:[#allocation7 + $0xa0] sm:$0xff]
        %v422 = vld [vmem:[#allocation7 + $0xa8] sm:$0xff]
        %v423 = vld [vmem:[#allocation7 + $0xb0] sm:$0xff]
        %v424 = vld [vmem:[#allocation7 + $0xb8] sm:$0xff]
        %v425 = vld [vmem:[#allocation7 + $0xc0] sm:$0xff]
        %v426 = vld [vmem:[#allocation7 + $0xc8] sm:$0xff]
        %v427 = vld [vmem:[#allocation7 + $0xd0] sm:$0xff]
        %v428 = vld [vmem:[#allocation7 + $0xd8] sm:$0xff]
        %v429 = vld [vmem:[#allocation7 + $0xe0] sm:$0xff]
        %v430 = vld [vmem:[#allocation7 + $0xe8] sm:$0xff]
        %v431 = vld [vmem:[#allocation7 + $0xf0] sm:$0xff]
        %v432 = vld [vmem:[#allocation7 + $0xf8] sm:$0xff]
        %v433 = vld [vmem:[#allocation7 + $0x100] sm:$0xff]
        %v434 = vld [vmem:[#allocation7 + $0x108] sm:$0xff]
        %v435 = vld [vmem:[#allocation7 + $0x110] sm:$0xff]
        %v436 = vld [vmem:[#allocation7 + $0x118] sm:$0xff]
        %v437 = vld [vmem:[#allocation7 + $0x120] sm:$0xff]
        %v438 = vld [vmem:[#allocation7 + $0x128] sm:$0xff]
        %v439 = vld [vmem:[#allocation7 + $0x130] sm:$0xff]
        %v440 = vld [vmem:[#allocation7 + $0x138] sm:$0xff]
        %v441 = vld [vmem:[#allocation7 + $0x140] sm:$0xff]
        %v442 = vld [vmem:[#allocation7 + $0x148] sm:$0xff]
        %v443 = vld [vmem:[#allocation7 + $0x150] sm:$0xff]
        %v444 = vld [vmem:[#allocation7 + $0x158] sm:$0xff]
        %v445 = vld [vmem:[#allocation7 + $0x160] sm:$0xff]
        %v446 = vld [vmem:[#allocation7 + $0x168] sm:$0xff]
        %v447 = vld [vmem:[#allocation7 + $0x170] sm:$0xff]
        %v448 = vld [vmem:[#allocation7 + $0x178] sm:$0xff]
        %449 = vmatprep.subr.mxu0 0.0
        %450 = vmatpush1.msra.mxu0 %v401
        %451 = vmatprep.subr.mxu0 0.0
        %452 = vmatpush1.msra.mxu0 %v402
        %453 = vmatprep.subr.mxu0 0.0
        %454 = vmatpush1.msra.mxu0 %v403
        %455 = vmatprep.subr.mxu0 0.0
        %456 = vmatpush1.msra.mxu0 %v404
        %457 = vmatprep.subr.mxu0 0.0
        %458 = vmatpush1.msra.mxu0 %v405
        %459 = vmatprep.subr.mxu0 0.0
        %460 = vmatpush1.msra.mxu0 %v406
        %461 = vmatprep.subr.mxu0 0.0
        %462 = vmatpush1.msra.mxu0 %v407
        %463 = vmatprep.subr.mxu0 0.0
        %464 = vmatpush1.msra.mxu0 %v408
        %465 = vmatprep.subr.mxu0 0.0
        %466 = vmatpush1.msra.mxu0 %v409
        %467 = vmatprep.subr.mxu0 0.0
        %468 = vmatpush1.msra.mxu0 %v410
        %469 = vmatprep.subr.mxu0 0.0
        %470 = vmatpush1.msra.mxu0 %v411
        %471 = vmatprep.subr.mxu0 0.0
        %472 = vmatpush1.msra.mxu0 %v412
        %473 = vmatprep.subr.mxu0 0.0
        %474 = vmatpush1.msra.mxu0 %v413
        %475 = vmatprep.subr.mxu0 0.0
        %476 = vmatpush1.msra.mxu0 %v414
        %477 = vmatprep.subr.mxu0 0.0
        %478 = vmatpush1.msra.mxu0 %v415
        %479 = vmatprep.subr.mxu0 0.0
        %480 = vmatpush1.msra.mxu0 %v416
        %481 = vmatprep.subr.mxu0 0.0
        %482 = vmatpush1.msra.mxu0 %v417
        %483 = vmatprep.subr.mxu0 0.0
        %484 = vmatpush1.msra.mxu0 %v418
        %485 = vmatprep.subr.mxu0 0.0
        %486 = vmatpush1.msra.mxu0 %v419
        %487 = vmatprep.subr.mxu0 0.0
        %488 = vmatpush1.msra.mxu0 %v420
        %489 = vmatprep.subr.mxu0 0.0
        %490 = vmatpush1.msra.mxu0 %v421
        %491 = vmatprep.subr.mxu0 0.0
        %492 = vmatpush1.msra.mxu0 %v422
        %493 = vmatprep.subr.mxu0 0.0
        %494 = vmatpush1.msra.mxu0 %v423
        %495 = vmatprep.subr.mxu0 0.0
        %496 = vmatpush1.msra.mxu0 %v424
        %497 = vmatprep.subr.mxu0 0.0
        %498 = vmatpush1.msra.mxu0 %v425
        %499 = vmatprep.subr.mxu0 0.0
        %500 = vmatpush1.msra.mxu0 %v426
        %501 = vmatprep.subr.mxu0 0.0
        %502 = vmatpush1.msra.mxu0 %v427
        %503 = vmatprep.subr.mxu0 0.0
        %504 = vmatpush1.msra.mxu0 %v428
        %505 = vmatprep.subr.mxu0 0.0
        %506 = vmatpush1.msra.mxu0 %v429
        %507 = vmatprep.subr.mxu0 0.0
        %508 = vmatpush1.msra.mxu0 %v430
        %509 = vmatprep.subr.mxu0 0.0
        %510 = vmatpush1.msra.mxu0 %v431
        %511 = vmatprep.subr.mxu0 0.0
        %512 = vmatpush1.msra.mxu0 %v432
        %513 = vmatprep.mubr.f32.mxu0 %v354
        %514 = vmatmul.mubr.f32.gmra.mrb[0].mxu0 %v353
        %v515 = vpop.f32.mrb[0].mxu0
        %v516 = vadd.f32 0.0, %v515
        %v517 = vpop.f32.mrb[0].mxu0
        %518 = vmatprep.mubr.f32.mxu0 %v357
        %519 = vmatmul.mubr.f32.gmra.mrb[0].mxu0 %v356
        %v520 = vpop.f32.mrb[0].mxu0
        %v521 = vadd.f32 0.0, %v520
        %v522 = vpop.f32.mrb[0].mxu0
        %523 = vmatprep.mubr.f32.mxu0 %v360
        %524 = vmatmul.mubr.f32.gmra.mrb[0].mxu0 %v359
        %v525 = vpop.f32.mrb[0].mxu0
        %v526 = vadd.f32 0.0, %v525
        %v527 = vpop.f32.mrb[0].mxu0
        %528 = vmatprep.mubr.f32.mxu0 %v363
        %529 = vmatmul.mubr.f32.gmra.mrb[0].mxu0 %v362
        %v530 = vpop.f32.mrb[0].mxu0
        %v531 = vadd.f32 0.0, %v530
        %v532 = vpop.f32.mrb[0].mxu0
        %533 = vmatprep.mubr.f32.mxu0 %v366
        %534 = vmatmul.mubr.f32.gmra.mrb[0].mxu0 %v365
        %v535 = vpop.f32.mrb[0].mxu0
        %v536 = vadd.f32 0.0, %v535
        %v537 = vpop.f32.mrb[0].mxu0
        %538 = vmatprep.mubr.f32.mxu0 %v369
        %539 = vmatmul.mubr.f32.gmra.mrb[0].mxu0 %v368
        %v540 = vpop.f32.mrb[0].mxu0
        %v541 = vadd.f32 0.0, %v540
        %v542 = vpop.f32.mrb[0].mxu0
        %543 = vmatprep.mubr.f32.mxu0 %v372
        %544 = vmatmul.mubr.f32.gmra.mrb[0].mxu0 %v371
        %v545 = vpop.f32.mrb[0].mxu0
        %v546 = vadd.f32 0.0, %v545
        %v547 = vpop.f32.mrb[0].mxu0
        %548 = vmatprep.mubr.f32.mxu0 %v375
        %549 = vmatmul.mubr.f32.gmra.mrb[0].mxu0 %v374
        %v550 = vpop.f32.mrb[0].mxu0
        %v551 = vadd.f32 0.0, %v550
        %v552 = vpop.f32.mrb[0].mxu0
        %553 = vmatprep.mubr.f32.mxu0 %v378
        %554 = vmatmul.mubr.f32.gmra.mrb[0].mxu0 %v377
        %v555 = vpop.f32.mrb[0].mxu0
        %v556 = vadd.f32 0.0, %v555
        %v557 = vpop.f32.mrb[0].mxu0
        %558 = vmatprep.mubr.f32.mxu0 %v381
        %559 = vmatmul.mubr.f32.gmra.mrb[0].mxu0 %v380
        %v560 = vpop.f32.mrb[0].mxu0
        %v561 = vadd.f32 0.0, %v560
        %v562 = vpop.f32.mrb[0].mxu0
        %563 = vmatprep.mubr.f32.mxu0 %v384
        %564 = vmatmul.mubr.f32.gmra.mrb[0].mxu0 %v383
        %v565 = vpop.f32.mrb[0].mxu0
        %v566 = vadd.f32 0.0, %v565
        %v567 = vpop.f32.mrb[0].mxu0
        %568 = vmatprep.mubr.f32.mxu0 %v387
        %569 = vmatmul.mubr.f32.gmra.mrb[0].mxu0 %v386
        %v570 = vpop.f32.mrb[0].mxu0
        %v571 = vadd.f32 0.0, %v570
        %v572 = vpop.f32.mrb[0].mxu0
        %573 = vmatprep.mubr.f32.mxu0 %v390
        %574 = vmatmul.mubr.f32.gmra.mrb[0].mxu0 %v389
        %v575 = vpop.f32.mrb[0].mxu0
        %v576 = vadd.f32 0.0, %v575
        %v577 = vpop.f32.mrb[0].mxu0
        %578 = vmatprep.mubr.f32.mxu0 %v393
        %579 = vmatmul.mubr.f32.gmra.mrb[0].mxu0 %v392
        %v580 = vpop.f32.mrb[0].mxu0
        %v581 = vadd.f32 0.0, %v580
        %v582 = vpop.f32.mrb[0].mxu0
        %583 = vmatprep.mubr.f32.mxu0 %v396
        %584 = vmatmul.mubr.f32.gmra.mrb[0].mxu0 %v395
        %v585 = vpop.f32.mrb[0].mxu0
        %v586 = vadd.f32 0.0, %v585
        %v587 = vpop.f32.mrb[0].mxu0
        %588 = vmatprep.mubr.f32.mxu0 %v399
        %589 = vmatmul.mubr.f32.gmra.mrb[0].mxu0 %v398
        %v590 = vpop.f32.mrb[0].mxu0
        %v591 = vadd.f32 0.0, %v590
        %v592 = vpop.f32.mrb[0].mxu0
        %593 = vdwg.mxu0
        %594 = vmatprep.subr.mxu0 0.0
        %595 = vmatpush1.msra.mxu0 %v433
        %596 = vmatprep.subr.mxu0 0.0
        %597 = vmatpush1.msra.mxu0 %v434
        %598 = vmatprep.subr.mxu0 0.0
        %599 = vmatpush1.msra.mxu0 %v435
        %600 = vmatprep.subr.mxu0 0.0
        %601 = vmatpush1.msra.mxu0 %v436
        %602 = vmatprep.subr.mxu0 0.0
        %603 = vmatpush1.msra.mxu0 %v437
        %604 = vmatprep.subr.mxu0 0.0
        %605 = vmatpush1.msra.mxu0 %v438
        %606 = vmatprep.subr.mxu0 0.0
        %607 = vmatpush1.msra.mxu0 %v439
        %608 = vmatprep.subr.mxu0 0.0
        %609 = vmatpush1.msra.mxu0 %v440
        %610 = vmatprep.subr.mxu0 0.0
        %611 = vmatpush1.msra.mxu0 %v441
        %612 = vmatprep.subr.mxu0 0.0
        %613 = vmatpush1.msra.mxu0 %v442
        %614 = vmatprep.subr.mxu0 0.0
        %615 = vmatpush1.msra.mxu0 %v443
        %616 = vmatprep.subr.mxu0 0.0
        %617 = vmatpush1.msra.mxu0 %v444
        %618 = vmatprep.subr.mxu0 0.0
        %619 = vmatpush1.msra.mxu0 %v445
        %620 = vmatprep.subr.mxu0 0.0
        %621 = vmatpush1.msra.mxu0 %v446
        %622 = vmatprep.subr.mxu0 0.0
        %623 = vmatpush1.msra.mxu0 %v447
        %624 = vmatprep.subr.mxu0 0.0
        %625 = vmatpush1.msra.mxu0 %v448
        %626 = vmatprep.subr.mxu0 0.0
        %627 = vmatpush1.msra.mxu0 0.0
        %628 = vmatprep.subr.mxu0 0.0
        %629 = vmatpush1.msra.mxu0 0.0
        %630 = vmatprep.subr.mxu0 0.0
        %631 = vmatpush1.msra.mxu0 0.0
        %632 = vmatprep.subr.mxu0 0.0
        %633 = vmatpush1.msra.mxu0 0.0
        %634 = vmatprep.subr.mxu0 0.0
        %635 = vmatpush1.msra.mxu0 0.0
        %636 = vmatprep.subr.mxu0 0.0
        %637 = vmatpush1.msra.mxu0 0.0
        %638 = vmatprep.subr.mxu0 0.0
        %639 = vmatpush1.msra.mxu0 0.0
        %640 = vmatprep.subr.mxu0 0.0
        %641 = vmatpush1.msra.mxu0 0.0
        %642 = vmatprep.subr.mxu0 0.0
        %643 = vmatpush1.msra.mxu0 0.0
        %644 = vmatprep.subr.mxu0 0.0
        %645 = vmatpush1.msra.mxu0 0.0
        %646 = vmatprep.subr.mxu0 0.0
        %647 = vmatpush1.msra.mxu0 0.0
        %648 = vmatprep.subr.mxu0 0.0
        %649 = vmatpush1.msra.mxu0 0.0
        %650 = vmatprep.subr.mxu0 0.0
        %651 = vmatpush1.msra.mxu0 0.0
        %652 = vmatprep.subr.mxu0 0.0
        %653 = vmatpush1.msra.mxu0 0.0
        %654 = vmatprep.subr.mxu0 0.0
        %655 = vmatpush1.msra.mxu0 0.0
        %656 = vmatprep.subr.mxu0 0.0
        %657 = vmatpush1.msra.mxu0 0.0
        %658 = vmatprep.mubr.f32.mxu0 0.0
        %659 = vmatmul.mubr.f32.gmra.mrb[0].mxu0 %v355
        %v660 = vpop.f32.mrb[0].mxu0
        %v661 = vadd.f32 %v516, %v660
        %v662 = vpop.f32.mrb[0].mxu0
        %663 = vmatprep.mubr.f32.mxu0 0.0
        %664 = vmatmul.mubr.f32.gmra.mrb[0].mxu0 %v358
        %v665 = vpop.f32.mrb[0].mxu0
        %v666 = vadd.f32 %v521, %v665
        %v667 = vpop.f32.mrb[0].mxu0
        %668 = vmatprep.mubr.f32.mxu0 0.0
        %669 = vmatmul.mubr.f32.gmra.mrb[0].mxu0 %v361
        %v670 = vpop.f32.mrb[0].mxu0
        %v671 = vadd.f32 %v526, %v670
        %v672 = vpop.f32.mrb[0].mxu0
        %673 = vmatprep.mubr.f32.mxu0 0.0
        %674 = vmatmul.mubr.f32.gmra.mrb[0].mxu0 %v364
        %v675 = vpop.f32.mrb[0].mxu0
        %v676 = vadd.f32 %v531, %v675
        %v677 = vpop.f32.mrb[0].mxu0
        %678 = vmatprep.mubr.f32.mxu0 0.0
        %679 = vmatmul.mubr.f32.gmra.mrb[0].mxu0 %v367
        %v680 = vpop.f32.mrb[0].mxu0
        %v681 = vadd.f32 %v536, %v680
        %v682 = vpop.f32.mrb[0].mxu0
        %683 = vmatprep.mubr.f32.mxu0 0.0
        %684 = vmatmul.mubr.f32.gmra.mrb[0].mxu0 %v370
        %v685 = vpop.f32.mrb[0].mxu0
        %v686 = vadd.f32 %v541, %v685
        %v687 = vpop.f32.mrb[0].mxu0
        %688 = vmatprep.mubr.f32.mxu0 0.0
        %689 = vmatmul.mubr.f32.gmra.mrb[0].mxu0 %v373
        %v690 = vpop.f32.mrb[0].mxu0
        %v691 = vadd.f32 %v546, %v690
        %v692 = vpop.f32.mrb[0].mxu0
        %693 = vmatprep.mubr.f32.mxu0 0.0
        %694 = vmatmul.mubr.f32.gmra.mrb[0].mxu0 %v376
        %v695 = vpop.f32.mrb[0].mxu0
        %v696 = vadd.f32 %v551, %v695
        %v697 = vpop.f32.mrb[0].mxu0
        %698 = vmatprep.mubr.f32.mxu0 0.0
        %699 = vmatmul.mubr.f32.gmra.mrb[0].mxu0 %v379
        %v700 = vpop.f32.mrb[0].mxu0
        %v701 = vadd.f32 %v556, %v700
        %v702 = vpop.f32.mrb[0].mxu0
        %703 = vmatprep.mubr.f32.mxu0 0.0
        %704 = vmatmul.mubr.f32.gmra.mrb[0].mxu0 %v382
        %v705 = vpop.f32.mrb[0].mxu0
        %v706 = vadd.f32 %v561, %v705
        %v707 = vpop.f32.mrb[0].mxu0
        %708 = vmatprep.mubr.f32.mxu0 0.0
        %709 = vmatmul.mubr.f32.gmra.mrb[0].mxu0 %v385
        %v710 = vpop.f32.mrb[0].mxu0
        %v711 = vadd.f32 %v566, %v710
        %v712 = vpop.f32.mrb[0].mxu0
        %713 = vmatprep.mubr.f32.mxu0 0.0
        %714 = vmatmul.mubr.f32.gmra.mrb[0].mxu0 %v388
        %v715 = vpop.f32.mrb[0].mxu0
        %v716 = vadd.f32 %v571, %v715
        %v717 = vpop.f32.mrb[0].mxu0
        %718 = vmatprep.mubr.f32.mxu0 0.0
        %719 = vmatmul.mubr.f32.gmra.mrb[0].mxu0 %v391
        %v720 = vpop.f32.mrb[0].mxu0
        %v721 = vadd.f32 %v576, %v720
        %v722 = vpop.f32.mrb[0].mxu0
        %723 = vmatprep.mubr.f32.mxu0 0.0
        %724 = vmatmul.mubr.f32.gmra.mrb[0].mxu0 %v394
        %v725 = vpop.f32.mrb[0].mxu0
        %v726 = vadd.f32 %v581, %v725
        %v727 = vpop.f32.mrb[0].mxu0
        %728 = vmatprep.mubr.f32.mxu0 0.0
        %729 = vmatmul.mubr.f32.gmra.mrb[0].mxu0 %v397
        %v730 = vpop.f32.mrb[0].mxu0
        %v731 = vadd.f32 %v586, %v730
        %v732 = vpop.f32.mrb[0].mxu0
        %733 = vmatprep.mubr.f32.mxu0 0.0
        %734 = vmatmul.mubr.f32.gmra.mrb[0].mxu0 %v400
        %v735 = vpop.f32.mrb[0].mxu0
        %v736 = vadd.f32 %v591, %v735
        %v737 = vpop.f32.mrb[0].mxu0
        %738 = vdwg.mxu0
        %v739 = vld [vmem:[%s304] sm:$0xff]
        %v740 = vld [vmem:[%s304 + $0x8] sm:$0xff]
        %v741 = vld [vmem:[%s304 + $0x10] sm:$0xff]
        %v742 = vld [vmem:[%s304 + $0x18] sm:$0xff]
        %v743 = vld [vmem:[%s304 + $0x20] sm:$0xff]
        %v744 = vld [vmem:[%s304 + $0x28] sm:$0xff]
        %v745 = vld [vmem:[%s304 + $0x30] sm:$0xff]
        %v746 = vld [vmem:[%s304 + $0x38] sm:$0xff]
        %v747 = vld [vmem:[%s304 + $0x40] sm:$0xff]
        %v748 = vld [vmem:[%s304 + $0x48] sm:$0xff]
        %v749 = vld [vmem:[%s304 + $0x50] sm:$0xff]
        %v750 = vld [vmem:[%s304 + $0x58] sm:$0xff]
        %v751 = vld [vmem:[%s304 + $0x60] sm:$0xff]
        %v752 = vld [vmem:[%s304 + $0x68] sm:$0xff]
        %v753 = vld [vmem:[%s304 + $0x70] sm:$0xff]
        %v754 = vld [vmem:[%s304 + $0x78] sm:$0xff]
        %v755 = vsub.f32 %v739, %v661
        %v756 = vsub.f32 %v740, %v666
        %v757 = vsub.f32 %v741, %v671
        %v758 = vsub.f32 %v742, %v676
        %v759 = vsub.f32 %v743, %v681
        %v760 = vsub.f32 %v744, %v686
        %v761 = vsub.f32 %v745, %v691
        %v762 = vsub.f32 %v746, %v696
        %v763 = vsub.f32 %v747, %v701
        %v764 = vsub.f32 %v748, %v706
        %v765 = vsub.f32 %v749, %v711
        %v766 = vsub.f32 %v750, %v716
        %v767 = vsub.f32 %v751, %v721
        %v768 = vsub.f32 %v752, %v726
        %v769 = vsub.f32 %v753, %v731
        %v770 = vsub.f32 %v754, %v736
        %v771 = vmul.f32 %v755, %v755
        %v772 = vmul.f32 %v756, %v756
        %v773 = vmul.f32 %v757, %v757
        %v774 = vmul.f32 %v758, %v758
        %v775 = vmul.f32 %v759, %v759
        %v776 = vmul.f32 %v760, %v760
        %v777 = vmul.f32 %v761, %v761
        %v778 = vmul.f32 %v762, %v762
        %v779 = vmul.f32 %v763, %v763
        %v780 = vmul.f32 %v764, %v764
        %v781 = vmul.f32 %v765, %v765
        %v782 = vmul.f32 %v766, %v766
        %v783 = vmul.f32 %v767, %v767
        %v784 = vmul.f32 %v768, %v768
        %v785 = vmul.f32 %v769, %v769
        %v786 = vmul.f32 %v770, %v770
        %vm787 = vcmask 261120
        %v788 = vsel %vm787, %v771, 0.0
        %v789 = vsel %vm787, %v772, 0.0
        %v790 = vadd.f32 %v788, %v789
        %v791 = vsel %vm787, %v773, 0.0
        %v792 = vadd.f32 %v790, %v791
        %v793 = vsel %vm787, %v774, 0.0
        %v794 = vadd.f32 %v792, %v793
        %v795 = vsel %vm787, %v775, 0.0
        %v796 = vadd.f32 %v794, %v795
        %v797 = vsel %vm787, %v776, 0.0
        %v798 = vadd.f32 %v796, %v797
        %v799 = vsel %vm787, %v777, 0.0
        %v800 = vadd.f32 %v798, %v799
        %v801 = vsel %vm787, %v778, 0.0
        %v802 = vadd.f32 %v800, %v801
        %v803 = vsel %vm787, %v779, 0.0
        %v804 = vadd.f32 %v802, %v803
        %v805 = vsel %vm787, %v780, 0.0
        %v806 = vadd.f32 %v804, %v805
        %v807 = vsel %vm787, %v781, 0.0
        %v808 = vadd.f32 %v806, %v807
        %v809 = vsel %vm787, %v782, 0.0
        %v810 = vadd.f32 %v808, %v809
        %v811 = vsel %vm787, %v783, 0.0
        %v812 = vadd.f32 %v810, %v811
        %v813 = vsel %vm787, %v784, 0.0
        %v814 = vadd.f32 %v812, %v813
        %v815 = vsel %vm787, %v785, 0.0
        %v816 = vadd.f32 %v814, %v815
        %v817 = vsel %vm787, %v786, 0.0
        %v818 = vadd.f32 %v816, %v817
        %819 = vadd.xlane.f32.xlu0 %v818
        %v820 = vpop.xlane.xlu0 %819
        %v821 = vrot.slane %v820, 4
        %v822 = vadd.f32 %v820, %v821
        %v823 = vrot.slane %v822, 2
        %v824 = vadd.f32 %v822, %v823
        %v825 = vrot.slane %v824, 1
        %v826 = vadd.f32 %v824, %v825
        %s827 = vtos %v826
        %v828 = vld [vmem:[%s291] sm:$0xff]
        %v829 = vld [vmem:[%s291 + $0x8] sm:$0xff]
        %v830 = vld [vmem:[%s291 + $0x10] sm:$0xff]
        %v831 = vld [vmem:[%s291 + $0x18] sm:$0xff]
        %v832 = vld [vmem:[%s291 + $0x20] sm:$0xff]
        %v833 = vld [vmem:[%s291 + $0x28] sm:$0xff]
        %v834 = vld [vmem:[%s291 + $0x30] sm:$0xff]
        %v835 = vld [vmem:[%s291 + $0x38] sm:$0xff]
        %v836 = vld [vmem:[%s291 + $0x40] sm:$0xff]
        %v837 = vld [vmem:[%s291 + $0x48] sm:$0xff]
        %v838 = vld [vmem:[%s291 + $0x50] sm:$0xff]
        %v839 = vld [vmem:[%s291 + $0x58] sm:$0xff]
        %v840 = vld [vmem:[%s291 + $0x60] sm:$0xff]
        %v841 = vld [vmem:[%s291 + $0x68] sm:$0xff]
        %v842 = vld [vmem:[%s291 + $0x70] sm:$0xff]
        %v843 = vld [vmem:[%s291 + $0x78] sm:$0xff]
        %v844 = vld [vmem:[#allocation2] sm:$0xff]
        %v845 = vld [vmem:[#allocation2 + $0x8] sm:$0xff]
        %v846 = vld [vmem:[#allocation2 + $0x10] sm:$0xff]
        %v847 = vld [vmem:[#allocation2 + $0x18] sm:$0xff]
        %v848 = vld [vmem:[#allocation2 + $0x20] sm:$0xff]
        %v849 = vld [vmem:[#allocation2 + $0x28] sm:$0xff]
        %v850 = vld [vmem:[#allocation2 + $0x30] sm:$0xff]
        %v851 = vld [vmem:[#allocation2 + $0x38] sm:$0xff]
        %v852 = vld [vmem:[#allocation2 + $0x40] sm:$0xff]
        %v853 = vld [vmem:[#allocation2 + $0x48] sm:$0xff]
        %v854 = vld [vmem:[#allocation2 + $0x50] sm:$0xff]
        %v855 = vld [vmem:[#allocation2 + $0x58] sm:$0xff]
        %v856 = vld [vmem:[#allocation2 + $0x60] sm:$0xff]
        %v857 = vld [vmem:[#allocation2 + $0x68] sm:$0xff]
        %v858 = vld [vmem:[#allocation2 + $0x70] sm:$0xff]
        %v859 = vld [vmem:[#allocation2 + $0x78] sm:$0xff]
        %v860 = vld [vmem:[#allocation2 + $0x80] sm:$0xff]
        %v861 = vld [vmem:[#allocation2 + $0x88] sm:$0xff]
        %v862 = vld [vmem:[#allocation2 + $0x90] sm:$0xff]
        %v863 = vld [vmem:[#allocation2 + $0x98] sm:$0xff]
        %v864 = vld [vmem:[#allocation2 + $0xa0] sm:$0xff]
        %v865 = vld [vmem:[#allocation2 + $0xa8] sm:$0xff]
        %v866 = vld [vmem:[#allocation2 + $0xb0] sm:$0xff]
        %v867 = vld [vmem:[#allocation2 + $0xb8] sm:$0xff]
        %v868 = vld [vmem:[#allocation2 + $0xc0] sm:$0xff]
        %v869 = vld [vmem:[#allocation2 + $0xc8] sm:$0xff]
        %v870 = vld [vmem:[#allocation2 + $0xd0] sm:$0xff]
        %v871 = vld [vmem:[#allocation2 + $0xd8] sm:$0xff]
        %v872 = vld [vmem:[#allocation2 + $0xe0] sm:$0xff]
        %v873 = vld [vmem:[#allocation2 + $0xe8] sm:$0xff]
        %v874 = vld [vmem:[#allocation2 + $0xf0] sm:$0xff]
        %v875 = vld [vmem:[#allocation2 + $0xf8] sm:$0xff]
        %v876 = vld [vmem:[#allocation2 + $0x100] sm:$0xff]
        %v877 = vld [vmem:[#allocation2 + $0x108] sm:$0xff]
        %v878 = vld [vmem:[#allocation2 + $0x110] sm:$0xff]
        %v879 = vld [vmem:[#allocation2 + $0x118] sm:$0xff]
        %v880 = vld [vmem:[#allocation2 + $0x120] sm:$0xff]
        %v881 = vld [vmem:[#allocation2 + $0x128] sm:$0xff]
        %v882 = vld [vmem:[#allocation2 + $0x130] sm:$0xff]
        %v883 = vld [vmem:[#allocation2 + $0x138] sm:$0xff]
        %v884 = vld [vmem:[#allocation2 + $0x140] sm:$0xff]
        %v885 = vld [vmem:[#allocation2 + $0x148] sm:$0xff]
        %v886 = vld [vmem:[#allocation2 + $0x150] sm:$0xff]
        %v887 = vld [vmem:[#allocation2 + $0x158] sm:$0xff]
        %v888 = vld [vmem:[#allocation2 + $0x160] sm:$0xff]
        %v889 = vld [vmem:[#allocation2 + $0x168] sm:$0xff]
        %v890 = vld [vmem:[#allocation2 + $0x170] sm:$0xff]
        %v891 = vld [vmem:[#allocation2 + $0x178] sm:$0xff]
        %vm892 = vcmask 64512
        %v894 = vsel %vm892, %v828, 0
        %v897 = vsel %vm892, %v829, 0
        %v900 = vsel %vm892, %v830, 0
        %v903 = vsel %vm892, %v831, 0
        %v906 = vsel %vm892, %v832, 0
        %v909 = vsel %vm892, %v833, 0
        %v912 = vsel %vm892, %v834, 0
        %v915 = vsel %vm892, %v835, 0
        %v918 = vsel %vm892, %v836, 0
        %v921 = vsel %vm892, %v837, 0
        %v924 = vsel %vm892, %v838, 0
        %v927 = vsel %vm892, %v839, 0
        %v930 = vsel %vm892, %v840, 0
        %v933 = vsel %vm892, %v841, 0
        %v936 = vsel %vm892, %v842, 0
        %v939 = vsel %vm892, %v843, 0
        %v942 = vsel %vm892, %v844, 0
        %v945 = vsel %vm892, %v845, 0
        %v948 = vsel %vm892, %v846, 0
        %v951 = vsel %vm892, %v847, 0
        %v954 = vsel %vm892, %v848, 0
        %v957 = vsel %vm892, %v849, 0
        %v960 = vsel %vm892, %v850, 0
        %v963 = vsel %vm892, %v851, 0
        %v966 = vsel %vm892, %v852, 0
        %v969 = vsel %vm892, %v853, 0
        %v972 = vsel %vm892, %v854, 0
        %v975 = vsel %vm892, %v855, 0
        %v978 = vsel %vm892, %v856, 0
        %v981 = vsel %vm892, %v857, 0
        %v984 = vsel %vm892, %v858, 0
        %v987 = vsel %vm892, %v859, 0
        %v990 = vsel %vm892, %v860, 0
        %v993 = vsel %vm892, %v861, 0
        %v996 = vsel %vm892, %v862, 0
        %v999 = vsel %vm892, %v863, 0
        %v1002 = vsel %vm892, %v864, 0
        %v1005 = vsel %vm892, %v865, 0
        %v1008 = vsel %vm892, %v866, 0
        %v1011 = vsel %vm892, %v867, 0
        %v1014 = vsel %vm892, %v868, 0
        %v1017 = vsel %vm892, %v869, 0
        %v1020 = vsel %vm892, %v870, 0
        %v1023 = vsel %vm892, %v871, 0
        %v1026 = vsel %vm892, %v872, 0
        %v1029 = vsel %vm892, %v873, 0
        %v1032 = vsel %vm892, %v874, 0
        %v1035 = vsel %vm892, %v875, 0
        %v1038 = vsel %vm892, %v876, 0
        %v1041 = vsel %vm892, %v877, 0
        %v1044 = vsel %vm892, %v878, 0
        %v1047 = vsel %vm892, %v879, 0
        %v1050 = vsel %vm892, %v880, 0
        %v1053 = vsel %vm892, %v881, 0
        %v1056 = vsel %vm892, %v882, 0
        %v1059 = vsel %vm892, %v883, 0
        %v1062 = vsel %vm892, %v884, 0
        %v1065 = vsel %vm892, %v885, 0
        %v1068 = vsel %vm892, %v886, 0
        %v1071 = vsel %vm892, %v887, 0
        %v1074 = vsel %vm892, %v888, 0
        %v1077 = vsel %vm892, %v889, 0
        %v1080 = vsel %vm892, %v890, 0
        %v1083 = vsel %vm892, %v891, 0
        %1085 = vmatprep.subr.mxu0 0.0
        %1086 = vmatpush1.xpose.msra.mxu0 %v942
        %1087 = vmatprep.subr.mxu0 0.0
        %1088 = vmatpush1.xpose.msra.mxu0 %v945
        %1089 = vmatprep.subr.mxu0 0.0
        %1090 = vmatpush1.xpose.msra.mxu0 %v948
        %1091 = vmatprep.subr.mxu0 0.0
        %1092 = vmatpush1.xpose.msra.mxu0 %v951
        %1093 = vmatprep.subr.mxu0 0.0
        %1094 = vmatpush1.xpose.msra.mxu0 %v954
        %1095 = vmatprep.subr.mxu0 0.0
        %1096 = vmatpush1.xpose.msra.mxu0 %v957
        %1097 = vmatprep.subr.mxu0 0.0
        %1098 = vmatpush1.xpose.msra.mxu0 %v960
        %1099 = vmatprep.subr.mxu0 0.0
        %1100 = vmatpush1.xpose.msra.mxu0 %v963
        %1101 = vmatprep.subr.mxu0 0.0
        %1102 = vmatpush1.xpose.msra.mxu0 %v966
        %1103 = vmatprep.subr.mxu0 0.0
        %1104 = vmatpush1.xpose.msra.mxu0 %v969
        %1105 = vmatprep.subr.mxu0 0.0
        %1106 = vmatpush1.xpose.msra.mxu0 %v972
        %1107 = vmatprep.subr.mxu0 0.0
        %1108 = vmatpush1.xpose.msra.mxu0 %v975
        %1109 = vmatprep.subr.mxu0 0.0
        %1110 = vmatpush1.xpose.msra.mxu0 %v978
        %1111 = vmatprep.subr.mxu0 0.0
        %1112 = vmatpush1.xpose.msra.mxu0 %v981
        %1113 = vmatprep.subr.mxu0 0.0
        %1114 = vmatpush1.xpose.msra.mxu0 %v984
        %1115 = vmatprep.subr.mxu0 0.0
        %1116 = vmatpush1.xpose.msra.mxu0 %v987
        %1117 = vmatprep.subr.mxu0 0.0
        %1118 = vmatpush1.xpose.msra.mxu0 %v990
        %1119 = vmatprep.subr.mxu0 0.0
        %1120 = vmatpush1.xpose.msra.mxu0 %v993
        %1121 = vmatprep.subr.mxu0 0.0
        %1122 = vmatpush1.xpose.msra.mxu0 %v996
        %1123 = vmatprep.subr.mxu0 0.0
        %1124 = vmatpush1.xpose.msra.mxu0 %v999
        %1125 = vmatprep.subr.mxu0 0.0
        %1126 = vmatpush1.xpose.msra.mxu0 %v1002
        %1127 = vmatprep.subr.mxu0 0.0
        %1128 = vmatpush1.xpose.msra.mxu0 %v1005
        %1129 = vmatprep.subr.mxu0 0.0
        %1130 = vmatpush1.xpose.msra.mxu0 %v1008
        %1131 = vmatprep.subr.mxu0 0.0
        %1132 = vmatpush1.xpose.msra.mxu0 %v1011
        %1133 = vmatprep.subr.mxu0 0.0
        %1134 = vmatpush1.xpose.msra.mxu0 %v1014
        %1135 = vmatprep.subr.mxu0 0.0
        %1136 = vmatpush1.xpose.msra.mxu0 %v1017
        %1137 = vmatprep.subr.mxu0 0.0
        %1138 = vmatpush1.xpose.msra.mxu0 %v1020
        %1139 = vmatprep.subr.mxu0 0.0
        %1140 = vmatpush1.xpose.msra.mxu0 %v1023
        %1141 = vmatprep.subr.mxu0 0.0
        %1142 = vmatpush1.xpose.msra.mxu0 %v1026
        %1143 = vmatprep.subr.mxu0 0.0
        %1144 = vmatpush1.xpose.msra.mxu0 %v1029
        %1145 = vmatprep.subr.mxu0 0.0
        %1146 = vmatpush1.xpose.msra.mxu0 %v1032
        %1147 = vmatprep.subr.mxu0 0.0
        %1148 = vmatpush1.xpose.msra.mxu0 %v1035
        %1149 = vmatprep.mubr.f32.mxu0 0.0
        %1150 = vmatmul.mubr.f32.gmra.mrb[0].mxu0 %v894
        %v1151 = vpop.f32.mrb[0].mxu0
        %v1152 = vadd.f32 0.0, %v1151
        %v1153 = vpop.f32.mrb[0].mxu0
        %v1154 = vadd.f32 0.0, %v1153
        %1155 = vmatprep.mubr.f32.mxu0 0.0
        %1156 = vmatmul.mubr.f32.gmra.mrb[0].mxu0 %v897
        %v1157 = vpop.f32.mrb[0].mxu0
        %v1158 = vadd.f32 0.0, %v1157
        %v1159 = vpop.f32.mrb[0].mxu0
        %v1160 = vadd.f32 0.0, %v1159
        %1161 = vmatprep.mubr.f32.mxu0 0.0
        %1162 = vmatmul.mubr.f32.gmra.mrb[0].mxu0 %v900
        %v1163 = vpop.f32.mrb[0].mxu0
        %v1164 = vadd.f32 0.0, %v1163
        %v1165 = vpop.f32.mrb[0].mxu0
        %v1166 = vadd.f32 0.0, %v1165
        %1167 = vmatprep.mubr.f32.mxu0 0.0
        %1168 = vmatmul.mubr.f32.gmra.mrb[0].mxu0 %v903
        %v1169 = vpop.f32.mrb[0].mxu0
        %v1170 = vadd.f32 0.0, %v1169
        %v1171 = vpop.f32.mrb[0].mxu0
        %v1172 = vadd.f32 0.0, %v1171
        %1173 = vmatprep.mubr.f32.mxu0 0.0
        %1174 = vmatmul.mubr.f32.gmra.mrb[0].mxu0 %v906
        %v1175 = vpop.f32.mrb[0].mxu0
        %v1176 = vadd.f32 0.0, %v1175
        %v1177 = vpop.f32.mrb[0].mxu0
        %v1178 = vadd.f32 0.0, %v1177
        %1179 = vmatprep.mubr.f32.mxu0 0.0
        %1180 = vmatmul.mubr.f32.gmra.mrb[0].mxu0 %v909
        %v1181 = vpop.f32.mrb[0].mxu0
        %v1182 = vadd.f32 0.0, %v1181
        %v1183 = vpop.f32.mrb[0].mxu0
        %v1184 = vadd.f32 0.0, %v1183
        %1185 = vmatprep.mubr.f32.mxu0 0.0
        %1186 = vmatmul.mubr.f32.gmra.mrb[0].mxu0 %v912
        %v1187 = vpop.f32.mrb[0].mxu0
        %v1188 = vadd.f32 0.0, %v1187
        %v1189 = vpop.f32.mrb[0].mxu0
        %v1190 = vadd.f32 0.0, %v1189
        %1191 = vmatprep.mubr.f32.mxu0 0.0
        %1192 = vmatmul.mubr.f32.gmra.mrb[0].mxu0 %v915
        %v1193 = vpop.f32.mrb[0].mxu0
        %v1194 = vadd.f32 0.0, %v1193
        %v1195 = vpop.f32.mrb[0].mxu0
        %v1196 = vadd.f32 0.0, %v1195
        %1197 = vmatprep.mubr.f32.mxu0 0.0
        %1198 = vmatmul.mubr.f32.gmra.mrb[0].mxu0 %v918
        %v1199 = vpop.f32.mrb[0].mxu0
        %v1200 = vadd.f32 0.0, %v1199
        %v1201 = vpop.f32.mrb[0].mxu0
        %v1202 = vadd.f32 0.0, %v1201
        %1203 = vmatprep.mubr.f32.mxu0 0.0
        %1204 = vmatmul.mubr.f32.gmra.mrb[0].mxu0 %v921
        %v1205 = vpop.f32.mrb[0].mxu0
        %v1206 = vadd.f32 0.0, %v1205
        %v1207 = vpop.f32.mrb[0].mxu0
        %v1208 = vadd.f32 0.0, %v1207
        %1209 = vmatprep.mubr.f32.mxu0 0.0
        %1210 = vmatmul.mubr.f32.gmra.mrb[0].mxu0 %v924
        %v1211 = vpop.f32.mrb[0].mxu0
        %v1212 = vadd.f32 0.0, %v1211
        %v1213 = vpop.f32.mrb[0].mxu0
        %v1214 = vadd.f32 0.0, %v1213
        %1215 = vmatprep.mubr.f32.mxu0 0.0
        %1216 = vmatmul.mubr.f32.gmra.mrb[0].mxu0 %v927
        %v1217 = vpop.f32.mrb[0].mxu0
        %v1218 = vadd.f32 0.0, %v1217
        %v1219 = vpop.f32.mrb[0].mxu0
        %v1220 = vadd.f32 0.0, %v1219
        %1221 = vmatprep.mubr.f32.mxu0 0.0
        %1222 = vmatmul.mubr.f32.gmra.mrb[0].mxu0 %v930
        %v1223 = vpop.f32.mrb[0].mxu0
        %v1224 = vadd.f32 0.0, %v1223
        %v1225 = vpop.f32.mrb[0].mxu0
        %v1226 = vadd.f32 0.0, %v1225
        %1227 = vmatprep.mubr.f32.mxu0 0.0
        %1228 = vmatmul.mubr.f32.gmra.mrb[0].mxu0 %v933
        %v1229 = vpop.f32.mrb[0].mxu0
        %v1230 = vadd.f32 0.0, %v1229
        %v1231 = vpop.f32.mrb[0].mxu0
        %v1232 = vadd.f32 0.0, %v1231
        %1233 = vmatprep.mubr.f32.mxu0 0.0
        %1234 = vmatmul.mubr.f32.gmra.mrb[0].mxu0 %v936
        %v1235 = vpop.f32.mrb[0].mxu0
        %v1236 = vadd.f32 0.0, %v1235
        %v1237 = vpop.f32.mrb[0].mxu0
        %v1238 = vadd.f32 0.0, %v1237
        %1239 = vmatprep.mubr.f32.mxu0 0.0
        %1240 = vmatmul.mubr.f32.gmra.mrb[0].mxu0 %v939
        %v1241 = vpop.f32.mrb[0].mxu0
        %v1242 = vadd.f32 0.0, %v1241
        %v1243 = vpop.f32.mrb[0].mxu0
        %v1244 = vadd.f32 0.0, %v1243
        %1245 = vdwg.mxu0
        %1246 = vmatprep.subr.mxu0 0.0
        %1247 = vmatpush1.xpose.msra.mxu0 %v1038
        %1248 = vmatprep.subr.mxu0 0.0
        %1249 = vmatpush1.xpose.msra.mxu0 %v1041
        %1250 = vmatprep.subr.mxu0 0.0
        %1251 = vmatpush1.xpose.msra.mxu0 %v1044
        %1252 = vmatprep.subr.mxu0 0.0
        %1253 = vmatpush1.xpose.msra.mxu0 %v1047
        %1254 = vmatprep.subr.mxu0 0.0
        %1255 = vmatpush1.xpose.msra.mxu0 %v1050
        %1256 = vmatprep.subr.mxu0 0.0
        %1257 = vmatpush1.xpose.msra.mxu0 %v1053
        %1258 = vmatprep.subr.mxu0 0.0
        %1259 = vmatpush1.xpose.msra.mxu0 %v1056
        %1260 = vmatprep.subr.mxu0 0.0
        %1261 = vmatpush1.xpose.msra.mxu0 %v1059
        %1262 = vmatprep.subr.mxu0 0.0
        %1263 = vmatpush1.xpose.msra.mxu0 %v1062
        %1264 = vmatprep.subr.mxu0 0.0
        %1265 = vmatpush1.xpose.msra.mxu0 %v1065
        %1266 = vmatprep.subr.mxu0 0.0
        %1267 = vmatpush1.xpose.msra.mxu0 %v1068
        %1268 = vmatprep.subr.mxu0 0.0
        %1269 = vmatpush1.xpose.msra.mxu0 %v1071
        %1270 = vmatprep.subr.mxu0 0.0
        %1271 = vmatpush1.xpose.msra.mxu0 %v1074
        %1272 = vmatprep.subr.mxu0 0.0
        %1273 = vmatpush1.xpose.msra.mxu0 %v1077
        %1274 = vmatprep.subr.mxu0 0.0
        %1275 = vmatpush1.xpose.msra.mxu0 %v1080
        %1276 = vmatprep.subr.mxu0 0.0
        %1277 = vmatpush1.xpose.msra.mxu0 %v1083
        %1278 = vmatprep.subr.mxu0 0.0
        %1279 = vmatpush1.xpose.msra.mxu0 0.0
        %1280 = vmatprep.subr.mxu0 0.0
        %1281 = vmatpush1.xpose.msra.mxu0 0.0
        %1282 = vmatprep.subr.mxu0 0.0
        %1283 = vmatpush1.xpose.msra.mxu0 0.0
        %1284 = vmatprep.subr.mxu0 0.0
        %1285 = vmatpush1.xpose.msra.mxu0 0.0
        %1286 = vmatprep.subr.mxu0 0.0
        %1287 = vmatpush1.xpose.msra.mxu0 0.0
        %1288 = vmatprep.subr.mxu0 0.0
        %1289 = vmatpush1.xpose.msra.mxu0 0.0
        %1290 = vmatprep.subr.mxu0 0.0
        %1291 = vmatpush1.xpose.msra.mxu0 0.0
        %1292 = vmatprep.subr.mxu0 0.0
        %1293 = vmatpush1.xpose.msra.mxu0 0.0
        %1294 = vmatprep.subr.mxu0 0.0
        %1295 = vmatpush1.xpose.msra.mxu0 0.0
        %1296 = vmatprep.subr.mxu0 0.0
        %1297 = vmatpush1.xpose.msra.mxu0 0.0
        %1298 = vmatprep.subr.mxu0 0.0
        %1299 = vmatpush1.xpose.msra.mxu0 0.0
        %1300 = vmatprep.subr.mxu0 0.0
        %1301 = vmatpush1.xpose.msra.mxu0 0.0
        %1302 = vmatprep.subr.mxu0 0.0
        %1303 = vmatpush1.xpose.msra.mxu0 0.0
        %1304 = vmatprep.subr.mxu0 0.0
        %1305 = vmatpush1.xpose.msra.mxu0 0.0
        %1306 = vmatprep.subr.mxu0 0.0
        %1307 = vmatpush1.xpose.msra.mxu0 0.0
        %1308 = vmatprep.subr.mxu0 0.0
        %1309 = vmatpush1.xpose.msra.mxu0 0.0
        %1310 = vmatprep.mubr.f32.mxu0 0.0
        %1311 = vmatmul.mubr.f32.gmra.mrb[0].mxu0 %v894
        %v1312 = vpop.f32.mrb[0].mxu0
        %v1313 = vadd.f32 0.0, %v1312
        %v1314 = vpop.f32.mrb[0].mxu0
        %1315 = vmatprep.mubr.f32.mxu0 0.0
        %1316 = vmatmul.mubr.f32.gmra.mrb[0].mxu0 %v897
        %v1317 = vpop.f32.mrb[0].mxu0
        %v1318 = vadd.f32 0.0, %v1317
        %v1319 = vpop.f32.mrb[0].mxu0
        %1320 = vmatprep.mubr.f32.mxu0 0.0
        %1321 = vmatmul.mubr.f32.gmra.mrb[0].mxu0 %v900
        %v1322 = vpop.f32.mrb[0].mxu0
        %v1323 = vadd.f32 0.0, %v1322
        %v1324 = vpop.f32.mrb[0].mxu0
        %1325 = vmatprep.mubr.f32.mxu0 0.0
        %1326 = vmatmul.mubr.f32.gmra.mrb[0].mxu0 %v903
        %v1327 = vpop.f32.mrb[0].mxu0
        %v1328 = vadd.f32 0.0, %v1327
        %v1329 = vpop.f32.mrb[0].mxu0
        %1330 = vmatprep.mubr.f32.mxu0 0.0
        %1331 = vmatmul.mubr.f32.gmra.mrb[0].mxu0 %v906
        %v1332 = vpop.f32.mrb[0].mxu0
        %v1333 = vadd.f32 0.0, %v1332
        %v1334 = vpop.f32.mrb[0].mxu0
        %1335 = vmatprep.mubr.f32.mxu0 0.0
        %1336 = vmatmul.mubr.f32.gmra.mrb[0].mxu0 %v909
        %v1337 = vpop.f32.mrb[0].mxu0
        %v1338 = vadd.f32 0.0, %v1337
        %v1339 = vpop.f32.mrb[0].mxu0
        %1340 = vmatprep.mubr.f32.mxu0 0.0
        %1341 = vmatmul.mubr.f32.gmra.mrb[0].mxu0 %v912
        %v1342 = vpop.f32.mrb[0].mxu0
        %v1343 = vadd.f32 0.0, %v1342
        %v1344 = vpop.f32.mrb[0].mxu0
        %1345 = vmatprep.mubr.f32.mxu0 0.0
        %1346 = vmatmul.mubr.f32.gmra.mrb[0].mxu0 %v915
        %v1347 = vpop.f32.mrb[0].mxu0
        %v1348 = vadd.f32 0.0, %v1347
        %v1349 = vpop.f32.mrb[0].mxu0
        %1350 = vmatprep.mubr.f32.mxu0 0.0
        %1351 = vmatmul.mubr.f32.gmra.mrb[0].mxu0 %v918
        %v1352 = vpop.f32.mrb[0].mxu0
        %v1353 = vadd.f32 0.0, %v1352
        %v1354 = vpop.f32.mrb[0].mxu0
        %1355 = vmatprep.mubr.f32.mxu0 0.0
        %1356 = vmatmul.mubr.f32.gmra.mrb[0].mxu0 %v921
        %v1357 = vpop.f32.mrb[0].mxu0
        %v1358 = vadd.f32 0.0, %v1357
        %v1359 = vpop.f32.mrb[0].mxu0
        %1360 = vmatprep.mubr.f32.mxu0 0.0
        %1361 = vmatmul.mubr.f32.gmra.mrb[0].mxu0 %v924
        %v1362 = vpop.f32.mrb[0].mxu0
        %v1363 = vadd.f32 0.0, %v1362
        %v1364 = vpop.f32.mrb[0].mxu0
        %1365 = vmatprep.mubr.f32.mxu0 0.0
        %1366 = vmatmul.mubr.f32.gmra.mrb[0].mxu0 %v927
        %v1367 = vpop.f32.mrb[0].mxu0
        %v1368 = vadd.f32 0.0, %v1367
        %v1369 = vpop.f32.mrb[0].mxu0
        %1370 = vmatprep.mubr.f32.mxu0 0.0
        %1371 = vmatmul.mubr.f32.gmra.mrb[0].mxu0 %v930
        %v1372 = vpop.f32.mrb[0].mxu0
        %v1373 = vadd.f32 0.0, %v1372
        %v1374 = vpop.f32.mrb[0].mxu0
        %1375 = vmatprep.mubr.f32.mxu0 0.0
        %1376 = vmatmul.mubr.f32.gmra.mrb[0].mxu0 %v933
        %v1377 = vpop.f32.mrb[0].mxu0
        %v1378 = vadd.f32 0.0, %v1377
        %v1379 = vpop.f32.mrb[0].mxu0
        %1380 = vmatprep.mubr.f32.mxu0 0.0
        %1381 = vmatmul.mubr.f32.gmra.mrb[0].mxu0 %v936
        %v1382 = vpop.f32.mrb[0].mxu0
        %v1383 = vadd.f32 0.0, %v1382
        %v1384 = vpop.f32.mrb[0].mxu0
        %1385 = vmatprep.mubr.f32.mxu0 0.0
        %1386 = vmatmul.mubr.f32.gmra.mrb[0].mxu0 %v939
        %v1387 = vpop.f32.mrb[0].mxu0
        %v1388 = vadd.f32 0.0, %v1387
        %v1389 = vpop.f32.mrb[0].mxu0
        %1390 = vdwg.mxu0
        %v1391 = vxor.u32 %v1152, 2147483648
        %v1392 = vxor.u32 %v1154, 2147483648
        %v1393 = vxor.u32 %v1313, 2147483648
        %v1394 = vxor.u32 %v1158, 2147483648
        %v1395 = vxor.u32 %v1160, 2147483648
        %v1396 = vxor.u32 %v1318, 2147483648
        %v1397 = vxor.u32 %v1164, 2147483648
        %v1398 = vxor.u32 %v1166, 2147483648
        %v1399 = vxor.u32 %v1323, 2147483648
        %v1400 = vxor.u32 %v1170, 2147483648
        %v1401 = vxor.u32 %v1172, 2147483648
        %v1402 = vxor.u32 %v1328, 2147483648
        %v1403 = vxor.u32 %v1176, 2147483648
        %v1404 = vxor.u32 %v1178, 2147483648
        %v1405 = vxor.u32 %v1333, 2147483648
        %v1406 = vxor.u32 %v1182, 2147483648
        %v1407 = vxor.u32 %v1184, 2147483648
        %v1408 = vxor.u32 %v1338, 2147483648
        %v1409 = vxor.u32 %v1188, 2147483648
        %v1410 = vxor.u32 %v1190, 2147483648
        %v1411 = vxor.u32 %v1343, 2147483648
        %v1412 = vxor.u32 %v1194, 2147483648
        %v1413 = vxor.u32 %v1196, 2147483648
        %v1414 = vxor.u32 %v1348, 2147483648
        %v1415 = vxor.u32 %v1200, 2147483648
        %v1416 = vxor.u32 %v1202, 2147483648
        %v1417 = vxor.u32 %v1353, 2147483648
        %v1418 = vxor.u32 %v1206, 2147483648
        %v1419 = vxor.u32 %v1208, 2147483648
        %v1420 = vxor.u32 %v1358, 2147483648
        %v1421 = vxor.u32 %v1212, 2147483648
        %v1422 = vxor.u32 %v1214, 2147483648
        %v1423 = vxor.u32 %v1363, 2147483648
        %v1424 = vxor.u32 %v1218, 2147483648
        %v1425 = vxor.u32 %v1220, 2147483648
        %v1426 = vxor.u32 %v1368, 2147483648
        %v1427 = vxor.u32 %v1224, 2147483648
        %v1428 = vxor.u32 %v1226, 2147483648
        %v1429 = vxor.u32 %v1373, 2147483648
        %v1430 = vxor.u32 %v1230, 2147483648
        %v1431 = vxor.u32 %v1232, 2147483648
        %v1432 = vxor.u32 %v1378, 2147483648
        %v1433 = vxor.u32 %v1236, 2147483648
        %v1434 = vxor.u32 %v1238, 2147483648
        %v1435 = vxor.u32 %v1383, 2147483648
        %v1436 = vxor.u32 %v1242, 2147483648
        %v1437 = vxor.u32 %v1244, 2147483648
        %v1438 = vxor.u32 %v1388, 2147483648
        %v1439 = vmul.f32 %v1391, 1.442695
        %v1440 = vpow.pop %v1439
        %v1441 = vmul.f32 %v1392, 1.442695
        %v1442 = vpow.pop %v1441
        %v1443 = vmul.f32 %v1393, 1.442695
        %v1444 = vpow.pop %v1443
        %v1445 = vmul.f32 %v1394, 1.442695
        %v1446 = vpow.pop %v1445
        %v1447 = vmul.f32 %v1395, 1.442695
        %v1448 = vpow.pop %v1447
        %v1449 = vmul.f32 %v1396, 1.442695
        %v1450 = vpow.pop %v1449
        %v1451 = vmul.f32 %v1397, 1.442695
        %v1452 = vpow.pop %v1451
        %v1453 = vmul.f32 %v1398, 1.442695
        %v1454 = vpow.pop %v1453
        %v1455 = vmul.f32 %v1399, 1.442695
        %v1456 = vpow.pop %v1455
        %v1457 = vmul.f32 %v1400, 1.442695
        %v1458 = vpow.pop %v1457
        %v1459 = vmul.f32 %v1401, 1.442695
        %v1460 = vpow.pop %v1459
        %v1461 = vmul.f32 %v1402, 1.442695
        %v1462 = vpow.pop %v1461
        %v1463 = vmul.f32 %v1403, 1.442695
        %v1464 = vpow.pop %v1463
        %v1465 = vmul.f32 %v1404, 1.442695
        %v1466 = vpow.pop %v1465
        %v1467 = vmul.f32 %v1405, 1.442695
        %v1468 = vpow.pop %v1467
        %v1469 = vmul.f32 %v1406, 1.442695
        %v1470 = vpow.pop %v1469
        %v1471 = vmul.f32 %v1407, 1.442695
        %v1472 = vpow.pop %v1471
        %v1473 = vmul.f32 %v1408, 1.442695
        %v1474 = vpow.pop %v1473
        %v1475 = vmul.f32 %v1409, 1.442695
        %v1476 = vpow.pop %v1475
        %v1477 = vmul.f32 %v1410, 1.442695
        %v1478 = vpow.pop %v1477
        %v1479 = vmul.f32 %v1411, 1.442695
        %v1480 = vpow.pop %v1479
        %v1481 = vmul.f32 %v1412, 1.442695
        %v1482 = vpow.pop %v1481
        %v1483 = vmul.f32 %v1413, 1.442695
        %v1484 = vpow.pop %v1483
        %v1485 = vmul.f32 %v1414, 1.442695
        %v1486 = vpow.pop %v1485
        %v1487 = vmul.f32 %v1415, 1.442695
        %v1488 = vpow.pop %v1487
        %v1489 = vmul.f32 %v1416, 1.442695
        %v1490 = vpow.pop %v1489
        %v1491 = vmul.f32 %v1417, 1.442695
        %v1492 = vpow.pop %v1491
        %v1493 = vmul.f32 %v1418, 1.442695
        %v1494 = vpow.pop %v1493
        %v1495 = vmul.f32 %v1419, 1.442695
        %v1496 = vpow.pop %v1495
        %v1497 = vmul.f32 %v1420, 1.442695
        %v1498 = vpow.pop %v1497
        %v1499 = vmul.f32 %v1421, 1.442695
        %v1500 = vpow.pop %v1499
        %v1501 = vmul.f32 %v1422, 1.442695
        %v1502 = vpow.pop %v1501
        %v1503 = vmul.f32 %v1423, 1.442695
        %v1504 = vpow.pop %v1503
        %v1505 = vmul.f32 %v1424, 1.442695
        %v1506 = vpow.pop %v1505
        %v1507 = vmul.f32 %v1425, 1.442695
        %v1508 = vpow.pop %v1507
        %v1509 = vmul.f32 %v1426, 1.442695
        %v1510 = vpow.pop %v1509
        %v1511 = vmul.f32 %v1427, 1.442695
        %v1512 = vpow.pop %v1511
        %v1513 = vmul.f32 %v1428, 1.442695
        %v1514 = vpow.pop %v1513
        %v1515 = vmul.f32 %v1429, 1.442695
        %v1516 = vpow.pop %v1515
        %v1517 = vmul.f32 %v1430, 1.442695
        %v1518 = vpow.pop %v1517
        %v1519 = vmul.f32 %v1431, 1.442695
        %v1520 = vpow.pop %v1519
        %v1521 = vmul.f32 %v1432, 1.442695
        %v1522 = vpow.pop %v1521
        %v1523 = vmul.f32 %v1433, 1.442695
        %v1524 = vpow.pop %v1523
        %v1525 = vmul.f32 %v1434, 1.442695
        %v1526 = vpow.pop %v1525
        %v1527 = vmul.f32 %v1435, 1.442695
        %v1528 = vpow.pop %v1527
        %v1529 = vmul.f32 %v1436, 1.442695
        %v1530 = vpow.pop %v1529
        %v1531 = vmul.f32 %v1437, 1.442695
        %v1532 = vpow.pop %v1531
        %v1533 = vmul.f32 %v1438, 1.442695
        %v1534 = vpow.pop %v1533
        %v1535 = vadd.f32 %v1440, 1.0
        %v1536 = vadd.f32 %v1442, 1.0
        %v1537 = vadd.f32 %v1444, 1.0
        %v1538 = vadd.f32 %v1446, 1.0
        %v1539 = vadd.f32 %v1448, 1.0
        %v1540 = vadd.f32 %v1450, 1.0
        %v1541 = vadd.f32 %v1452, 1.0
        %v1542 = vadd.f32 %v1454, 1.0
        %v1543 = vadd.f32 %v1456, 1.0
        %v1544 = vadd.f32 %v1458, 1.0
        %v1545 = vadd.f32 %v1460, 1.0
        %v1546 = vadd.f32 %v1462, 1.0
        %v1547 = vadd.f32 %v1464, 1.0
        %v1548 = vadd.f32 %v1466, 1.0
        %v1549 = vadd.f32 %v1468, 1.0
        %v1550 = vadd.f32 %v1470, 1.0
        %v1551 = vadd.f32 %v1472, 1.0
        %v1552 = vadd.f32 %v1474, 1.0
        %v1553 = vadd.f32 %v1476, 1.0
        %v1554 = vadd.f32 %v1478, 1.0
        %v1555 = vadd.f32 %v1480, 1.0
        %v1556 = vadd.f32 %v1482, 1.0
        %v1557 = vadd.f32 %v1484, 1.0
        %v1558 = vadd.f32 %v1486, 1.0
        %v1559 = vadd.f32 %v1488, 1.0
        %v1560 = vadd.f32 %v1490, 1.0
        %v1561 = vadd.f32 %v1492, 1.0
        %v1562 = vadd.f32 %v1494, 1.0
        %v1563 = vadd.f32 %v1496, 1.0
        %v1564 = vadd.f32 %v1498, 1.0
        %v1565 = vadd.f32 %v1500, 1.0
        %v1566 = vadd.f32 %v1502, 1.0
        %v1567 = vadd.f32 %v1504, 1.0
        %v1568 = vadd.f32 %v1506, 1.0
        %v1569 = vadd.f32 %v1508, 1.0
        %v1570 = vadd.f32 %v1510, 1.0
        %v1571 = vadd.f32 %v1512, 1.0
        %v1572 = vadd.f32 %v1514, 1.0
        %v1573 = vadd.f32 %v1516, 1.0
        %v1574 = vadd.f32 %v1518, 1.0
        %v1575 = vadd.f32 %v1520, 1.0
        %v1576 = vadd.f32 %v1522, 1.0
        %v1577 = vadd.f32 %v1524, 1.0
        %v1578 = vadd.f32 %v1526, 1.0
        %v1579 = vadd.f32 %v1528, 1.0
        %v1580 = vadd.f32 %v1530, 1.0
        %v1581 = vadd.f32 %v1532, 1.0
        %v1582 = vadd.f32 %v1534, 1.0
        %v1583 = vrcp.pop %v1535
        %v1584 = vmul.f32 1.0, %v1583
        %v1585 = vrcp.pop %v1536
        %v1586 = vmul.f32 1.0, %v1585
        %v1587 = vrcp.pop %v1537
        %v1588 = vmul.f32 1.0, %v1587
        %v1589 = vrcp.pop %v1538
        %v1590 = vmul.f32 1.0, %v1589
        %v1591 = vrcp.pop %v1539
        %v1592 = vmul.f32 1.0, %v1591
        %v1593 = vrcp.pop %v1540
        %v1594 = vmul.f32 1.0, %v1593
        %v1595 = vrcp.pop %v1541
        %v1596 = vmul.f32 1.0, %v1595
        %v1597 = vrcp.pop %v1542
        %v1598 = vmul.f32 1.0, %v1597
        %v1599 = vrcp.pop %v1543
        %v1600 = vmul.f32 1.0, %v1599
        %v1601 = vrcp.pop %v1544
        %v1602 = vmul.f32 1.0, %v1601
        %v1603 = vrcp.pop %v1545
        %v1604 = vmul.f32 1.0, %v1603
        %v1605 = vrcp.pop %v1546
        %v1606 = vmul.f32 1.0, %v1605
        %v1607 = vrcp.pop %v1547
        %v1608 = vmul.f32 1.0, %v1607
        %v1609 = vrcp.pop %v1548
        %v1610 = vmul.f32 1.0, %v1609
        %v1611 = vrcp.pop %v1549
        %v1612 = vmul.f32 1.0, %v1611
        %v1613 = vrcp.pop %v1550
        %v1614 = vmul.f32 1.0, %v1613
        %v1615 = vrcp.pop %v1551
        %v1616 = vmul.f32 1.0, %v1615
        %v1617 = vrcp.pop %v1552
        %v1618 = vmul.f32 1.0, %v1617
        %v1619 = vrcp.pop %v1553
        %v1620 = vmul.f32 1.0, %v1619
        %v1621 = vrcp.pop %v1554
        %v1622 = vmul.f32 1.0, %v1621
        %v1623 = vrcp.pop %v1555
        %v1624 = vmul.f32 1.0, %v1623
        %v1625 = vrcp.pop %v1556
        %v1626 = vmul.f32 1.0, %v1625
        %v1627 = vrcp.pop %v1557
        %v1628 = vmul.f32 1.0, %v1627
        %v1629 = vrcp.pop %v1558
        %v1630 = vmul.f32 1.0, %v1629
        %v1631 = vrcp.pop %v1559
        %v1632 = vmul.f32 1.0, %v1631
        %v1633 = vrcp.pop %v1560
        %v1634 = vmul.f32 1.0, %v1633
        %v1635 = vrcp.pop %v1561
        %v1636 = vmul.f32 1.0, %v1635
        %v1637 = vrcp.pop %v1562
        %v1638 = vmul.f32 1.0, %v1637
        %v1639 = vrcp.pop %v1563
        %v1640 = vmul.f32 1.0, %v1639
        %v1641 = vrcp.pop %v1564
        %v1642 = vmul.f32 1.0, %v1641
        %v1643 = vrcp.pop %v1565
        %v1644 = vmul.f32 1.0, %v1643
        %v1645 = vrcp.pop %v1566
        %v1646 = vmul.f32 1.0, %v1645
        %v1647 = vrcp.pop %v1567
        %v1648 = vmul.f32 1.0, %v1647
        %v1649 = vrcp.pop %v1568
        %v1650 = vmul.f32 1.0, %v1649
        %v1651 = vrcp.pop %v1569
        %v1652 = vmul.f32 1.0, %v1651
        %v1653 = vrcp.pop %v1570
        %v1654 = vmul.f32 1.0, %v1653
        %v1655 = vrcp.pop %v1571
        %v1656 = vmul.f32 1.0, %v1655
        %v1657 = vrcp.pop %v1572
        %v1658 = vmul.f32 1.0, %v1657
        %v1659 = vrcp.pop %v1573
        %v1660 = vmul.f32 1.0, %v1659
        %v1661 = vrcp.pop %v1574
        %v1662 = vmul.f32 1.0, %v1661
        %v1663 = vrcp.pop %v1575
        %v1664 = vmul.f32 1.0, %v1663
        %v1665 = vrcp.pop %v1576
        %v1666 = vmul.f32 1.0, %v1665
        %v1667 = vrcp.pop %v1577
        %v1668 = vmul.f32 1.0, %v1667
        %v1669 = vrcp.pop %v1578
        %v1670 = vmul.f32 1.0, %v1669
        %v1671 = vrcp.pop %v1579
        %v1672 = vmul.f32 1.0, %v1671
        %v1673 = vrcp.pop %v1580
        %v1674 = vmul.f32 1.0, %v1673
        %v1675 = vrcp.pop %v1581
        %v1676 = vmul.f32 1.0, %v1675
        %v1677 = vrcp.pop %v1582
        %v1678 = vmul.f32 1.0, %v1677
        %v1679 = vsub.f32 %v353, %v1584
        %v1680 = vsub.f32 %v354, %v1586
        %v1681 = vsub.f32 %v355, %v1588
        %v1682 = vsub.f32 %v356, %v1590
        %v1683 = vsub.f32 %v357, %v1592
        %v1684 = vsub.f32 %v358, %v1594
        %v1685 = vsub.f32 %v359, %v1596
        %v1686 = vsub.f32 %v360, %v1598
        %v1687 = vsub.f32 %v361, %v1600
        %v1688 = vsub.f32 %v362, %v1602
        %v1689 = vsub.f32 %v363, %v1604
        %v1690 = vsub.f32 %v364, %v1606
        %v1691 = vsub.f32 %v365, %v1608
        %v1692 = vsub.f32 %v366, %v1610
        %v1693 = vsub.f32 %v367, %v1612
        %v1694 = vsub.f32 %v368, %v1614
        %v1695 = vsub.f32 %v369, %v1616
        %v1696 = vsub.f32 %v370, %v1618
        %v1697 = vsub.f32 %v371, %v1620
        %v1698 = vsub.f32 %v372, %v1622
        %v1699 = vsub.f32 %v373, %v1624
        %v1700 = vsub.f32 %v374, %v1626
        %v1701 = vsub.f32 %v375, %v1628
        %v1702 = vsub.f32 %v376, %v1630
        %v1703 = vsub.f32 %v377, %v1632
        %v1704 = vsub.f32 %v378, %v1634
        %v1705 = vsub.f32 %v379, %v1636
        %v1706 = vsub.f32 %v380, %v1638
        %v1707 = vsub.f32 %v381, %v1640
        %v1708 = vsub.f32 %v382, %v1642
        %v1709 = vsub.f32 %v383, %v1644
        %v1710 = vsub.f32 %v384, %v1646
        %v1711 = vsub.f32 %v385, %v1648
        %v1712 = vsub.f32 %v386, %v1650
        %v1713 = vsub.f32 %v387, %v1652
        %v1714 = vsub.f32 %v388, %v1654
        %v1715 = vsub.f32 %v389, %v1656
        %v1716 = vsub.f32 %v390, %v1658
        %v1717 = vsub.f32 %v391, %v1660
        %v1718 = vsub.f32 %v392, %v1662
        %v1719 = vsub.f32 %v393, %v1664
        %v1720 = vsub.f32 %v394, %v1666
        %v1721 = vsub.f32 %v395, %v1668
        %v1722 = vsub.f32 %v396, %v1670
        %v1723 = vsub.f32 %v397, %v1672
        %v1724 = vsub.f32 %v398, %v1674
        %v1725 = vsub.f32 %v399, %v1676
        %v1726 = vsub.f32 %v400, %v1678
        %v1727 = vmul.f32 %v1679, %v1679
        %v1728 = vmul.f32 %v1680, %v1680
        %v1729 = vmul.f32 %v1681, %v1681
        %v1730 = vmul.f32 %v1682, %v1682
        %v1731 = vmul.f32 %v1683, %v1683
        %v1732 = vmul.f32 %v1684, %v1684
        %v1733 = vmul.f32 %v1685, %v1685
        %v1734 = vmul.f32 %v1686, %v1686
        %v1735 = vmul.f32 %v1687, %v1687
        %v1736 = vmul.f32 %v1688, %v1688
        %v1737 = vmul.f32 %v1689, %v1689
        %v1738 = vmul.f32 %v1690, %v1690
        %v1739 = vmul.f32 %v1691, %v1691
        %v1740 = vmul.f32 %v1692, %v1692
        %v1741 = vmul.f32 %v1693, %v1693
        %v1742 = vmul.f32 %v1694, %v1694
        %v1743 = vmul.f32 %v1695, %v1695
        %v1744 = vmul.f32 %v1696, %v1696
        %v1745 = vmul.f32 %v1697, %v1697
        %v1746 = vmul.f32 %v1698, %v1698
        %v1747 = vmul.f32 %v1699, %v1699
        %v1748 = vmul.f32 %v1700, %v1700
        %v1749 = vmul.f32 %v1701, %v1701
        %v1750 = vmul.f32 %v1702, %v1702
        %v1751 = vmul.f32 %v1703, %v1703
        %v1752 = vmul.f32 %v1704, %v1704
        %v1753 = vmul.f32 %v1705, %v1705
        %v1754 = vmul.f32 %v1706, %v1706
        %v1755 = vmul.f32 %v1707, %v1707
        %v1756 = vmul.f32 %v1708, %v1708
        %v1757 = vmul.f32 %v1709, %v1709
        %v1758 = vmul.f32 %v1710, %v1710
        %v1759 = vmul.f32 %v1711, %v1711
        %v1760 = vmul.f32 %v1712, %v1712
        %v1761 = vmul.f32 %v1713, %v1713
        %v1762 = vmul.f32 %v1714, %v1714
        %v1763 = vmul.f32 %v1715, %v1715
        %v1764 = vmul.f32 %v1716, %v1716
        %v1765 = vmul.f32 %v1717, %v1717
        %v1766 = vmul.f32 %v1718, %v1718
        %v1767 = vmul.f32 %v1719, %v1719
        %v1768 = vmul.f32 %v1720, %v1720
        %v1769 = vmul.f32 %v1721, %v1721
        %v1770 = vmul.f32 %v1722, %v1722
        %v1771 = vmul.f32 %v1723, %v1723
        %v1772 = vmul.f32 %v1724, %v1724
        %v1773 = vmul.f32 %v1725, %v1725
        %v1774 = vmul.f32 %v1726, %v1726
        %v1775 = vadd.f32 %v1727, %v1728
        %v1776 = vadd.f32 %v1775, %v1729
        %v1777 = vadd.f32 %v1776, %v1730
        %v1778 = vadd.f32 %v1777, %v1731
        %v1779 = vadd.f32 %v1778, %v1732
        %v1780 = vadd.f32 %v1779, %v1733
        %v1781 = vadd.f32 %v1780, %v1734
        %v1782 = vadd.f32 %v1781, %v1735
        %v1783 = vadd.f32 %v1782, %v1736
        %v1784 = vadd.f32 %v1783, %v1737
        %v1785 = vadd.f32 %v1784, %v1738
        %v1786 = vadd.f32 %v1785, %v1739
        %v1787 = vadd.f32 %v1786, %v1740
        %v1788 = vadd.f32 %v1787, %v1741
        %v1789 = vadd.f32 %v1788, %v1742
        %v1790 = vadd.f32 %v1789, %v1743
        %v1791 = vadd.f32 %v1790, %v1744
        %v1792 = vadd.f32 %v1791, %v1745
        %v1793 = vadd.f32 %v1792, %v1746
        %v1794 = vadd.f32 %v1793, %v1747
        %v1795 = vadd.f32 %v1794, %v1748
        %v1796 = vadd.f32 %v1795, %v1749
        %v1797 = vadd.f32 %v1796, %v1750
        %v1798 = vadd.f32 %v1797, %v1751
        %v1799 = vadd.f32 %v1798, %v1752
        %v1800 = vadd.f32 %v1799, %v1753
        %v1801 = vadd.f32 %v1800, %v1754
        %v1802 = vadd.f32 %v1801, %v1755
        %v1803 = vadd.f32 %v1802, %v1756
        %v1804 = vadd.f32 %v1803, %v1757
        %v1805 = vadd.f32 %v1804, %v1758
        %v1806 = vadd.f32 %v1805, %v1759
        %v1807 = vadd.f32 %v1806, %v1760
        %v1808 = vadd.f32 %v1807, %v1761
        %v1809 = vadd.f32 %v1808, %v1762
        %v1810 = vadd.f32 %v1809, %v1763
        %v1811 = vadd.f32 %v1810, %v1764
        %v1812 = vadd.f32 %v1811, %v1765
        %v1813 = vadd.f32 %v1812, %v1766
        %v1814 = vadd.f32 %v1813, %v1767
        %v1815 = vadd.f32 %v1814, %v1768
        %v1816 = vadd.f32 %v1815, %v1769
        %v1817 = vadd.f32 %v1816, %v1770
        %v1818 = vadd.f32 %v1817, %v1771
        %v1819 = vadd.f32 %v1818, %v1772
        %v1820 = vadd.f32 %v1819, %v1773
        %v1821 = vadd.f32 %v1820, %v1774
        %1822 = vadd.xlane.f32.xlu0 %v1821
        %v1823 = vpop.xlane.xlu0 %1822
        %v1824 = vrot.slane %v1823, 4
        %v1825 = vadd.f32 %v1823, %v1824
        %v1826 = vrot.slane %v1825, 2
        %v1827 = vadd.f32 %v1825, %v1826
        %v1828 = vrot.slane %v1827, 1
        %v1829 = vadd.f32 %v1827, %v1828
        %s1830 = vtos %v1829
        %v1831 = vlaneseq
        %v1832 = vshrl.u32 %v1831, 7
        %vm1833 = vcmp.eq.s32.totalorder %v1832, 0
        %v1834 = vstv %s827
        %v1835 = vsel %vm1833, %v1834, 0.0
        %v1836 = vadd.f32 %v1835, 0.0
        %vm1837 = vcmp.eq.s32.totalorder %v1832, 1
        %v1838 = vstv %s1830
        %v1839 = vsel %vm1837, %v1838, 0.0
        %v1840 = vadd.f32 %v1836, %v1839
        %1841 = vst [vmem:[%s349] sm:$0xff] %v1840
        %s1842 = sand.u32 %s154, 1
        %s1843 = scalar_lea.sflag [#allocation4], %s1842
        %s1844 = sand.u32 %s154, 1
        %s1845 = smul.addr %s1844, 8
        %s1846 = scalar_lea.vmem [#allocation11], %s1845
        // Predicated region
        $region61: #{spamics_forward.13} parent=39 // pred_check
          %p1847 = pneg %p164
        $region62: #{spamics_forward.13} parent=39 // pred_check_branch
          %1849 = sbr.rel (%p1847) target = $region64
        $region63: #{spamics_forward.13} parent=39 // pred_region
          %s1851 = ssub.s32 128, 128
          %1852 = vsyncadd %s1843, %s1851
          %s1853 = smul.addr %s26, 128
          %s1854 = scalar_lea.hbm %s5, %s1853
          %s1856 = sshll.u32 %s1846, 4
          %s1857 = int_to_ptr.vmem [resolvable:$true] %s1856
          %1859 = dma.vmem_to_hbm [thread:$0]  %s1857, 128, %s1854, %s1843
        $region64: #{spamics_forward.13} parent=39 // pred_fallthru
          _
      $region40: #{spamics_forward.13} parent=5 // pred_fallthru
        _
      %p1860 = scmp.le.s32.totalorder 2, %s21
      // Predicated region
      $region65: #{spamics_forward.13} parent=5 // pred_check
        %p1861 = pneg %p1860
      $region66: #{spamics_forward.13} parent=5 // pred_check_branch
        %1863 = sbr.rel (%p1861) target = $region68
      $region67: #{spamics_forward.13} parent=5 // pred_region
        %s1864 = ssub.s32 %s21, 2
        // Predicated region
        $region69: #{spamics_forward.13} parent=67 // pred_check
          %p1865 = pneg %p170
        $region70: #{spamics_forward.13} parent=67 // pred_check_branch
          %1867 = sbr.rel (%p1865) target = $region72
        $region71: #{spamics_forward.13} parent=67 // pred_region
          %s1868 = sand.u32 %s155, 1
          %s1869 = scalar_lea.sflag [#allocation4], %s1868
          %s1870 = sand.u32 %s155, 1
          %s1871 = smul.addr %s1870, 8
          %s1872 = scalar_lea.vmem [#allocation11], %s1871
          %1873 = dma.done %s1869, 128
        $region72: #{spamics_forward.13} parent=67 // pred_fallthru
          _
      $region68: #{spamics_forward.13} parent=5 // pred_fallthru
        _
    $region6: #{spamics_forward.13} parent=1 // loop_footer
      %s25 = sadd.s32 1, %s21
    $region7: #{spamics_forward.13} parent=1 // loop_footer_branch
      %20 = sbr.rel target = $region3
    $region8: #{spamics_forward.13} parent=1 // loop_exit
      _
    %1874 = vsyncpa [#allocation3], 1
    %s1875 = scalar_lea.sflag [#allocation3], 1
    %1876 = vsyncpa %s1875, 1
    %1877 = vsyncpa [#allocation6], 1
    %s1878 = scalar_lea.sflag [#allocation6], 1
    %1879 = vsyncpa %s1878, 1
    %1880 = vsyncpa [#allocation9], 1
    %s1881 = scalar_lea.sflag [#allocation9], 1
    %1882 = vsyncpa %s1881, 1
    %1883 = vsyncpa [#allocation4], 1
    %s1884 = scalar_lea.sflag [#allocation4], 1
    %1885 = vsyncpa %s1884, 1

// kernel: spamics_forward.15
$region0: #{spamics_forward.15}
  #allocation0 [shape = 'u32[]', space=smem, size = 0x4, offset = 0x4, fixed_abs, tag = 'smem constant byte address 0x4 - core index']
  #allocation1 [shape = 'u32[144,128]{1,0:T(1,128)}', space=vmem, size = 0x12000, scoped, tag = 'internal scratch']
  %s0 = inlined_call_operand.hbm [shape: f32[384,8], index: 0, kind: input, shape index: {}, may-alias: {0,1}]
  %s1 = inlined_call_operand.hbm [shape: f32[384,8], index: 1, kind: input, shape index: {}, may-alias: {0,1}]
  %s2 = inlined_call_operand.hbm [shape: f32[384,24], index: 2, kind: input, shape index: {}]
  %s3 = inlined_call_operand.hbm [shape: f32[384,24], index: 3, kind: input, shape index: {}]
  %s4 = inlined_call_operand.hbm [shape: f32[384,384], index: 4, kind: input, shape index: {}]
  %s5 = inlined_call_operand.hbm [shape: f32[3,8,128], index: 5, kind: output, shape index: {}]
  %s6 = sld [smem:[#allocation0]]
  $region73: #{spamics_forward.15} parent=0
    _
  %s8 = ssub.s32 1, %s6
  %s9 = scalar_select 0, %s8, %s6
  $region1: #{spamics_forward.15} parent=0
    #allocation2 [shape = 'u8[196608]{0}', space=vmem, size = 0x30000, scoped, tag = 'input window, operand 0, single buffered']
    #allocation3 [shape = 's32[2]{0}', space=sflag, size = 0x8, scoped, tag = 'scoped memory for spamics_forward.15']
    #allocation4 [shape = 's32[2]{0}', space=sflag, size = 0x8, scoped, tag = 'scoped memory for spamics_forward.15']
    #allocation5 [shape = 'u8[131072]{0}', space=vmem, size = 0x20000, scoped, tag = 'input window, operand 1']
    #allocation6 [shape = 's32[2]{0}', space=sflag, size = 0x8, scoped, tag = 'scoped memory for spamics_forward.15']
    #allocation7 [shape = 'u8[196608]{0}', space=vmem, size = 0x30000, scoped, tag = 'input window, operand 2, single buffered']
    #allocation8 [shape = 'u8[131072]{0}', space=vmem, size = 0x20000, scoped, tag = 'input window, operand 3']
    #allocation9 [shape = 's32[2]{0}', space=sflag, size = 0x8, scoped, tag = 'scoped memory for spamics_forward.15']
    #allocation10 [shape = 'u8[393216]{0}', space=vmem, size = 0x60000, scoped, tag = 'input window, operand 4']
    #allocation11 [shape = 'u8[8192]{0}', space=vmem, size = 0x2000, scoped, tag = 'output window, operand 0']
    %10 = vsyncpa [#allocation3], 0
    %11 = vsyncpa [#allocation6], 0
    %s12 = scalar_lea.sflag [#allocation6], 1
    %13 = vsyncpa %s12, 0
    %14 = vsyncpa [#allocation9], 0
    %s15 = scalar_lea.sflag [#allocation9], 1
    %16 = vsyncpa %s15, 0
    %17 = vsyncpa [#allocation4], 0
    %s18 = scalar_lea.sflag [#allocation4], 1
    %19 = vsyncpa %s18, 0
    loop: start=0, step=1, limit=5
    $region2: #{spamics_forward.15} parent=1 // loop_pre_header
      _
    $region3: #{spamics_forward.15} parent=1 // loop_header
      %s21 = sphi 0, %s25
      %p22 = scmp.ge.s32.totalorder %s21, 5
      %s29 = sphi 0, %s29
      %s31 = sphi 0, %s29
      %s32 = sphi 0, %s31
      %s46 = sphi 0, %s32
      %s52 = sphi 0, %s54
      %s55 = sphi 0, %s52
      %s56 = sphi 0, %s55
      %s72 = sphi 0, %s56
      %s76 = sphi 0, %s76
      %s78 = sphi 0, %s76
      %s79 = sphi 0, %s78
      %s93 = sphi 0, %s79
      %s99 = sphi 0, %s101
      %s102 = sphi 0, %s99
      %s103 = sphi 0, %s102
      %s119 = sphi 0, %s103
      %s125 = sphi 0, %s127
      %s128 = sphi 0, %s125
      %s129 = sphi 0, %s128
      %s145 = sphi 0, %s129
      %s151 = sphi 0, %s153
      %s154 = sphi 0, %s151
      %s155 = sphi 0, %s154
      %s171 = sphi 0, %s155
    $region4: #{spamics_forward.15} parent=1 // loop_header_branch
      %24 = sbr.rel (%p22) target = $region8
    $region5: #{spamics_forward.15} parent=1 // loop_body
      %s26 = ssub.s32 %s21, 1
      %s27 = ssub.s32 %s21, 2
      %s28 = sadd.s32 %s21, 1
      %s30 = sadd.s32 %s29, 1
      %p33 = scmp.eq.s32.totalorder %s21, 2
      %p34 = scmp.ne.s32.totalorder %s29, %s31
      %p35 = scmp.eq.s32.totalorder %s21, 0
      %p36 = por %p34, %p35
      %p37 = scmp.ne.s32.totalorder %s29, %s31
      %p38 = scmp.eq.s32.totalorder %s26, 2
      %p39 = por %p37, %p38
      %p40 = scmp.ne.s32.totalorder %s31, %s32
      %p41 = scmp.eq.s32.totalorder %s26, 0
      %p42 = por %p40, %p41
      %p43 = scmp.ne.s32.totalorder %s31, %s32
      %p44 = scmp.eq.s32.totalorder %s27, 2
      %p45 = por %p43, %p44
      %p47 = scmp.ne.s32.totalorder %s32, %s46
      %p48 = scmp.eq.s32.totalorder %s27, 0
      %p49 = por %p47, %p48
      %s50 = ssub.s32 %s21, %s28
      %p51 = scmp.eq.s32.totalorder %s50, 0
      %s53 = sadd.s32 %s52, 1
      %s54 = scalar_select %p51, %s52, %s53
      %p57 = pneg %p51
      %p58 = scmp.eq.s32.totalorder %s21, 2
      %p59 = por %p57, %p58
      %p60 = scmp.ne.s32.totalorder %s52, %s55
      %p61 = scmp.eq.s32.totalorder %s21, 0
      %p62 = por %p60, %p61
      %p63 = scmp.ne.s32.totalorder %s52, %s55
      %p64 = scmp.eq.s32.totalorder %s26, 2
      %p65 = por %p63, %p64
      %p66 = scmp.ne.s32.totalorder %s55, %s56
      %p67 = scmp.eq.s32.totalorder %s26, 0
      %p68 = por %p66, %p67
      %p69 = scmp.ne.s32.totalorder %s55, %s56
      %p70 = scmp.eq.s32.totalorder %s27, 2
      %p71 = por %p69, %p70
      %p73 = scmp.ne.s32.totalorder %s56, %s72
      %p74 = scmp.eq.s32.totalorder %s27, 0
      %p75 = por %p73, %p74
      %s77 = sadd.s32 %s76, 1
      %p80 = scmp.eq.s32.totalorder %s21, 2
      %p81 = scmp.ne.s32.totalorder %s76, %s78
      %p82 = scmp.eq.s32.totalorder %s21, 0
      %p83 = por %p81, %p82
      %p84 = scmp.ne.s32.totalorder %s76, %s78
      %p85 = scmp.eq.s32.totalorder %s26, 2
      %p86 = por %p84, %p85
      %p87 = scmp.ne.s32.totalorder %s78, %s79
      %p88 = scmp.eq.s32.totalorder %s26, 0
      %p89 = por %p87, %p88
      %p90 = scmp.ne.s32.totalorder %s78, %s79
      %p91 = scmp.eq.s32.totalorder %s27, 2
      %p92 = por %p90, %p91
      %p94 = scmp.ne.s32.totalorder %s79, %s93
      %p95 = scmp.eq.s32.totalorder %s27, 0
      %p96 = por %p94, %p95
      %s97 = ssub.s32 %s21, %s28
      %p98 = scmp.eq.s32.totalorder %s97, 0
      %s100 = sadd.s32 %s99, 1
      %s101 = scalar_select %p98, %s99, %s100
      %p104 = pneg %p98
      %p105 = scmp.eq.s32.totalorder %s21, 2
      %p106 = por %p104, %p105
      %p107 = scmp.ne.s32.totalorder %s99, %s102
      %p108 = scmp.eq.s32.totalorder %s21, 0
      %p109 = por %p107, %p108
      %p110 = scmp.ne.s32.totalorder %s99, %s102
      %p111 = scmp.eq.s32.totalorder %s26, 2
      %p112 = por %p110, %p111
      %p113 = scmp.ne.s32.totalorder %s102, %s103
      %p114 = scmp.eq.s32.totalorder %s26, 0
      %p115 = por %p113, %p114
      %p116 = scmp.ne.s32.totalorder %s102, %s103
      %p117 = scmp.eq.s32.totalorder %s27, 2
      %p118 = por %p116, %p117
      %p120 = scmp.ne.s32.totalorder %s103, %s119
      %p121 = scmp.eq.s32.totalorder %s27, 0
      %p122 = por %p120, %p121
      %s123 = ssub.s32 %s21, %s28
      %p124 = scmp.eq.s32.totalorder %s123, 0
      %s126 = sadd.s32 %s125, 1
      %s127 = scalar_select %p124, %s125, %s126
      %p130 = pneg %p124
      %p131 = scmp.eq.s32.totalorder %s21, 2
      %p132 = por %p130, %p131
      %p133 = scmp.ne.s32.totalorder %s125, %s128
      %p134 = scmp.eq.s32.totalorder %s21, 0
      %p135 = por %p133, %p134
      %p136 = scmp.ne.s32.totalorder %s125, %s128
      %p137 = scmp.eq.s32.totalorder %s26, 2
      %p138 = por %p136, %p137
      %p139 = scmp.ne.s32.totalorder %s128, %s129
      %p140 = scmp.eq.s32.totalorder %s26, 0
      %p141 = por %p139, %p140
      %p142 = scmp.ne.s32.totalorder %s128, %s129
      %p143 = scmp.eq.s32.totalorder %s27, 2
      %p144 = por %p142, %p143
      %p146 = scmp.ne.s32.totalorder %s129, %s145
      %p147 = scmp.eq.s32.totalorder %s27, 0
      %p148 = por %p146, %p147
      %s149 = ssub.s32 %s21, %s28
      %p150 = scmp.eq.s32.totalorder %s149, 0
      %s152 = sadd.s32 %s151, 1
      %s153 = scalar_select %p150, %s151, %s152
      %p156 = pneg %p150
      %p157 = scmp.eq.s32.totalorder %s21, 2
      %p158 = por %p156, %p157
      %p159 = scmp.ne.s32.totalorder %s151, %s154
      %p160 = scmp.eq.s32.totalorder %s21, 0
      %p161 = por %p159, %p160
      %p162 = scmp.ne.s32.totalorder %s151, %s154
      %p163 = scmp.eq.s32.totalorder %s26, 2
      %p164 = por %p162, %p163
      %p165 = scmp.ne.s32.totalorder %s154, %s155
      %p166 = scmp.eq.s32.totalorder %s26, 0
      %p167 = por %p165, %p166
      %p168 = scmp.ne.s32.totalorder %s154, %s155
      %p169 = scmp.eq.s32.totalorder %s27, 2
      %p170 = por %p168, %p169
      %p172 = scmp.ne.s32.totalorder %s155, %s171
      %p173 = scmp.eq.s32.totalorder %s27, 0
      %p174 = por %p172, %p173
      %p175 = scmp.le.s32.totalorder 1, %s21
      %p176 = scmp.lt.s32.totalorder %s21, 4
      %p177 = pnand %p175, %p176
      %p178 = pneg %p177
      // Predicated region
      $region9: #{spamics_forward.15} parent=5 // pred_check
        _
      $region10: #{spamics_forward.15} parent=5 // pred_check_branch
        %180 = sbr.rel (%p177) target = $region12
      $region11: #{spamics_forward.15} parent=5 // pred_region
        %s181 = ssub.s32 %s21, 1
        // Predicated region
        $region13: #{spamics_forward.15} parent=11 // pred_check
          %p182 = pneg %p42
        $region14: #{spamics_forward.15} parent=11 // pred_check_branch
          %184 = sbr.rel (%p182) target = $region16
        $region15: #{spamics_forward.15} parent=11 // pred_region
          %s186 = ssub.s32 6144, 6144
          %187 = vsyncadd [#allocation3], %s186
          %s188 = sshll.u32 [#allocation2], 4
          %s189 = int_to_ptr.vmem [resolvable:$true] %s188
          %194 = dma.hbm_to_vmem [thread:$0]  %s0, 6144, %s189, [#allocation3], 128, 128, 8
        $region16: #{spamics_forward.15} parent=11 // pred_fallthru
          _
        // Predicated region
        $region17: #{spamics_forward.15} parent=11 // pred_check
          %p195 = pneg %p89
        $region18: #{spamics_forward.15} parent=11 // pred_check_branch
          %197 = sbr.rel (%p195) target = $region20
        $region19: #{spamics_forward.15} parent=11 // pred_region
          %s199 = ssub.s32 6144, 6144
          %200 = vsyncadd [#allocation6], %s199
          %s201 = sshll.u32 [#allocation7], 4
          %s202 = int_to_ptr.vmem [resolvable:$true] %s201
          %207 = dma.hbm_to_vmem [thread:$0]  %s2, 6144, %s202, [#allocation6], 128, 128, 8
        $region20: #{spamics_forward.15} parent=11 // pred_fallthru
          _
      $region12: #{spamics_forward.15} parent=5 // pred_fallthru
        _
      %p208 = scmp.lt.s32.totalorder %s21, 3
      // Predicated region
      $region21: #{spamics_forward.15} parent=5 // pred_check
        %p209 = pneg %p208
      $region22: #{spamics_forward.15} parent=5 // pred_check_branch
        %211 = sbr.rel (%p209) target = $region24
      $region23: #{spamics_forward.15} parent=5 // pred_region
        // Predicated region
        $region25: #{spamics_forward.15} parent=23 // pred_check
          %p212 = pneg %p62
        $region26: #{spamics_forward.15} parent=23 // pred_check_branch
          %214 = sbr.rel (%p212) target = $region28
        $region27: #{spamics_forward.15} parent=23 // pred_region
          %s215 = sand.u32 %s21, 1
          %s216 = scalar_lea.sflag [#allocation6], %s215
          %s217 = sand.u32 %s52, 1
          %s218 = smul.addr %s217, 128
          %s219 = scalar_lea.vmem [#allocation5], %s218
          %s220 = smul.u32 16, %s21
          %s222 = ssub.s32 2048, 2048
          %223 = vsyncadd %s216, %s222
          %s224 = smul.addr %s220, 128
          %s225 = scalar_lea.hbm %s1, %s224
          %s226 = sshll.u32 %s219, 4
          %s227 = int_to_ptr.vmem [resolvable:$true] %s226
          %232 = dma.hbm_to_vmem [thread:$0]  %s225, 2048, %s227, %s216, 128, 128, 8
        $region28: #{spamics_forward.15} parent=23 // pred_fallthru
          _
        // Predicated region
        $region29: #{spamics_forward.15} parent=23 // pred_check
          %p233 = pneg %p109
        $region30: #{spamics_forward.15} parent=23 // pred_check_branch
          %235 = sbr.rel (%p233) target = $region32
        $region31: #{spamics_forward.15} parent=23 // pred_region
          %s236 = sand.u32 %s21, 1
          %s237 = scalar_lea.sflag [#allocation9], %s236
          %s238 = sand.u32 %s99, 1
          %s239 = smul.addr %s238, 128
          %s240 = scalar_lea.vmem [#allocation8], %s239
          %s241 = smul.u32 16, %s21
          %s243 = ssub.s32 2048, 2048
          %244 = vsyncadd %s237, %s243
          %s245 = smul.addr %s241, 128
          %s246 = scalar_lea.hbm %s3, %s245
          %s247 = sshll.u32 %s240, 4
          %s248 = int_to_ptr.vmem [resolvable:$true] %s247
          %253 = dma.hbm_to_vmem [thread:$0]  %s246, 2048, %s248, %s237, 128, 128, 8
        $region32: #{spamics_forward.15} parent=23 // pred_fallthru
          _
        // Predicated region
        $region33: #{spamics_forward.15} parent=23 // pred_check
          %p254 = pneg %p135
        $region34: #{spamics_forward.15} parent=23 // pred_check_branch
          %256 = sbr.rel (%p254) target = $region36
        $region35: #{spamics_forward.15} parent=23 // pred_region
          %s257 = sand.u32 %s21, 1
          %s258 = scalar_lea.sflag [#allocation9], %s257
          %s259 = sand.u32 %s125, 1
          %s260 = smul.addr %s259, 384
          %s261 = scalar_lea.vmem [#allocation10], %s260
          %s262 = smul.u32 16, %s21
          %s264 = ssub.s32 6144, 6144
          %265 = vsyncadd %s258, %s264
          %s266 = smul.addr %s262, 3
          %s267 = smul.addr %s266, 128
          %s268 = scalar_lea.hbm %s4, %s267
          %s269 = sshll.u32 %s261, 4
          %s270 = int_to_ptr.vmem [resolvable:$true] %s269
          %275 = dma.hbm_to_vmem [thread:$0]  %s268, 6144, %s270, %s258, 384, 384, 24
        $region36: #{spamics_forward.15} parent=23 // pred_fallthru
          _
      $region24: #{spamics_forward.15} parent=5 // pred_fallthru
        _
      %p276 = scmp.le.s32.totalorder 1, %s21
      %p277 = scmp.lt.s32.totalorder %s21, 4
      %p278 = pnand %p276, %p277
      %p279 = pneg %p278
      // Predicated region
      $region37: #{spamics_forward.15} parent=5 // pred_check
        _
      $region38: #{spamics_forward.15} parent=5 // pred_check_branch
        %281 = sbr.rel (%p278) target = $region40
      $region39: #{spamics_forward.15} parent=5 // pred_region
        %s282 = ssub.s32 %s21, 1
        // Predicated region
        $region41: #{spamics_forward.15} parent=39 // pred_check
          %p283 = pneg %p42
        $region42: #{spamics_forward.15} parent=39 // pred_check_branch
          %285 = sbr.rel (%p283) target = $region44
        $region43: #{spamics_forward.15} parent=39 // pred_region
          %286 = dma.done [#allocation3], 6144
        $region44: #{spamics_forward.15} parent=39 // pred_fallthru
          _
        %s287 = sand.u32 %s26, 1
        %s288 = scalar_lea.sflag [#allocation6], %s287
        %s289 = sand.u32 %s55, 1
        %s290 = smul.addr %s289, 128
        %s291 = scalar_lea.vmem [#allocation5], %s290
        // Predicated region
        $region45: #{spamics_forward.15} parent=39 // pred_check
          %p292 = pneg %p68
        $region46: #{spamics_forward.15} parent=39 // pred_check_branch
          %294 = sbr.rel (%p292) target = $region48
        $region47: #{spamics_forward.15} parent=39 // pred_region
          %295 = dma.done %s288, 2048
        $region48: #{spamics_forward.15} parent=39 // pred_fallthru
          _
        // Predicated region
        $region49: #{spamics_forward.15} parent=39 // pred_check
          %p296 = pneg %p89
        $region50: #{spamics_forward.15} parent=39 // pred_check_branch
          %298 = sbr.rel (%p296) target = $region52
        $region51: #{spamics_forward.15} parent=39 // pred_region
          %299 = dma.done [#allocation6], 6144
        $region52: #{spamics_forward.15} parent=39 // pred_fallthru
          _
        %s300 = sand.u32 %s26, 1
        %s301 = scalar_lea.sflag [#allocation9], %s300
        %s302 = sand.u32 %s102, 1
        %s303 = smul.addr %s302, 128
        %s304 = scalar_lea.vmem [#allocation8], %s303
        // Predicated region
        $region53: #{spamics_forward.15} parent=39 // pred_check
          %p305 = pneg %p115
        $region54: #{spamics_forward.15} parent=39 // pred_check_branch
          %307 = sbr.rel (%p305) target = $region56
        $region55: #{spamics_forward.15} parent=39 // pred_region
          %308 = dma.done %s301, 2048
        $region56: #{spamics_forward.15} parent=39 // pred_fallthru
          _
        %s309 = sand.u32 %s26, 1
        %s310 = scalar_lea.sflag [#allocation9], %s309
        %s311 = sand.u32 %s128, 1
        %s312 = smul.addr %s311, 384
        %s313 = scalar_lea.vmem [#allocation10], %s312
        // Predicated region
        $region57: #{spamics_forward.15} parent=39 // pred_check
          %p314 = pneg %p141
        $region58: #{spamics_forward.15} parent=39 // pred_check_branch
          %316 = sbr.rel (%p314) target = $region60
        $region59: #{spamics_forward.15} parent=39 // pred_region
          %317 = dma.done %s310, 6144
        $region60: #{spamics_forward.15} parent=39 // pred_fallthru
          _
        %p318 = pneg %p42
        %p319 = pneg %p39
        %s320 = sand.u32 %s26, 1
        %s321 = scalar_lea.sflag [#allocation6], %s320
        %s322 = sand.u32 %s55, 1
        %s323 = smul.addr %s322, 128
        %s324 = scalar_lea.vmem [#allocation5], %s323
        %p325 = pneg %p68
        %p326 = pneg %p65
        %p327 = pneg %p89
        %p328 = pneg %p86
        %s329 = sand.u32 %s26, 1
        %s330 = scalar_lea.sflag [#allocation9], %s329
        %s331 = sand.u32 %s102, 1
        %s332 = smul.addr %s331, 128
        %s333 = scalar_lea.vmem [#allocation8], %s332
        %p334 = pneg %p115
        %p335 = pneg %p112
        %s336 = sand.u32 %s26, 1
        %s337 = scalar_lea.sflag [#allocation9], %s336
        %s338 = sand.u32 %s128, 1
        %s339 = smul.addr %s338, 384
        %s340 = scalar_lea.vmem [#allocation10], %s339
        %p341 = pneg %p141
        %p342 = pneg %p138
        %p343 = pneg %p167
        %p344 = pneg %p164
        %s345 = sand.u32 %s154, 1
        %s346 = scalar_lea.sflag [#allocation4], %s345
        %s347 = sand.u32 %s154, 1
        %s348 = smul.addr %s347, 8
        %s349 = scalar_lea.vmem [#allocation11], %s348
        %s350 = smul.u32 16, %s26
        %s351 = smul.u32 16, %s26
        %s352 = smul.u32 16, %s26
        %v353 = vld [vmem:[%s313] sm:$0xff]
        %v354 = vld [vmem:[%s313 + $0x8] sm:$0xff]
        %v355 = vld [vmem:[%s313 + $0x10] sm:$0xff]
        %v356 = vld [vmem:[%s313 + $0x18] sm:$0xff]
        %v357 = vld [vmem:[%s313 + $0x20] sm:$0xff]
        %v358 = vld [vmem:[%s313 + $0x28] sm:$0xff]
        %v359 = vld [vmem:[%s313 + $0x30] sm:$0xff]
        %v360 = vld [vmem:[%s313 + $0x38] sm:$0xff]
        %v361 = vld [vmem:[%s313 + $0x40] sm:$0xff]
        %v362 = vld [vmem:[%s313 + $0x48] sm:$0xff]
        %v363 = vld [vmem:[%s313 + $0x50] sm:$0xff]
        %v364 = vld [vmem:[%s313 + $0x58] sm:$0xff]
        %v365 = vld [vmem:[%s313 + $0x60] sm:$0xff]
        %v366 = vld [vmem:[%s313 + $0x68] sm:$0xff]
        %v367 = vld [vmem:[%s313 + $0x70] sm:$0xff]
        %v368 = vld [vmem:[%s313 + $0x78] sm:$0xff]
        %v369 = vld [vmem:[%s313 + $0x80] sm:$0xff]
        %v370 = vld [vmem:[%s313 + $0x88] sm:$0xff]
        %v371 = vld [vmem:[%s313 + $0x90] sm:$0xff]
        %v372 = vld [vmem:[%s313 + $0x98] sm:$0xff]
        %v373 = vld [vmem:[%s313 + $0xa0] sm:$0xff]
        %v374 = vld [vmem:[%s313 + $0xa8] sm:$0xff]
        %v375 = vld [vmem:[%s313 + $0xb0] sm:$0xff]
        %v376 = vld [vmem:[%s313 + $0xb8] sm:$0xff]
        %v377 = vld [vmem:[%s313 + $0xc0] sm:$0xff]
        %v378 = vld [vmem:[%s313 + $0xc8] sm:$0xff]
        %v379 = vld [vmem:[%s313 + $0xd0] sm:$0xff]
        %v380 = vld [vmem:[%s313 + $0xd8] sm:$0xff]
        %v381 = vld [vmem:[%s313 + $0xe0] sm:$0xff]
        %v382 = vld [vmem:[%s313 + $0xe8] sm:$0xff]
        %v383 = vld [vmem:[%s313 + $0xf0] sm:$0xff]
        %v384 = vld [vmem:[%s313 + $0xf8] sm:$0xff]
        %v385 = vld [vmem:[%s313 + $0x100] sm:$0xff]
        %v386 = vld [vmem:[%s313 + $0x108] sm:$0xff]
        %v387 = vld [vmem:[%s313 + $0x110] sm:$0xff]
        %v388 = vld [vmem:[%s313 + $0x118] sm:$0xff]
        %v389 = vld [vmem:[%s313 + $0x120] sm:$0xff]
        %v390 = vld [vmem:[%s313 + $0x128] sm:$0xff]
        %v391 = vld [vmem:[%s313 + $0x130] sm:$0xff]
        %v392 = vld [vmem:[%s313 + $0x138] sm:$0xff]
        %v393 = vld [vmem:[%s313 + $0x140] sm:$0xff]
        %v394 = vld [vmem:[%s313 + $0x148] sm:$0xff]
        %v395 = vld [vmem:[%s313 + $0x150] sm:$0xff]
        %v396 = vld [vmem:[%s313 + $0x158] sm:$0xff]
        %v397 = vld [vmem:[%s313 + $0x160] sm:$0xff]
        %v398 = vld [vmem:[%s313 + $0x168] sm:$0xff]
        %v399 = vld [vmem:[%s313 + $0x170] sm:$0xff]
        %v400 = vld [vmem:[%s313 + $0x178] sm:$0xff]
        %v401 = vld [vmem:[#allocation7] sm:$0xff]
        %v402 = vld [vmem:[#allocation7 + $0x8] sm:$0xff]
        %v403 = vld [vmem:[#allocation7 + $0x10] sm:$0xff]
        %v404 = vld [vmem:[#allocation7 + $0x18] sm:$0xff]
        %v405 = vld [vmem:[#allocation7 + $0x20] sm:$0xff]
        %v406 = vld [vmem:[#allocation7 + $0x28] sm:$0xff]
        %v407 = vld [vmem:[#allocation7 + $0x30] sm:$0xff]
        %v408 = vld [vmem:[#allocation7 + $0x38] sm:$0xff]
        %v409 = vld [vmem:[#allocation7 + $0x40] sm:$0xff]
        %v410 = vld [vmem:[#allocation7 + $0x48] sm:$0xff]
        %v411 = vld [vmem:[#allocation7 + $0x50] sm:$0xff]
        %v412 = vld [vmem:[#allocation7 + $0x58] sm:$0xff]
        %v413 = vld [vmem:[#allocation7 + $0x60] sm:$0xff]
        %v414 = vld [vmem:[#allocation7 + $0x68] sm:$0xff]
        %v415 = vld [vmem:[#allocation7 + $0x70] sm:$0xff]
        %v416 = vld [vmem:[#allocation7 + $0x78] sm:$0xff]
        %v417 = vld [vmem:[#allocation7 + $0x80] sm:$0xff]
        %v418 = vld [vmem:[#allocation7 + $0x88] sm:$0xff]
        %v419 = vld [vmem:[#allocation7 + $0x90] sm:$0xff]
        %v420 = vld [vmem:[#allocation7 + $0x98] sm:$0xff]
        %v421 = vld [vmem:[#allocation7 + $0xa0] sm:$0xff]
        %v422 = vld [vmem:[#allocation7 + $0xa8] sm:$0xff]
        %v423 = vld [vmem:[#allocation7 + $0xb0] sm:$0xff]
        %v424 = vld [vmem:[#allocation7 + $0xb8] sm:$0xff]
        %v425 = vld [vmem:[#allocation7 + $0xc0] sm:$0xff]
        %v426 = vld [vmem:[#allocation7 + $0xc8] sm:$0xff]
        %v427 = vld [vmem:[#allocation7 + $0xd0] sm:$0xff]
        %v428 = vld [vmem:[#allocation7 + $0xd8] sm:$0xff]
        %v429 = vld [vmem:[#allocation7 + $0xe0] sm:$0xff]
        %v430 = vld [vmem:[#allocation7 + $0xe8] sm:$0xff]
        %v431 = vld [vmem:[#allocation7 + $0xf0] sm:$0xff]
        %v432 = vld [vmem:[#allocation7 + $0xf8] sm:$0xff]
        %v433 = vld [vmem:[#allocation7 + $0x100] sm:$0xff]
        %v434 = vld [vmem:[#allocation7 + $0x108] sm:$0xff]
        %v435 = vld [vmem:[#allocation7 + $0x110] sm:$0xff]
        %v436 = vld [vmem:[#allocation7 + $0x118] sm:$0xff]
        %v437 = vld [vmem:[#allocation7 + $0x120] sm:$0xff]
        %v438 = vld [vmem:[#allocation7 + $0x128] sm:$0xff]
        %v439 = vld [vmem:[#allocation7 + $0x130] sm:$0xff]
        %v440 = vld [vmem:[#allocation7 + $0x138] sm:$0xff]
        %v441 = vld [vmem:[#allocation7 + $0x140] sm:$0xff]
        %v442 = vld [vmem:[#allocation7 + $0x148] sm:$0xff]
        %v443 = vld [vmem:[#allocation7 + $0x150] sm:$0xff]
        %v444 = vld [vmem:[#allocation7 + $0x158] sm:$0xff]
        %v445 = vld [vmem:[#allocation7 + $0x160] sm:$0xff]
        %v446 = vld [vmem:[#allocation7 + $0x168] sm:$0xff]
        %v447 = vld [vmem:[#allocation7 + $0x170] sm:$0xff]
        %v448 = vld [vmem:[#allocation7 + $0x178] sm:$0xff]
        %449 = vmatprep.subr.mxu0 0.0
        %450 = vmatpush1.msra.mxu0 %v401
        %451 = vmatprep.subr.mxu0 0.0
        %452 = vmatpush1.msra.mxu0 %v402
        %453 = vmatprep.subr.mxu0 0.0
        %454 = vmatpush1.msra.mxu0 %v403
        %455 = vmatprep.subr.mxu0 0.0
        %456 = vmatpush1.msra.mxu0 %v404
        %457 = vmatprep.subr.mxu0 0.0
        %458 = vmatpush1.msra.mxu0 %v405
        %459 = vmatprep.subr.mxu0 0.0
        %460 = vmatpush1.msra.mxu0 %v406
        %461 = vmatprep.subr.mxu0 0.0
        %462 = vmatpush1.msra.mxu0 %v407
        %463 = vmatprep.subr.mxu0 0.0
        %464 = vmatpush1.msra.mxu0 %v408
        %465 = vmatprep.subr.mxu0 0.0
        %466 = vmatpush1.msra.mxu0 %v409
        %467 = vmatprep.subr.mxu0 0.0
        %468 = vmatpush1.msra.mxu0 %v410
        %469 = vmatprep.subr.mxu0 0.0
        %470 = vmatpush1.msra.mxu0 %v411
        %471 = vmatprep.subr.mxu0 0.0
        %472 = vmatpush1.msra.mxu0 %v412
        %473 = vmatprep.subr.mxu0 0.0
        %474 = vmatpush1.msra.mxu0 %v413
        %475 = vmatprep.subr.mxu0 0.0
        %476 = vmatpush1.msra.mxu0 %v414
        %477 = vmatprep.subr.mxu0 0.0
        %478 = vmatpush1.msra.mxu0 %v415
        %479 = vmatprep.subr.mxu0 0.0
        %480 = vmatpush1.msra.mxu0 %v416
        %481 = vmatprep.subr.mxu0 0.0
        %482 = vmatpush1.msra.mxu0 %v417
        %483 = vmatprep.subr.mxu0 0.0
        %484 = vmatpush1.msra.mxu0 %v418
        %485 = vmatprep.subr.mxu0 0.0
        %486 = vmatpush1.msra.mxu0 %v419
        %487 = vmatprep.subr.mxu0 0.0
        %488 = vmatpush1.msra.mxu0 %v420
        %489 = vmatprep.subr.mxu0 0.0
        %490 = vmatpush1.msra.mxu0 %v421
        %491 = vmatprep.subr.mxu0 0.0
        %492 = vmatpush1.msra.mxu0 %v422
        %493 = vmatprep.subr.mxu0 0.0
        %494 = vmatpush1.msra.mxu0 %v423
        %495 = vmatprep.subr.mxu0 0.0
        %496 = vmatpush1.msra.mxu0 %v424
        %497 = vmatprep.subr.mxu0 0.0
        %498 = vmatpush1.msra.mxu0 %v425
        %499 = vmatprep.subr.mxu0 0.0
        %500 = vmatpush1.msra.mxu0 %v426
        %501 = vmatprep.subr.mxu0 0.0
        %502 = vmatpush1.msra.mxu0 %v427
        %503 = vmatprep.subr.mxu0 0.0
        %504 = vmatpush1.msra.mxu0 %v428
        %505 = vmatprep.subr.mxu0 0.0
        %506 = vmatpush1.msra.mxu0 %v429
        %507 = vmatprep.subr.mxu0 0.0
        %508 = vmatpush1.msra.mxu0 %v430
        %509 = vmatprep.subr.mxu0 0.0
        %510 = vmatpush1.msra.mxu0 %v431
        %511 = vmatprep.subr.mxu0 0.0
        %512 = vmatpush1.msra.mxu0 %v432
        %513 = vmatprep.mubr.f32.mxu0 %v354
        %514 = vmatmul.mubr.f32.gmra.mrb[0].mxu0 %v353
        %v515 = vpop.f32.mrb[0].mxu0
        %v516 = vadd.f32 0.0, %v515
        %v517 = vpop.f32.mrb[0].mxu0
        %518 = vmatprep.mubr.f32.mxu0 %v357
        %519 = vmatmul.mubr.f32.gmra.mrb[0].mxu0 %v356
        %v520 = vpop.f32.mrb[0].mxu0
        %v521 = vadd.f32 0.0, %v520
        %v522 = vpop.f32.mrb[0].mxu0
        %523 = vmatprep.mubr.f32.mxu0 %v360
        %524 = vmatmul.mubr.f32.gmra.mrb[0].mxu0 %v359
        %v525 = vpop.f32.mrb[0].mxu0
        %v526 = vadd.f32 0.0, %v525
        %v527 = vpop.f32.mrb[0].mxu0
        %528 = vmatprep.mubr.f32.mxu0 %v363
        %529 = vmatmul.mubr.f32.gmra.mrb[0].mxu0 %v362
        %v530 = vpop.f32.mrb[0].mxu0
        %v531 = vadd.f32 0.0, %v530
        %v532 = vpop.f32.mrb[0].mxu0
        %533 = vmatprep.mubr.f32.mxu0 %v366
        %534 = vmatmul.mubr.f32.gmra.mrb[0].mxu0 %v365
        %v535 = vpop.f32.mrb[0].mxu0
        %v536 = vadd.f32 0.0, %v535
        %v537 = vpop.f32.mrb[0].mxu0
        %538 = vmatprep.mubr.f32.mxu0 %v369
        %539 = vmatmul.mubr.f32.gmra.mrb[0].mxu0 %v368
        %v540 = vpop.f32.mrb[0].mxu0
        %v541 = vadd.f32 0.0, %v540
        %v542 = vpop.f32.mrb[0].mxu0
        %543 = vmatprep.mubr.f32.mxu0 %v372
        %544 = vmatmul.mubr.f32.gmra.mrb[0].mxu0 %v371
        %v545 = vpop.f32.mrb[0].mxu0
        %v546 = vadd.f32 0.0, %v545
        %v547 = vpop.f32.mrb[0].mxu0
        %548 = vmatprep.mubr.f32.mxu0 %v375
        %549 = vmatmul.mubr.f32.gmra.mrb[0].mxu0 %v374
        %v550 = vpop.f32.mrb[0].mxu0
        %v551 = vadd.f32 0.0, %v550
        %v552 = vpop.f32.mrb[0].mxu0
        %553 = vmatprep.mubr.f32.mxu0 %v378
        %554 = vmatmul.mubr.f32.gmra.mrb[0].mxu0 %v377
        %v555 = vpop.f32.mrb[0].mxu0
        %v556 = vadd.f32 0.0, %v555
        %v557 = vpop.f32.mrb[0].mxu0
        %558 = vmatprep.mubr.f32.mxu0 %v381
        %559 = vmatmul.mubr.f32.gmra.mrb[0].mxu0 %v380
        %v560 = vpop.f32.mrb[0].mxu0
        %v561 = vadd.f32 0.0, %v560
        %v562 = vpop.f32.mrb[0].mxu0
        %563 = vmatprep.mubr.f32.mxu0 %v384
        %564 = vmatmul.mubr.f32.gmra.mrb[0].mxu0 %v383
        %v565 = vpop.f32.mrb[0].mxu0
        %v566 = vadd.f32 0.0, %v565
        %v567 = vpop.f32.mrb[0].mxu0
        %568 = vmatprep.mubr.f32.mxu0 %v387
        %569 = vmatmul.mubr.f32.gmra.mrb[0].mxu0 %v386
        %v570 = vpop.f32.mrb[0].mxu0
        %v571 = vadd.f32 0.0, %v570
        %v572 = vpop.f32.mrb[0].mxu0
        %573 = vmatprep.mubr.f32.mxu0 %v390
        %574 = vmatmul.mubr.f32.gmra.mrb[0].mxu0 %v389
        %v575 = vpop.f32.mrb[0].mxu0
        %v576 = vadd.f32 0.0, %v575
        %v577 = vpop.f32.mrb[0].mxu0
        %578 = vmatprep.mubr.f32.mxu0 %v393
        %579 = vmatmul.mubr.f32.gmra.mrb[0].mxu0 %v392
        %v580 = vpop.f32.mrb[0].mxu0
        %v581 = vadd.f32 0.0, %v580
        %v582 = vpop.f32.mrb[0].mxu0
        %583 = vmatprep.mubr.f32.mxu0 %v396
        %584 = vmatmul.mubr.f32.gmra.mrb[0].mxu0 %v395
        %v585 = vpop.f32.mrb[0].mxu0
        %v586 = vadd.f32 0.0, %v585
        %v587 = vpop.f32.mrb[0].mxu0
        %588 = vmatprep.mubr.f32.mxu0 %v399
        %589 = vmatmul.mubr.f32.gmra.mrb[0].mxu0 %v398
        %v590 = vpop.f32.mrb[0].mxu0
        %v591 = vadd.f32 0.0, %v590
        %v592 = vpop.f32.mrb[0].mxu0
        %593 = vdwg.mxu0
        %594 = vmatprep.subr.mxu0 0.0
        %595 = vmatpush1.msra.mxu0 %v433
        %596 = vmatprep.subr.mxu0 0.0
        %597 = vmatpush1.msra.mxu0 %v434
        %598 = vmatprep.subr.mxu0 0.0
        %599 = vmatpush1.msra.mxu0 %v435
        %600 = vmatprep.subr.mxu0 0.0
        %601 = vmatpush1.msra.mxu0 %v436
        %602 = vmatprep.subr.mxu0 0.0
        %603 = vmatpush1.msra.mxu0 %v437
        %604 = vmatprep.subr.mxu0 0.0
        %605 = vmatpush1.msra.mxu0 %v438
        %606 = vmatprep.subr.mxu0 0.0
        %607 = vmatpush1.msra.mxu0 %v439
        %608 = vmatprep.subr.mxu0 0.0
        %609 = vmatpush1.msra.mxu0 %v440
        %610 = vmatprep.subr.mxu0 0.0
        %611 = vmatpush1.msra.mxu0 %v441
        %612 = vmatprep.subr.mxu0 0.0
        %613 = vmatpush1.msra.mxu0 %v442
        %614 = vmatprep.subr.mxu0 0.0
        %615 = vmatpush1.msra.mxu0 %v443
        %616 = vmatprep.subr.mxu0 0.0
        %617 = vmatpush1.msra.mxu0 %v444
        %618 = vmatprep.subr.mxu0 0.0
        %619 = vmatpush1.msra.mxu0 %v445
        %620 = vmatprep.subr.mxu0 0.0
        %621 = vmatpush1.msra.mxu0 %v446
        %622 = vmatprep.subr.mxu0 0.0
        %623 = vmatpush1.msra.mxu0 %v447
        %624 = vmatprep.subr.mxu0 0.0
        %625 = vmatpush1.msra.mxu0 %v448
        %626 = vmatprep.subr.mxu0 0.0
        %627 = vmatpush1.msra.mxu0 0.0
        %628 = vmatprep.subr.mxu0 0.0
        %629 = vmatpush1.msra.mxu0 0.0
        %630 = vmatprep.subr.mxu0 0.0
        %631 = vmatpush1.msra.mxu0 0.0
        %632 = vmatprep.subr.mxu0 0.0
        %633 = vmatpush1.msra.mxu0 0.0
        %634 = vmatprep.subr.mxu0 0.0
        %635 = vmatpush1.msra.mxu0 0.0
        %636 = vmatprep.subr.mxu0 0.0
        %637 = vmatpush1.msra.mxu0 0.0
        %638 = vmatprep.subr.mxu0 0.0
        %639 = vmatpush1.msra.mxu0 0.0
        %640 = vmatprep.subr.mxu0 0.0
        %641 = vmatpush1.msra.mxu0 0.0
        %642 = vmatprep.subr.mxu0 0.0
        %643 = vmatpush1.msra.mxu0 0.0
        %644 = vmatprep.subr.mxu0 0.0
        %645 = vmatpush1.msra.mxu0 0.0
        %646 = vmatprep.subr.mxu0 0.0
        %647 = vmatpush1.msra.mxu0 0.0
        %648 = vmatprep.subr.mxu0 0.0
        %649 = vmatpush1.msra.mxu0 0.0
        %650 = vmatprep.subr.mxu0 0.0
        %651 = vmatpush1.msra.mxu0 0.0
        %652 = vmatprep.subr.mxu0 0.0
        %653 = vmatpush1.msra.mxu0 0.0
        %654 = vmatprep.subr.mxu0 0.0
        %655 = vmatpush1.msra.mxu0 0.0
        %656 = vmatprep.subr.mxu0 0.0
        %657 = vmatpush1.msra.mxu0 0.0
        %658 = vmatprep.mubr.f32.mxu0 0.0
        %659 = vmatmul.mubr.f32.gmra.mrb[0].mxu0 %v355
        %v660 = vpop.f32.mrb[0].mxu0
        %v661 = vadd.f32 %v516, %v660
        %v662 = vpop.f32.mrb[0].mxu0
        %663 = vmatprep.mubr.f32.mxu0 0.0
        %664 = vmatmul.mubr.f32.gmra.mrb[0].mxu0 %v358
        %v665 = vpop.f32.mrb[0].mxu0
        %v666 = vadd.f32 %v521, %v665
        %v667 = vpop.f32.mrb[0].mxu0
        %668 = vmatprep.mubr.f32.mxu0 0.0
        %669 = vmatmul.mubr.f32.gmra.mrb[0].mxu0 %v361
        %v670 = vpop.f32.mrb[0].mxu0
        %v671 = vadd.f32 %v526, %v670
        %v672 = vpop.f32.mrb[0].mxu0
        %673 = vmatprep.mubr.f32.mxu0 0.0
        %674 = vmatmul.mubr.f32.gmra.mrb[0].mxu0 %v364
        %v675 = vpop.f32.mrb[0].mxu0
        %v676 = vadd.f32 %v531, %v675
        %v677 = vpop.f32.mrb[0].mxu0
        %678 = vmatprep.mubr.f32.mxu0 0.0
        %679 = vmatmul.mubr.f32.gmra.mrb[0].mxu0 %v367
        %v680 = vpop.f32.mrb[0].mxu0
        %v681 = vadd.f32 %v536, %v680
        %v682 = vpop.f32.mrb[0].mxu0
        %683 = vmatprep.mubr.f32.mxu0 0.0
        %684 = vmatmul.mubr.f32.gmra.mrb[0].mxu0 %v370
        %v685 = vpop.f32.mrb[0].mxu0
        %v686 = vadd.f32 %v541, %v685
        %v687 = vpop.f32.mrb[0].mxu0
        %688 = vmatprep.mubr.f32.mxu0 0.0
        %689 = vmatmul.mubr.f32.gmra.mrb[0].mxu0 %v373
        %v690 = vpop.f32.mrb[0].mxu0
        %v691 = vadd.f32 %v546, %v690
        %v692 = vpop.f32.mrb[0].mxu0
        %693 = vmatprep.mubr.f32.mxu0 0.0
        %694 = vmatmul.mubr.f32.gmra.mrb[0].mxu0 %v376
        %v695 = vpop.f32.mrb[0].mxu0
        %v696 = vadd.f32 %v551, %v695
        %v697 = vpop.f32.mrb[0].mxu0
        %698 = vmatprep.mubr.f32.mxu0 0.0
        %699 = vmatmul.mubr.f32.gmra.mrb[0].mxu0 %v379
        %v700 = vpop.f32.mrb[0].mxu0
        %v701 = vadd.f32 %v556, %v700
        %v702 = vpop.f32.mrb[0].mxu0
        %703 = vmatprep.mubr.f32.mxu0 0.0
        %704 = vmatmul.mubr.f32.gmra.mrb[0].mxu0 %v382
        %v705 = vpop.f32.mrb[0].mxu0
        %v706 = vadd.f32 %v561, %v705
        %v707 = vpop.f32.mrb[0].mxu0
        %708 = vmatprep.mubr.f32.mxu0 0.0
        %709 = vmatmul.mubr.f32.gmra.mrb[0].mxu0 %v385
        %v710 = vpop.f32.mrb[0].mxu0
        %v711 = vadd.f32 %v566, %v710
        %v712 = vpop.f32.mrb[0].mxu0
        %713 = vmatprep.mubr.f32.mxu0 0.0
        %714 = vmatmul.mubr.f32.gmra.mrb[0].mxu0 %v388
        %v715 = vpop.f32.mrb[0].mxu0
        %v716 = vadd.f32 %v571, %v715
        %v717 = vpop.f32.mrb[0].mxu0
        %718 = vmatprep.mubr.f32.mxu0 0.0
        %719 = vmatmul.mubr.f32.gmra.mrb[0].mxu0 %v391
        %v720 = vpop.f32.mrb[0].mxu0
        %v721 = vadd.f32 %v576, %v720
        %v722 = vpop.f32.mrb[0].mxu0
        %723 = vmatprep.mubr.f32.mxu0 0.0
        %724 = vmatmul.mubr.f32.gmra.mrb[0].mxu0 %v394
        %v725 = vpop.f32.mrb[0].mxu0
        %v726 = vadd.f32 %v581, %v725
        %v727 = vpop.f32.mrb[0].mxu0
        %728 = vmatprep.mubr.f32.mxu0 0.0
        %729 = vmatmul.mubr.f32.gmra.mrb[0].mxu0 %v397
        %v730 = vpop.f32.mrb[0].mxu0
        %v731 = vadd.f32 %v586, %v730
        %v732 = vpop.f32.mrb[0].mxu0
        %733 = vmatprep.mubr.f32.mxu0 0.0
        %734 = vmatmul.mubr.f32.gmra.mrb[0].mxu0 %v400
        %v735 = vpop.f32.mrb[0].mxu0
        %v736 = vadd.f32 %v591, %v735
        %v737 = vpop.f32.mrb[0].mxu0
        %738 = vdwg.mxu0
        %v739 = vld [vmem:[%s304] sm:$0xff]
        %v740 = vld [vmem:[%s304 + $0x8] sm:$0xff]
        %v741 = vld [vmem:[%s304 + $0x10] sm:$0xff]
        %v742 = vld [vmem:[%s304 + $0x18] sm:$0xff]
        %v743 = vld [vmem:[%s304 + $0x20] sm:$0xff]
        %v744 = vld [vmem:[%s304 + $0x28] sm:$0xff]
        %v745 = vld [vmem:[%s304 + $0x30] sm:$0xff]
        %v746 = vld [vmem:[%s304 + $0x38] sm:$0xff]
        %v747 = vld [vmem:[%s304 + $0x40] sm:$0xff]
        %v748 = vld [vmem:[%s304 + $0x48] sm:$0xff]
        %v749 = vld [vmem:[%s304 + $0x50] sm:$0xff]
        %v750 = vld [vmem:[%s304 + $0x58] sm:$0xff]
        %v751 = vld [vmem:[%s304 + $0x60] sm:$0xff]
        %v752 = vld [vmem:[%s304 + $0x68] sm:$0xff]
        %v753 = vld [vmem:[%s304 + $0x70] sm:$0xff]
        %v754 = vld [vmem:[%s304 + $0x78] sm:$0xff]
        %v755 = vsub.f32 %v739, %v661
        %v756 = vsub.f32 %v740, %v666
        %v757 = vsub.f32 %v741, %v671
        %v758 = vsub.f32 %v742, %v676
        %v759 = vsub.f32 %v743, %v681
        %v760 = vsub.f32 %v744, %v686
        %v761 = vsub.f32 %v745, %v691
        %v762 = vsub.f32 %v746, %v696
        %v763 = vsub.f32 %v747, %v701
        %v764 = vsub.f32 %v748, %v706
        %v765 = vsub.f32 %v749, %v711
        %v766 = vsub.f32 %v750, %v716
        %v767 = vsub.f32 %v751, %v721
        %v768 = vsub.f32 %v752, %v726
        %v769 = vsub.f32 %v753, %v731
        %v770 = vsub.f32 %v754, %v736
        %v771 = vmul.f32 %v755, %v755
        %v772 = vmul.f32 %v756, %v756
        %v773 = vmul.f32 %v757, %v757
        %v774 = vmul.f32 %v758, %v758
        %v775 = vmul.f32 %v759, %v759
        %v776 = vmul.f32 %v760, %v760
        %v777 = vmul.f32 %v761, %v761
        %v778 = vmul.f32 %v762, %v762
        %v779 = vmul.f32 %v763, %v763
        %v780 = vmul.f32 %v764, %v764
        %v781 = vmul.f32 %v765, %v765
        %v782 = vmul.f32 %v766, %v766
        %v783 = vmul.f32 %v767, %v767
        %v784 = vmul.f32 %v768, %v768
        %v785 = vmul.f32 %v769, %v769
        %v786 = vmul.f32 %v770, %v770
        %vm787 = vcmask 195584
        %v788 = vsel %vm787, %v771, 0.0
        %v789 = vsel %vm787, %v772, 0.0
        %v790 = vadd.f32 %v788, %v789
        %v791 = vsel %vm787, %v773, 0.0
        %v792 = vadd.f32 %v790, %v791
        %v793 = vsel %vm787, %v774, 0.0
        %v794 = vadd.f32 %v792, %v793
        %v795 = vsel %vm787, %v775, 0.0
        %v796 = vadd.f32 %v794, %v795
        %v797 = vsel %vm787, %v776, 0.0
        %v798 = vadd.f32 %v796, %v797
        %v799 = vsel %vm787, %v777, 0.0
        %v800 = vadd.f32 %v798, %v799
        %v801 = vsel %vm787, %v778, 0.0
        %v802 = vadd.f32 %v800, %v801
        %v803 = vsel %vm787, %v779, 0.0
        %v804 = vadd.f32 %v802, %v803
        %v805 = vsel %vm787, %v780, 0.0
        %v806 = vadd.f32 %v804, %v805
        %v807 = vsel %vm787, %v781, 0.0
        %v808 = vadd.f32 %v806, %v807
        %v809 = vsel %vm787, %v782, 0.0
        %v810 = vadd.f32 %v808, %v809
        %v811 = vsel %vm787, %v783, 0.0
        %v812 = vadd.f32 %v810, %v811
        %v813 = vsel %vm787, %v784, 0.0
        %v814 = vadd.f32 %v812, %v813
        %v815 = vsel %vm787, %v785, 0.0
        %v816 = vadd.f32 %v814, %v815
        %v817 = vsel %vm787, %v786, 0.0
        %v818 = vadd.f32 %v816, %v817
        %819 = vadd.xlane.f32.xlu0 %v818
        %v820 = vpop.xlane.xlu0 %819
        %v821 = vrot.slane %v820, 4
        %v822 = vadd.f32 %v820, %v821
        %v823 = vrot.slane %v822, 2
        %v824 = vadd.f32 %v822, %v823
        %v825 = vrot.slane %v824, 1
        %v826 = vadd.f32 %v824, %v825
        %s827 = vtos %v826
        %v828 = vld [vmem:[%s291] sm:$0xff]
        %v829 = vld [vmem:[%s291 + $0x8] sm:$0xff]
        %v830 = vld [vmem:[%s291 + $0x10] sm:$0xff]
        %v831 = vld [vmem:[%s291 + $0x18] sm:$0xff]
        %v832 = vld [vmem:[%s291 + $0x20] sm:$0xff]
        %v833 = vld [vmem:[%s291 + $0x28] sm:$0xff]
        %v834 = vld [vmem:[%s291 + $0x30] sm:$0xff]
        %v835 = vld [vmem:[%s291 + $0x38] sm:$0xff]
        %v836 = vld [vmem:[%s291 + $0x40] sm:$0xff]
        %v837 = vld [vmem:[%s291 + $0x48] sm:$0xff]
        %v838 = vld [vmem:[%s291 + $0x50] sm:$0xff]
        %v839 = vld [vmem:[%s291 + $0x58] sm:$0xff]
        %v840 = vld [vmem:[%s291 + $0x60] sm:$0xff]
        %v841 = vld [vmem:[%s291 + $0x68] sm:$0xff]
        %v842 = vld [vmem:[%s291 + $0x70] sm:$0xff]
        %v843 = vld [vmem:[%s291 + $0x78] sm:$0xff]
        %v844 = vld [vmem:[#allocation2] sm:$0xff]
        %v845 = vld [vmem:[#allocation2 + $0x8] sm:$0xff]
        %v846 = vld [vmem:[#allocation2 + $0x10] sm:$0xff]
        %v847 = vld [vmem:[#allocation2 + $0x18] sm:$0xff]
        %v848 = vld [vmem:[#allocation2 + $0x20] sm:$0xff]
        %v849 = vld [vmem:[#allocation2 + $0x28] sm:$0xff]
        %v850 = vld [vmem:[#allocation2 + $0x30] sm:$0xff]
        %v851 = vld [vmem:[#allocation2 + $0x38] sm:$0xff]
        %v852 = vld [vmem:[#allocation2 + $0x40] sm:$0xff]
        %v853 = vld [vmem:[#allocation2 + $0x48] sm:$0xff]
        %v854 = vld [vmem:[#allocation2 + $0x50] sm:$0xff]
        %v855 = vld [vmem:[#allocation2 + $0x58] sm:$0xff]
        %v856 = vld [vmem:[#allocation2 + $0x60] sm:$0xff]
        %v857 = vld [vmem:[#allocation2 + $0x68] sm:$0xff]
        %v858 = vld [vmem:[#allocation2 + $0x70] sm:$0xff]
        %v859 = vld [vmem:[#allocation2 + $0x78] sm:$0xff]
        %v860 = vld [vmem:[#allocation2 + $0x80] sm:$0xff]
        %v861 = vld [vmem:[#allocation2 + $0x88] sm:$0xff]
        %v862 = vld [vmem:[#allocation2 + $0x90] sm:$0xff]
        %v863 = vld [vmem:[#allocation2 + $0x98] sm:$0xff]
        %v864 = vld [vmem:[#allocation2 + $0xa0] sm:$0xff]
        %v865 = vld [vmem:[#allocation2 + $0xa8] sm:$0xff]
        %v866 = vld [vmem:[#allocation2 + $0xb0] sm:$0xff]
        %v867 = vld [vmem:[#allocation2 + $0xb8] sm:$0xff]
        %v868 = vld [vmem:[#allocation2 + $0xc0] sm:$0xff]
        %v869 = vld [vmem:[#allocation2 + $0xc8] sm:$0xff]
        %v870 = vld [vmem:[#allocation2 + $0xd0] sm:$0xff]
        %v871 = vld [vmem:[#allocation2 + $0xd8] sm:$0xff]
        %v872 = vld [vmem:[#allocation2 + $0xe0] sm:$0xff]
        %v873 = vld [vmem:[#allocation2 + $0xe8] sm:$0xff]
        %v874 = vld [vmem:[#allocation2 + $0xf0] sm:$0xff]
        %v875 = vld [vmem:[#allocation2 + $0xf8] sm:$0xff]
        %v876 = vld [vmem:[#allocation2 + $0x100] sm:$0xff]
        %v877 = vld [vmem:[#allocation2 + $0x108] sm:$0xff]
        %v878 = vld [vmem:[#allocation2 + $0x110] sm:$0xff]
        %v879 = vld [vmem:[#allocation2 + $0x118] sm:$0xff]
        %v880 = vld [vmem:[#allocation2 + $0x120] sm:$0xff]
        %v881 = vld [vmem:[#allocation2 + $0x128] sm:$0xff]
        %v882 = vld [vmem:[#allocation2 + $0x130] sm:$0xff]
        %v883 = vld [vmem:[#allocation2 + $0x138] sm:$0xff]
        %v884 = vld [vmem:[#allocation2 + $0x140] sm:$0xff]
        %v885 = vld [vmem:[#allocation2 + $0x148] sm:$0xff]
        %v886 = vld [vmem:[#allocation2 + $0x150] sm:$0xff]
        %v887 = vld [vmem:[#allocation2 + $0x158] sm:$0xff]
        %v888 = vld [vmem:[#allocation2 + $0x160] sm:$0xff]
        %v889 = vld [vmem:[#allocation2 + $0x168] sm:$0xff]
        %v890 = vld [vmem:[#allocation2 + $0x170] sm:$0xff]
        %v891 = vld [vmem:[#allocation2 + $0x178] sm:$0xff]
        %vm892 = vcmask 64512
        %v894 = vsel %vm892, %v828, 0
        %v897 = vsel %vm892, %v829, 0
        %v900 = vsel %vm892, %v830, 0
        %v903 = vsel %vm892, %v831, 0
        %v906 = vsel %vm892, %v832, 0
        %v909 = vsel %vm892, %v833, 0
        %v912 = vsel %vm892, %v834, 0
        %v915 = vsel %vm892, %v835, 0
        %v918 = vsel %vm892, %v836, 0
        %v921 = vsel %vm892, %v837, 0
        %v924 = vsel %vm892, %v838, 0
        %v927 = vsel %vm892, %v839, 0
        %v930 = vsel %vm892, %v840, 0
        %v933 = vsel %vm892, %v841, 0
        %v936 = vsel %vm892, %v842, 0
        %v939 = vsel %vm892, %v843, 0
        %v942 = vsel %vm892, %v844, 0
        %v945 = vsel %vm892, %v845, 0
        %v948 = vsel %vm892, %v846, 0
        %v951 = vsel %vm892, %v847, 0
        %v954 = vsel %vm892, %v848, 0
        %v957 = vsel %vm892, %v849, 0
        %v960 = vsel %vm892, %v850, 0
        %v963 = vsel %vm892, %v851, 0
        %v966 = vsel %vm892, %v852, 0
        %v969 = vsel %vm892, %v853, 0
        %v972 = vsel %vm892, %v854, 0
        %v975 = vsel %vm892, %v855, 0
        %v978 = vsel %vm892, %v856, 0
        %v981 = vsel %vm892, %v857, 0
        %v984 = vsel %vm892, %v858, 0
        %v987 = vsel %vm892, %v859, 0
        %v990 = vsel %vm892, %v860, 0
        %v993 = vsel %vm892, %v861, 0
        %v996 = vsel %vm892, %v862, 0
        %v999 = vsel %vm892, %v863, 0
        %v1002 = vsel %vm892, %v864, 0
        %v1005 = vsel %vm892, %v865, 0
        %v1008 = vsel %vm892, %v866, 0
        %v1011 = vsel %vm892, %v867, 0
        %v1014 = vsel %vm892, %v868, 0
        %v1017 = vsel %vm892, %v869, 0
        %v1020 = vsel %vm892, %v870, 0
        %v1023 = vsel %vm892, %v871, 0
        %v1026 = vsel %vm892, %v872, 0
        %v1029 = vsel %vm892, %v873, 0
        %v1032 = vsel %vm892, %v874, 0
        %v1035 = vsel %vm892, %v875, 0
        %v1038 = vsel %vm892, %v876, 0
        %v1041 = vsel %vm892, %v877, 0
        %v1044 = vsel %vm892, %v878, 0
        %v1047 = vsel %vm892, %v879, 0
        %v1050 = vsel %vm892, %v880, 0
        %v1053 = vsel %vm892, %v881, 0
        %v1056 = vsel %vm892, %v882, 0
        %v1059 = vsel %vm892, %v883, 0
        %v1062 = vsel %vm892, %v884, 0
        %v1065 = vsel %vm892, %v885, 0
        %v1068 = vsel %vm892, %v886, 0
        %v1071 = vsel %vm892, %v887, 0
        %v1074 = vsel %vm892, %v888, 0
        %v1077 = vsel %vm892, %v889, 0
        %v1080 = vsel %vm892, %v890, 0
        %v1083 = vsel %vm892, %v891, 0
        %1085 = vmatprep.subr.mxu0 0.0
        %1086 = vmatpush1.xpose.msra.mxu0 %v942
        %1087 = vmatprep.subr.mxu0 0.0
        %1088 = vmatpush1.xpose.msra.mxu0 %v945
        %1089 = vmatprep.subr.mxu0 0.0
        %1090 = vmatpush1.xpose.msra.mxu0 %v948
        %1091 = vmatprep.subr.mxu0 0.0
        %1092 = vmatpush1.xpose.msra.mxu0 %v951
        %1093 = vmatprep.subr.mxu0 0.0
        %1094 = vmatpush1.xpose.msra.mxu0 %v954
        %1095 = vmatprep.subr.mxu0 0.0
        %1096 = vmatpush1.xpose.msra.mxu0 %v957
        %1097 = vmatprep.subr.mxu0 0.0
        %1098 = vmatpush1.xpose.msra.mxu0 %v960
        %1099 = vmatprep.subr.mxu0 0.0
        %1100 = vmatpush1.xpose.msra.mxu0 %v963
        %1101 = vmatprep.subr.mxu0 0.0
        %1102 = vmatpush1.xpose.msra.mxu0 %v966
        %1103 = vmatprep.subr.mxu0 0.0
        %1104 = vmatpush1.xpose.msra.mxu0 %v969
        %1105 = vmatprep.subr.mxu0 0.0
        %1106 = vmatpush1.xpose.msra.mxu0 %v972
        %1107 = vmatprep.subr.mxu0 0.0
        %1108 = vmatpush1.xpose.msra.mxu0 %v975
        %1109 = vmatprep.subr.mxu0 0.0
        %1110 = vmatpush1.xpose.msra.mxu0 %v978
        %1111 = vmatprep.subr.mxu0 0.0
        %1112 = vmatpush1.xpose.msra.mxu0 %v981
        %1113 = vmatprep.subr.mxu0 0.0
        %1114 = vmatpush1.xpose.msra.mxu0 %v984
        %1115 = vmatprep.subr.mxu0 0.0
        %1116 = vmatpush1.xpose.msra.mxu0 %v987
        %1117 = vmatprep.subr.mxu0 0.0
        %1118 = vmatpush1.xpose.msra.mxu0 %v990
        %1119 = vmatprep.subr.mxu0 0.0
        %1120 = vmatpush1.xpose.msra.mxu0 %v993
        %1121 = vmatprep.subr.mxu0 0.0
        %1122 = vmatpush1.xpose.msra.mxu0 %v996
        %1123 = vmatprep.subr.mxu0 0.0
        %1124 = vmatpush1.xpose.msra.mxu0 %v999
        %1125 = vmatprep.subr.mxu0 0.0
        %1126 = vmatpush1.xpose.msra.mxu0 %v1002
        %1127 = vmatprep.subr.mxu0 0.0
        %1128 = vmatpush1.xpose.msra.mxu0 %v1005
        %1129 = vmatprep.subr.mxu0 0.0
        %1130 = vmatpush1.xpose.msra.mxu0 %v1008
        %1131 = vmatprep.subr.mxu0 0.0
        %1132 = vmatpush1.xpose.msra.mxu0 %v1011
        %1133 = vmatprep.subr.mxu0 0.0
        %1134 = vmatpush1.xpose.msra.mxu0 %v1014
        %1135 = vmatprep.subr.mxu0 0.0
        %1136 = vmatpush1.xpose.msra.mxu0 %v1017
        %1137 = vmatprep.subr.mxu0 0.0
        %1138 = vmatpush1.xpose.msra.mxu0 %v1020
        %1139 = vmatprep.subr.mxu0 0.0
        %1140 = vmatpush1.xpose.msra.mxu0 %v1023
        %1141 = vmatprep.subr.mxu0 0.0
        %1142 = vmatpush1.xpose.msra.mxu0 %v1026
        %1143 = vmatprep.subr.mxu0 0.0
        %1144 = vmatpush1.xpose.msra.mxu0 %v1029
        %1145 = vmatprep.subr.mxu0 0.0
        %1146 = vmatpush1.xpose.msra.mxu0 %v1032
        %1147 = vmatprep.subr.mxu0 0.0
        %1148 = vmatpush1.xpose.msra.mxu0 %v1035
        %1149 = vmatprep.mubr.f32.mxu0 0.0
        %1150 = vmatmul.mubr.f32.gmra.mrb[0].mxu0 %v894
        %v1151 = vpop.f32.mrb[0].mxu0
        %v1152 = vadd.f32 0.0, %v1151
        %v1153 = vpop.f32.mrb[0].mxu0
        %v1154 = vadd.f32 0.0, %v1153
        %1155 = vmatprep.mubr.f32.mxu0 0.0
        %1156 = vmatmul.mubr.f32.gmra.mrb[0].mxu0 %v897
        %v1157 = vpop.f32.mrb[0].mxu0
        %v1158 = vadd.f32 0.0, %v1157
        %v1159 = vpop.f32.mrb[0].mxu0
        %v1160 = vadd.f32 0.0, %v1159
        %1161 = vmatprep.mubr.f32.mxu0 0.0
        %1162 = vmatmul.mubr.f32.gmra.mrb[0].mxu0 %v900
        %v1163 = vpop.f32.mrb[0].mxu0
        %v1164 = vadd.f32 0.0, %v1163
        %v1165 = vpop.f32.mrb[0].mxu0
        %v1166 = vadd.f32 0.0, %v1165
        %1167 = vmatprep.mubr.f32.mxu0 0.0
        %1168 = vmatmul.mubr.f32.gmra.mrb[0].mxu0 %v903
        %v1169 = vpop.f32.mrb[0].mxu0
        %v1170 = vadd.f32 0.0, %v1169
        %v1171 = vpop.f32.mrb[0].mxu0
        %v1172 = vadd.f32 0.0, %v1171
        %1173 = vmatprep.mubr.f32.mxu0 0.0
        %1174 = vmatmul.mubr.f32.gmra.mrb[0].mxu0 %v906
        %v1175 = vpop.f32.mrb[0].mxu0
        %v1176 = vadd.f32 0.0, %v1175
        %v1177 = vpop.f32.mrb[0].mxu0
        %v1178 = vadd.f32 0.0, %v1177
        %1179 = vmatprep.mubr.f32.mxu0 0.0
        %1180 = vmatmul.mubr.f32.gmra.mrb[0].mxu0 %v909
        %v1181 = vpop.f32.mrb[0].mxu0
        %v1182 = vadd.f32 0.0, %v1181
        %v1183 = vpop.f32.mrb[0].mxu0
        %v1184 = vadd.f32 0.0, %v1183
        %1185 = vmatprep.mubr.f32.mxu0 0.0
        %1186 = vmatmul.mubr.f32.gmra.mrb[0].mxu0 %v912
        %v1187 = vpop.f32.mrb[0].mxu0
        %v1188 = vadd.f32 0.0, %v1187
        %v1189 = vpop.f32.mrb[0].mxu0
        %v1190 = vadd.f32 0.0, %v1189
        %1191 = vmatprep.mubr.f32.mxu0 0.0
        %1192 = vmatmul.mubr.f32.gmra.mrb[0].mxu0 %v915
        %v1193 = vpop.f32.mrb[0].mxu0
        %v1194 = vadd.f32 0.0, %v1193
        %v1195 = vpop.f32.mrb[0].mxu0
        %v1196 = vadd.f32 0.0, %v1195
        %1197 = vmatprep.mubr.f32.mxu0 0.0
        %1198 = vmatmul.mubr.f32.gmra.mrb[0].mxu0 %v918
        %v1199 = vpop.f32.mrb[0].mxu0
        %v1200 = vadd.f32 0.0, %v1199
        %v1201 = vpop.f32.mrb[0].mxu0
        %v1202 = vadd.f32 0.0, %v1201
        %1203 = vmatprep.mubr.f32.mxu0 0.0
        %1204 = vmatmul.mubr.f32.gmra.mrb[0].mxu0 %v921
        %v1205 = vpop.f32.mrb[0].mxu0
        %v1206 = vadd.f32 0.0, %v1205
        %v1207 = vpop.f32.mrb[0].mxu0
        %v1208 = vadd.f32 0.0, %v1207
        %1209 = vmatprep.mubr.f32.mxu0 0.0
        %1210 = vmatmul.mubr.f32.gmra.mrb[0].mxu0 %v924
        %v1211 = vpop.f32.mrb[0].mxu0
        %v1212 = vadd.f32 0.0, %v1211
        %v1213 = vpop.f32.mrb[0].mxu0
        %v1214 = vadd.f32 0.0, %v1213
        %1215 = vmatprep.mubr.f32.mxu0 0.0
        %1216 = vmatmul.mubr.f32.gmra.mrb[0].mxu0 %v927
        %v1217 = vpop.f32.mrb[0].mxu0
        %v1218 = vadd.f32 0.0, %v1217
        %v1219 = vpop.f32.mrb[0].mxu0
        %v1220 = vadd.f32 0.0, %v1219
        %1221 = vmatprep.mubr.f32.mxu0 0.0
        %1222 = vmatmul.mubr.f32.gmra.mrb[0].mxu0 %v930
        %v1223 = vpop.f32.mrb[0].mxu0
        %v1224 = vadd.f32 0.0, %v1223
        %v1225 = vpop.f32.mrb[0].mxu0
        %v1226 = vadd.f32 0.0, %v1225
        %1227 = vmatprep.mubr.f32.mxu0 0.0
        %1228 = vmatmul.mubr.f32.gmra.mrb[0].mxu0 %v933
        %v1229 = vpop.f32.mrb[0].mxu0
        %v1230 = vadd.f32 0.0, %v1229
        %v1231 = vpop.f32.mrb[0].mxu0
        %v1232 = vadd.f32 0.0, %v1231
        %1233 = vmatprep.mubr.f32.mxu0 0.0
        %1234 = vmatmul.mubr.f32.gmra.mrb[0].mxu0 %v936
        %v1235 = vpop.f32.mrb[0].mxu0
        %v1236 = vadd.f32 0.0, %v1235
        %v1237 = vpop.f32.mrb[0].mxu0
        %v1238 = vadd.f32 0.0, %v1237
        %1239 = vmatprep.mubr.f32.mxu0 0.0
        %1240 = vmatmul.mubr.f32.gmra.mrb[0].mxu0 %v939
        %v1241 = vpop.f32.mrb[0].mxu0
        %v1242 = vadd.f32 0.0, %v1241
        %v1243 = vpop.f32.mrb[0].mxu0
        %v1244 = vadd.f32 0.0, %v1243
        %1245 = vdwg.mxu0
        %1246 = vmatprep.subr.mxu0 0.0
        %1247 = vmatpush1.xpose.msra.mxu0 %v1038
        %1248 = vmatprep.subr.mxu0 0.0
        %1249 = vmatpush1.xpose.msra.mxu0 %v1041
        %1250 = vmatprep.subr.mxu0 0.0
        %1251 = vmatpush1.xpose.msra.mxu0 %v1044
        %1252 = vmatprep.subr.mxu0 0.0
        %1253 = vmatpush1.xpose.msra.mxu0 %v1047
        %1254 = vmatprep.subr.mxu0 0.0
        %1255 = vmatpush1.xpose.msra.mxu0 %v1050
        %1256 = vmatprep.subr.mxu0 0.0
        %1257 = vmatpush1.xpose.msra.mxu0 %v1053
        %1258 = vmatprep.subr.mxu0 0.0
        %1259 = vmatpush1.xpose.msra.mxu0 %v1056
        %1260 = vmatprep.subr.mxu0 0.0
        %1261 = vmatpush1.xpose.msra.mxu0 %v1059
        %1262 = vmatprep.subr.mxu0 0.0
        %1263 = vmatpush1.xpose.msra.mxu0 %v1062
        %1264 = vmatprep.subr.mxu0 0.0
        %1265 = vmatpush1.xpose.msra.mxu0 %v1065
        %1266 = vmatprep.subr.mxu0 0.0
        %1267 = vmatpush1.xpose.msra.mxu0 %v1068
        %1268 = vmatprep.subr.mxu0 0.0
        %1269 = vmatpush1.xpose.msra.mxu0 %v1071
        %1270 = vmatprep.subr.mxu0 0.0
        %1271 = vmatpush1.xpose.msra.mxu0 %v1074
        %1272 = vmatprep.subr.mxu0 0.0
        %1273 = vmatpush1.xpose.msra.mxu0 %v1077
        %1274 = vmatprep.subr.mxu0 0.0
        %1275 = vmatpush1.xpose.msra.mxu0 %v1080
        %1276 = vmatprep.subr.mxu0 0.0
        %1277 = vmatpush1.xpose.msra.mxu0 %v1083
        %1278 = vmatprep.subr.mxu0 0.0
        %1279 = vmatpush1.xpose.msra.mxu0 0.0
        %1280 = vmatprep.subr.mxu0 0.0
        %1281 = vmatpush1.xpose.msra.mxu0 0.0
        %1282 = vmatprep.subr.mxu0 0.0
        %1283 = vmatpush1.xpose.msra.mxu0 0.0
        %1284 = vmatprep.subr.mxu0 0.0
        %1285 = vmatpush1.xpose.msra.mxu0 0.0
        %1286 = vmatprep.subr.mxu0 0.0
        %1287 = vmatpush1.xpose.msra.mxu0 0.0
        %1288 = vmatprep.subr.mxu0 0.0
        %1289 = vmatpush1.xpose.msra.mxu0 0.0
        %1290 = vmatprep.subr.mxu0 0.0
        %1291 = vmatpush1.xpose.msra.mxu0 0.0
        %1292 = vmatprep.subr.mxu0 0.0
        %1293 = vmatpush1.xpose.msra.mxu0 0.0
        %1294 = vmatprep.subr.mxu0 0.0
        %1295 = vmatpush1.xpose.msra.mxu0 0.0
        %1296 = vmatprep.subr.mxu0 0.0
        %1297 = vmatpush1.xpose.msra.mxu0 0.0
        %1298 = vmatprep.subr.mxu0 0.0
        %1299 = vmatpush1.xpose.msra.mxu0 0.0
        %1300 = vmatprep.subr.mxu0 0.0
        %1301 = vmatpush1.xpose.msra.mxu0 0.0
        %1302 = vmatprep.subr.mxu0 0.0
        %1303 = vmatpush1.xpose.msra.mxu0 0.0
        %1304 = vmatprep.subr.mxu0 0.0
        %1305 = vmatpush1.xpose.msra.mxu0 0.0
        %1306 = vmatprep.subr.mxu0 0.0
        %1307 = vmatpush1.xpose.msra.mxu0 0.0
        %1308 = vmatprep.subr.mxu0 0.0
        %1309 = vmatpush1.xpose.msra.mxu0 0.0
        %1310 = vmatprep.mubr.f32.mxu0 0.0
        %1311 = vmatmul.mubr.f32.gmra.mrb[0].mxu0 %v894
        %v1312 = vpop.f32.mrb[0].mxu0
        %v1313 = vadd.f32 0.0, %v1312
        %v1314 = vpop.f32.mrb[0].mxu0
        %1315 = vmatprep.mubr.f32.mxu0 0.0
        %1316 = vmatmul.mubr.f32.gmra.mrb[0].mxu0 %v897
        %v1317 = vpop.f32.mrb[0].mxu0
        %v1318 = vadd.f32 0.0, %v1317
        %v1319 = vpop.f32.mrb[0].mxu0
        %1320 = vmatprep.mubr.f32.mxu0 0.0
        %1321 = vmatmul.mubr.f32.gmra.mrb[0].mxu0 %v900
        %v1322 = vpop.f32.mrb[0].mxu0
        %v1323 = vadd.f32 0.0, %v1322
        %v1324 = vpop.f32.mrb[0].mxu0
        %1325 = vmatprep.mubr.f32.mxu0 0.0
        %1326 = vmatmul.mubr.f32.gmra.mrb[0].mxu0 %v903
        %v1327 = vpop.f32.mrb[0].mxu0
        %v1328 = vadd.f32 0.0, %v1327
        %v1329 = vpop.f32.mrb[0].mxu0
        %1330 = vmatprep.mubr.f32.mxu0 0.0
        %1331 = vmatmul.mubr.f32.gmra.mrb[0].mxu0 %v906
        %v1332 = vpop.f32.mrb[0].mxu0
        %v1333 = vadd.f32 0.0, %v1332
        %v1334 = vpop.f32.mrb[0].mxu0
        %1335 = vmatprep.mubr.f32.mxu0 0.0
        %1336 = vmatmul.mubr.f32.gmra.mrb[0].mxu0 %v909
        %v1337 = vpop.f32.mrb[0].mxu0
        %v1338 = vadd.f32 0.0, %v1337
        %v1339 = vpop.f32.mrb[0].mxu0
        %1340 = vmatprep.mubr.f32.mxu0 0.0
        %1341 = vmatmul.mubr.f32.gmra.mrb[0].mxu0 %v912
        %v1342 = vpop.f32.mrb[0].mxu0
        %v1343 = vadd.f32 0.0, %v1342
        %v1344 = vpop.f32.mrb[0].mxu0
        %1345 = vmatprep.mubr.f32.mxu0 0.0
        %1346 = vmatmul.mubr.f32.gmra.mrb[0].mxu0 %v915
        %v1347 = vpop.f32.mrb[0].mxu0
        %v1348 = vadd.f32 0.0, %v1347
        %v1349 = vpop.f32.mrb[0].mxu0
        %1350 = vmatprep.mubr.f32.mxu0 0.0
        %1351 = vmatmul.mubr.f32.gmra.mrb[0].mxu0 %v918
        %v1352 = vpop.f32.mrb[0].mxu0
        %v1353 = vadd.f32 0.0, %v1352
        %v1354 = vpop.f32.mrb[0].mxu0
        %1355 = vmatprep.mubr.f32.mxu0 0.0
        %1356 = vmatmul.mubr.f32.gmra.mrb[0].mxu0 %v921
        %v1357 = vpop.f32.mrb[0].mxu0
        %v1358 = vadd.f32 0.0, %v1357
        %v1359 = vpop.f32.mrb[0].mxu0
        %1360 = vmatprep.mubr.f32.mxu0 0.0
        %1361 = vmatmul.mubr.f32.gmra.mrb[0].mxu0 %v924
        %v1362 = vpop.f32.mrb[0].mxu0
        %v1363 = vadd.f32 0.0, %v1362
        %v1364 = vpop.f32.mrb[0].mxu0
        %1365 = vmatprep.mubr.f32.mxu0 0.0
        %1366 = vmatmul.mubr.f32.gmra.mrb[0].mxu0 %v927
        %v1367 = vpop.f32.mrb[0].mxu0
        %v1368 = vadd.f32 0.0, %v1367
        %v1369 = vpop.f32.mrb[0].mxu0
        %1370 = vmatprep.mubr.f32.mxu0 0.0
        %1371 = vmatmul.mubr.f32.gmra.mrb[0].mxu0 %v930
        %v1372 = vpop.f32.mrb[0].mxu0
        %v1373 = vadd.f32 0.0, %v1372
        %v1374 = vpop.f32.mrb[0].mxu0
        %1375 = vmatprep.mubr.f32.mxu0 0.0
        %1376 = vmatmul.mubr.f32.gmra.mrb[0].mxu0 %v933
        %v1377 = vpop.f32.mrb[0].mxu0
        %v1378 = vadd.f32 0.0, %v1377
        %v1379 = vpop.f32.mrb[0].mxu0
        %1380 = vmatprep.mubr.f32.mxu0 0.0
        %1381 = vmatmul.mubr.f32.gmra.mrb[0].mxu0 %v936
        %v1382 = vpop.f32.mrb[0].mxu0
        %v1383 = vadd.f32 0.0, %v1382
        %v1384 = vpop.f32.mrb[0].mxu0
        %1385 = vmatprep.mubr.f32.mxu0 0.0
        %1386 = vmatmul.mubr.f32.gmra.mrb[0].mxu0 %v939
        %v1387 = vpop.f32.mrb[0].mxu0
        %v1388 = vadd.f32 0.0, %v1387
        %v1389 = vpop.f32.mrb[0].mxu0
        %1390 = vdwg.mxu0
        %v1391 = vxor.u32 %v1152, 2147483648
        %v1392 = vxor.u32 %v1154, 2147483648
        %v1393 = vxor.u32 %v1313, 2147483648
        %v1394 = vxor.u32 %v1158, 2147483648
        %v1395 = vxor.u32 %v1160, 2147483648
        %v1396 = vxor.u32 %v1318, 2147483648
        %v1397 = vxor.u32 %v1164, 2147483648
        %v1398 = vxor.u32 %v1166, 2147483648
        %v1399 = vxor.u32 %v1323, 2147483648
        %v1400 = vxor.u32 %v1170, 2147483648
        %v1401 = vxor.u32 %v1172, 2147483648
        %v1402 = vxor.u32 %v1328, 2147483648
        %v1403 = vxor.u32 %v1176, 2147483648
        %v1404 = vxor.u32 %v1178, 2147483648
        %v1405 = vxor.u32 %v1333, 2147483648
        %v1406 = vxor.u32 %v1182, 2147483648
        %v1407 = vxor.u32 %v1184, 2147483648
        %v1408 = vxor.u32 %v1338, 2147483648
        %v1409 = vxor.u32 %v1188, 2147483648
        %v1410 = vxor.u32 %v1190, 2147483648
        %v1411 = vxor.u32 %v1343, 2147483648
        %v1412 = vxor.u32 %v1194, 2147483648
        %v1413 = vxor.u32 %v1196, 2147483648
        %v1414 = vxor.u32 %v1348, 2147483648
        %v1415 = vxor.u32 %v1200, 2147483648
        %v1416 = vxor.u32 %v1202, 2147483648
        %v1417 = vxor.u32 %v1353, 2147483648
        %v1418 = vxor.u32 %v1206, 2147483648
        %v1419 = vxor.u32 %v1208, 2147483648
        %v1420 = vxor.u32 %v1358, 2147483648
        %v1421 = vxor.u32 %v1212, 2147483648
        %v1422 = vxor.u32 %v1214, 2147483648
        %v1423 = vxor.u32 %v1363, 2147483648
        %v1424 = vxor.u32 %v1218, 2147483648
        %v1425 = vxor.u32 %v1220, 2147483648
        %v1426 = vxor.u32 %v1368, 2147483648
        %v1427 = vxor.u32 %v1224, 2147483648
        %v1428 = vxor.u32 %v1226, 2147483648
        %v1429 = vxor.u32 %v1373, 2147483648
        %v1430 = vxor.u32 %v1230, 2147483648
        %v1431 = vxor.u32 %v1232, 2147483648
        %v1432 = vxor.u32 %v1378, 2147483648
        %v1433 = vxor.u32 %v1236, 2147483648
        %v1434 = vxor.u32 %v1238, 2147483648
        %v1435 = vxor.u32 %v1383, 2147483648
        %v1436 = vxor.u32 %v1242, 2147483648
        %v1437 = vxor.u32 %v1244, 2147483648
        %v1438 = vxor.u32 %v1388, 2147483648
        %v1439 = vmul.f32 %v1391, 1.442695
        %v1440 = vpow.pop %v1439
        %v1441 = vmul.f32 %v1392, 1.442695
        %v1442 = vpow.pop %v1441
        %v1443 = vmul.f32 %v1393, 1.442695
        %v1444 = vpow.pop %v1443
        %v1445 = vmul.f32 %v1394, 1.442695
        %v1446 = vpow.pop %v1445
        %v1447 = vmul.f32 %v1395, 1.442695
        %v1448 = vpow.pop %v1447
        %v1449 = vmul.f32 %v1396, 1.442695
        %v1450 = vpow.pop %v1449
        %v1451 = vmul.f32 %v1397, 1.442695
        %v1452 = vpow.pop %v1451
        %v1453 = vmul.f32 %v1398, 1.442695
        %v1454 = vpow.pop %v1453
        %v1455 = vmul.f32 %v1399, 1.442695
        %v1456 = vpow.pop %v1455
        %v1457 = vmul.f32 %v1400, 1.442695
        %v1458 = vpow.pop %v1457
        %v1459 = vmul.f32 %v1401, 1.442695
        %v1460 = vpow.pop %v1459
        %v1461 = vmul.f32 %v1402, 1.442695
        %v1462 = vpow.pop %v1461
        %v1463 = vmul.f32 %v1403, 1.442695
        %v1464 = vpow.pop %v1463
        %v1465 = vmul.f32 %v1404, 1.442695
        %v1466 = vpow.pop %v1465
        %v1467 = vmul.f32 %v1405, 1.442695
        %v1468 = vpow.pop %v1467
        %v1469 = vmul.f32 %v1406, 1.442695
        %v1470 = vpow.pop %v1469
        %v1471 = vmul.f32 %v1407, 1.442695
        %v1472 = vpow.pop %v1471
        %v1473 = vmul.f32 %v1408, 1.442695
        %v1474 = vpow.pop %v1473
        %v1475 = vmul.f32 %v1409, 1.442695
        %v1476 = vpow.pop %v1475
        %v1477 = vmul.f32 %v1410, 1.442695
        %v1478 = vpow.pop %v1477
        %v1479 = vmul.f32 %v1411, 1.442695
        %v1480 = vpow.pop %v1479
        %v1481 = vmul.f32 %v1412, 1.442695
        %v1482 = vpow.pop %v1481
        %v1483 = vmul.f32 %v1413, 1.442695
        %v1484 = vpow.pop %v1483
        %v1485 = vmul.f32 %v1414, 1.442695
        %v1486 = vpow.pop %v1485
        %v1487 = vmul.f32 %v1415, 1.442695
        %v1488 = vpow.pop %v1487
        %v1489 = vmul.f32 %v1416, 1.442695
        %v1490 = vpow.pop %v1489
        %v1491 = vmul.f32 %v1417, 1.442695
        %v1492 = vpow.pop %v1491
        %v1493 = vmul.f32 %v1418, 1.442695
        %v1494 = vpow.pop %v1493
        %v1495 = vmul.f32 %v1419, 1.442695
        %v1496 = vpow.pop %v1495
        %v1497 = vmul.f32 %v1420, 1.442695
        %v1498 = vpow.pop %v1497
        %v1499 = vmul.f32 %v1421, 1.442695
        %v1500 = vpow.pop %v1499
        %v1501 = vmul.f32 %v1422, 1.442695
        %v1502 = vpow.pop %v1501
        %v1503 = vmul.f32 %v1423, 1.442695
        %v1504 = vpow.pop %v1503
        %v1505 = vmul.f32 %v1424, 1.442695
        %v1506 = vpow.pop %v1505
        %v1507 = vmul.f32 %v1425, 1.442695
        %v1508 = vpow.pop %v1507
        %v1509 = vmul.f32 %v1426, 1.442695
        %v1510 = vpow.pop %v1509
        %v1511 = vmul.f32 %v1427, 1.442695
        %v1512 = vpow.pop %v1511
        %v1513 = vmul.f32 %v1428, 1.442695
        %v1514 = vpow.pop %v1513
        %v1515 = vmul.f32 %v1429, 1.442695
        %v1516 = vpow.pop %v1515
        %v1517 = vmul.f32 %v1430, 1.442695
        %v1518 = vpow.pop %v1517
        %v1519 = vmul.f32 %v1431, 1.442695
        %v1520 = vpow.pop %v1519
        %v1521 = vmul.f32 %v1432, 1.442695
        %v1522 = vpow.pop %v1521
        %v1523 = vmul.f32 %v1433, 1.442695
        %v1524 = vpow.pop %v1523
        %v1525 = vmul.f32 %v1434, 1.442695
        %v1526 = vpow.pop %v1525
        %v1527 = vmul.f32 %v1435, 1.442695
        %v1528 = vpow.pop %v1527
        %v1529 = vmul.f32 %v1436, 1.442695
        %v1530 = vpow.pop %v1529
        %v1531 = vmul.f32 %v1437, 1.442695
        %v1532 = vpow.pop %v1531
        %v1533 = vmul.f32 %v1438, 1.442695
        %v1534 = vpow.pop %v1533
        %v1535 = vadd.f32 %v1440, 1.0
        %v1536 = vadd.f32 %v1442, 1.0
        %v1537 = vadd.f32 %v1444, 1.0
        %v1538 = vadd.f32 %v1446, 1.0
        %v1539 = vadd.f32 %v1448, 1.0
        %v1540 = vadd.f32 %v1450, 1.0
        %v1541 = vadd.f32 %v1452, 1.0
        %v1542 = vadd.f32 %v1454, 1.0
        %v1543 = vadd.f32 %v1456, 1.0
        %v1544 = vadd.f32 %v1458, 1.0
        %v1545 = vadd.f32 %v1460, 1.0
        %v1546 = vadd.f32 %v1462, 1.0
        %v1547 = vadd.f32 %v1464, 1.0
        %v1548 = vadd.f32 %v1466, 1.0
        %v1549 = vadd.f32 %v1468, 1.0
        %v1550 = vadd.f32 %v1470, 1.0
        %v1551 = vadd.f32 %v1472, 1.0
        %v1552 = vadd.f32 %v1474, 1.0
        %v1553 = vadd.f32 %v1476, 1.0
        %v1554 = vadd.f32 %v1478, 1.0
        %v1555 = vadd.f32 %v1480, 1.0
        %v1556 = vadd.f32 %v1482, 1.0
        %v1557 = vadd.f32 %v1484, 1.0
        %v1558 = vadd.f32 %v1486, 1.0
        %v1559 = vadd.f32 %v1488, 1.0
        %v1560 = vadd.f32 %v1490, 1.0
        %v1561 = vadd.f32 %v1492, 1.0
        %v1562 = vadd.f32 %v1494, 1.0
        %v1563 = vadd.f32 %v1496, 1.0
        %v1564 = vadd.f32 %v1498, 1.0
        %v1565 = vadd.f32 %v1500, 1.0
        %v1566 = vadd.f32 %v1502, 1.0
        %v1567 = vadd.f32 %v1504, 1.0
        %v1568 = vadd.f32 %v1506, 1.0
        %v1569 = vadd.f32 %v1508, 1.0
        %v1570 = vadd.f32 %v1510, 1.0
        %v1571 = vadd.f32 %v1512, 1.0
        %v1572 = vadd.f32 %v1514, 1.0
        %v1573 = vadd.f32 %v1516, 1.0
        %v1574 = vadd.f32 %v1518, 1.0
        %v1575 = vadd.f32 %v1520, 1.0
        %v1576 = vadd.f32 %v1522, 1.0
        %v1577 = vadd.f32 %v1524, 1.0
        %v1578 = vadd.f32 %v1526, 1.0
        %v1579 = vadd.f32 %v1528, 1.0
        %v1580 = vadd.f32 %v1530, 1.0
        %v1581 = vadd.f32 %v1532, 1.0
        %v1582 = vadd.f32 %v1534, 1.0
        %v1583 = vrcp.pop %v1535
        %v1584 = vmul.f32 1.0, %v1583
        %v1585 = vrcp.pop %v1536
        %v1586 = vmul.f32 1.0, %v1585
        %v1587 = vrcp.pop %v1537
        %v1588 = vmul.f32 1.0, %v1587
        %v1589 = vrcp.pop %v1538
        %v1590 = vmul.f32 1.0, %v1589
        %v1591 = vrcp.pop %v1539
        %v1592 = vmul.f32 1.0, %v1591
        %v1593 = vrcp.pop %v1540
        %v1594 = vmul.f32 1.0, %v1593
        %v1595 = vrcp.pop %v1541
        %v1596 = vmul.f32 1.0, %v1595
        %v1597 = vrcp.pop %v1542
        %v1598 = vmul.f32 1.0, %v1597
        %v1599 = vrcp.pop %v1543
        %v1600 = vmul.f32 1.0, %v1599
        %v1601 = vrcp.pop %v1544
        %v1602 = vmul.f32 1.0, %v1601
        %v1603 = vrcp.pop %v1545
        %v1604 = vmul.f32 1.0, %v1603
        %v1605 = vrcp.pop %v1546
        %v1606 = vmul.f32 1.0, %v1605
        %v1607 = vrcp.pop %v1547
        %v1608 = vmul.f32 1.0, %v1607
        %v1609 = vrcp.pop %v1548
        %v1610 = vmul.f32 1.0, %v1609
        %v1611 = vrcp.pop %v1549
        %v1612 = vmul.f32 1.0, %v1611
        %v1613 = vrcp.pop %v1550
        %v1614 = vmul.f32 1.0, %v1613
        %v1615 = vrcp.pop %v1551
        %v1616 = vmul.f32 1.0, %v1615
        %v1617 = vrcp.pop %v1552
        %v1618 = vmul.f32 1.0, %v1617
        %v1619 = vrcp.pop %v1553
        %v1620 = vmul.f32 1.0, %v1619
        %v1621 = vrcp.pop %v1554
        %v1622 = vmul.f32 1.0, %v1621
        %v1623 = vrcp.pop %v1555
        %v1624 = vmul.f32 1.0, %v1623
        %v1625 = vrcp.pop %v1556
        %v1626 = vmul.f32 1.0, %v1625
        %v1627 = vrcp.pop %v1557
        %v1628 = vmul.f32 1.0, %v1627
        %v1629 = vrcp.pop %v1558
        %v1630 = vmul.f32 1.0, %v1629
        %v1631 = vrcp.pop %v1559
        %v1632 = vmul.f32 1.0, %v1631
        %v1633 = vrcp.pop %v1560
        %v1634 = vmul.f32 1.0, %v1633
        %v1635 = vrcp.pop %v1561
        %v1636 = vmul.f32 1.0, %v1635
        %v1637 = vrcp.pop %v1562
        %v1638 = vmul.f32 1.0, %v1637
        %v1639 = vrcp.pop %v1563
        %v1640 = vmul.f32 1.0, %v1639
        %v1641 = vrcp.pop %v1564
        %v1642 = vmul.f32 1.0, %v1641
        %v1643 = vrcp.pop %v1565
        %v1644 = vmul.f32 1.0, %v1643
        %v1645 = vrcp.pop %v1566
        %v1646 = vmul.f32 1.0, %v1645
        %v1647 = vrcp.pop %v1567
        %v1648 = vmul.f32 1.0, %v1647
        %v1649 = vrcp.pop %v1568
        %v1650 = vmul.f32 1.0, %v1649
        %v1651 = vrcp.pop %v1569
        %v1652 = vmul.f32 1.0, %v1651
        %v1653 = vrcp.pop %v1570
        %v1654 = vmul.f32 1.0, %v1653
        %v1655 = vrcp.pop %v1571
        %v1656 = vmul.f32 1.0, %v1655
        %v1657 = vrcp.pop %v1572
        %v1658 = vmul.f32 1.0, %v1657
        %v1659 = vrcp.pop %v1573
        %v1660 = vmul.f32 1.0, %v1659
        %v1661 = vrcp.pop %v1574
        %v1662 = vmul.f32 1.0, %v1661
        %v1663 = vrcp.pop %v1575
        %v1664 = vmul.f32 1.0, %v1663
        %v1665 = vrcp.pop %v1576
        %v1666 = vmul.f32 1.0, %v1665
        %v1667 = vrcp.pop %v1577
        %v1668 = vmul.f32 1.0, %v1667
        %v1669 = vrcp.pop %v1578
        %v1670 = vmul.f32 1.0, %v1669
        %v1671 = vrcp.pop %v1579
        %v1672 = vmul.f32 1.0, %v1671
        %v1673 = vrcp.pop %v1580
        %v1674 = vmul.f32 1.0, %v1673
        %v1675 = vrcp.pop %v1581
        %v1676 = vmul.f32 1.0, %v1675
        %v1677 = vrcp.pop %v1582
        %v1678 = vmul.f32 1.0, %v1677
        %v1679 = vsub.f32 %v353, %v1584
        %v1680 = vsub.f32 %v354, %v1586
        %v1681 = vsub.f32 %v355, %v1588
        %v1682 = vsub.f32 %v356, %v1590
        %v1683 = vsub.f32 %v357, %v1592
        %v1684 = vsub.f32 %v358, %v1594
        %v1685 = vsub.f32 %v359, %v1596
        %v1686 = vsub.f32 %v360, %v1598
        %v1687 = vsub.f32 %v361, %v1600
        %v1688 = vsub.f32 %v362, %v1602
        %v1689 = vsub.f32 %v363, %v1604
        %v1690 = vsub.f32 %v364, %v1606
        %v1691 = vsub.f32 %v365, %v1608
        %v1692 = vsub.f32 %v366, %v1610
        %v1693 = vsub.f32 %v367, %v1612
        %v1694 = vsub.f32 %v368, %v1614
        %v1695 = vsub.f32 %v369, %v1616
        %v1696 = vsub.f32 %v370, %v1618
        %v1697 = vsub.f32 %v371, %v1620
        %v1698 = vsub.f32 %v372, %v1622
        %v1699 = vsub.f32 %v373, %v1624
        %v1700 = vsub.f32 %v374, %v1626
        %v1701 = vsub.f32 %v375, %v1628
        %v1702 = vsub.f32 %v376, %v1630
        %v1703 = vsub.f32 %v377, %v1632
        %v1704 = vsub.f32 %v378, %v1634
        %v1705 = vsub.f32 %v379, %v1636
        %v1706 = vsub.f32 %v380, %v1638
        %v1707 = vsub.f32 %v381, %v1640
        %v1708 = vsub.f32 %v382, %v1642
        %v1709 = vsub.f32 %v383, %v1644
        %v1710 = vsub.f32 %v384, %v1646
        %v1711 = vsub.f32 %v385, %v1648
        %v1712 = vsub.f32 %v386, %v1650
        %v1713 = vsub.f32 %v387, %v1652
        %v1714 = vsub.f32 %v388, %v1654
        %v1715 = vsub.f32 %v389, %v1656
        %v1716 = vsub.f32 %v390, %v1658
        %v1717 = vsub.f32 %v391, %v1660
        %v1718 = vsub.f32 %v392, %v1662
        %v1719 = vsub.f32 %v393, %v1664
        %v1720 = vsub.f32 %v394, %v1666
        %v1721 = vsub.f32 %v395, %v1668
        %v1722 = vsub.f32 %v396, %v1670
        %v1723 = vsub.f32 %v397, %v1672
        %v1724 = vsub.f32 %v398, %v1674
        %v1725 = vsub.f32 %v399, %v1676
        %v1726 = vsub.f32 %v400, %v1678
        %v1727 = vmul.f32 %v1679, %v1679
        %v1728 = vmul.f32 %v1680, %v1680
        %v1729 = vmul.f32 %v1681, %v1681
        %v1730 = vmul.f32 %v1682, %v1682
        %v1731 = vmul.f32 %v1683, %v1683
        %v1732 = vmul.f32 %v1684, %v1684
        %v1733 = vmul.f32 %v1685, %v1685
        %v1734 = vmul.f32 %v1686, %v1686
        %v1735 = vmul.f32 %v1687, %v1687
        %v1736 = vmul.f32 %v1688, %v1688
        %v1737 = vmul.f32 %v1689, %v1689
        %v1738 = vmul.f32 %v1690, %v1690
        %v1739 = vmul.f32 %v1691, %v1691
        %v1740 = vmul.f32 %v1692, %v1692
        %v1741 = vmul.f32 %v1693, %v1693
        %v1742 = vmul.f32 %v1694, %v1694
        %v1743 = vmul.f32 %v1695, %v1695
        %v1744 = vmul.f32 %v1696, %v1696
        %v1745 = vmul.f32 %v1697, %v1697
        %v1746 = vmul.f32 %v1698, %v1698
        %v1747 = vmul.f32 %v1699, %v1699
        %v1748 = vmul.f32 %v1700, %v1700
        %v1749 = vmul.f32 %v1701, %v1701
        %v1750 = vmul.f32 %v1702, %v1702
        %v1751 = vmul.f32 %v1703, %v1703
        %v1752 = vmul.f32 %v1704, %v1704
        %v1753 = vmul.f32 %v1705, %v1705
        %v1754 = vmul.f32 %v1706, %v1706
        %v1755 = vmul.f32 %v1707, %v1707
        %v1756 = vmul.f32 %v1708, %v1708
        %v1757 = vmul.f32 %v1709, %v1709
        %v1758 = vmul.f32 %v1710, %v1710
        %v1759 = vmul.f32 %v1711, %v1711
        %v1760 = vmul.f32 %v1712, %v1712
        %v1761 = vmul.f32 %v1713, %v1713
        %v1762 = vmul.f32 %v1714, %v1714
        %v1763 = vmul.f32 %v1715, %v1715
        %v1764 = vmul.f32 %v1716, %v1716
        %v1765 = vmul.f32 %v1717, %v1717
        %v1766 = vmul.f32 %v1718, %v1718
        %v1767 = vmul.f32 %v1719, %v1719
        %v1768 = vmul.f32 %v1720, %v1720
        %v1769 = vmul.f32 %v1721, %v1721
        %v1770 = vmul.f32 %v1722, %v1722
        %v1771 = vmul.f32 %v1723, %v1723
        %v1772 = vmul.f32 %v1724, %v1724
        %v1773 = vmul.f32 %v1725, %v1725
        %v1774 = vmul.f32 %v1726, %v1726
        %v1775 = vadd.f32 %v1727, %v1728
        %v1776 = vadd.f32 %v1775, %v1729
        %v1777 = vadd.f32 %v1776, %v1730
        %v1778 = vadd.f32 %v1777, %v1731
        %v1779 = vadd.f32 %v1778, %v1732
        %v1780 = vadd.f32 %v1779, %v1733
        %v1781 = vadd.f32 %v1780, %v1734
        %v1782 = vadd.f32 %v1781, %v1735
        %v1783 = vadd.f32 %v1782, %v1736
        %v1784 = vadd.f32 %v1783, %v1737
        %v1785 = vadd.f32 %v1784, %v1738
        %v1786 = vadd.f32 %v1785, %v1739
        %v1787 = vadd.f32 %v1786, %v1740
        %v1788 = vadd.f32 %v1787, %v1741
        %v1789 = vadd.f32 %v1788, %v1742
        %v1790 = vadd.f32 %v1789, %v1743
        %v1791 = vadd.f32 %v1790, %v1744
        %v1792 = vadd.f32 %v1791, %v1745
        %v1793 = vadd.f32 %v1792, %v1746
        %v1794 = vadd.f32 %v1793, %v1747
        %v1795 = vadd.f32 %v1794, %v1748
        %v1796 = vadd.f32 %v1795, %v1749
        %v1797 = vadd.f32 %v1796, %v1750
        %v1798 = vadd.f32 %v1797, %v1751
        %v1799 = vadd.f32 %v1798, %v1752
        %v1800 = vadd.f32 %v1799, %v1753
        %v1801 = vadd.f32 %v1800, %v1754
        %v1802 = vadd.f32 %v1801, %v1755
        %v1803 = vadd.f32 %v1802, %v1756
        %v1804 = vadd.f32 %v1803, %v1757
        %v1805 = vadd.f32 %v1804, %v1758
        %v1806 = vadd.f32 %v1805, %v1759
        %v1807 = vadd.f32 %v1806, %v1760
        %v1808 = vadd.f32 %v1807, %v1761
        %v1809 = vadd.f32 %v1808, %v1762
        %v1810 = vadd.f32 %v1809, %v1763
        %v1811 = vadd.f32 %v1810, %v1764
        %v1812 = vadd.f32 %v1811, %v1765
        %v1813 = vadd.f32 %v1812, %v1766
        %v1814 = vadd.f32 %v1813, %v1767
        %v1815 = vadd.f32 %v1814, %v1768
        %v1816 = vadd.f32 %v1815, %v1769
        %v1817 = vadd.f32 %v1816, %v1770
        %v1818 = vadd.f32 %v1817, %v1771
        %v1819 = vadd.f32 %v1818, %v1772
        %v1820 = vadd.f32 %v1819, %v1773
        %v1821 = vadd.f32 %v1820, %v1774
        %1822 = vadd.xlane.f32.xlu0 %v1821
        %v1823 = vpop.xlane.xlu0 %1822
        %v1824 = vrot.slane %v1823, 4
        %v1825 = vadd.f32 %v1823, %v1824
        %v1826 = vrot.slane %v1825, 2
        %v1827 = vadd.f32 %v1825, %v1826
        %v1828 = vrot.slane %v1827, 1
        %v1829 = vadd.f32 %v1827, %v1828
        %s1830 = vtos %v1829
        %v1831 = vlaneseq
        %v1832 = vshrl.u32 %v1831, 7
        %vm1833 = vcmp.eq.s32.totalorder %v1832, 0
        %v1834 = vstv %s827
        %v1835 = vsel %vm1833, %v1834, 0.0
        %v1836 = vadd.f32 %v1835, 0.0
        %vm1837 = vcmp.eq.s32.totalorder %v1832, 1
        %v1838 = vstv %s1830
        %v1839 = vsel %vm1837, %v1838, 0.0
        %v1840 = vadd.f32 %v1836, %v1839
        %1841 = vst [vmem:[%s349] sm:$0xff] %v1840
        %s1842 = sand.u32 %s154, 1
        %s1843 = scalar_lea.sflag [#allocation4], %s1842
        %s1844 = sand.u32 %s154, 1
        %s1845 = smul.addr %s1844, 8
        %s1846 = scalar_lea.vmem [#allocation11], %s1845
        // Predicated region
        $region61: #{spamics_forward.15} parent=39 // pred_check
          %p1847 = pneg %p164
        $region62: #{spamics_forward.15} parent=39 // pred_check_branch
          %1849 = sbr.rel (%p1847) target = $region64
        $region63: #{spamics_forward.15} parent=39 // pred_region
          %s1851 = ssub.s32 128, 128
          %1852 = vsyncadd %s1843, %s1851
          %s1853 = smul.addr %s26, 128
          %s1854 = scalar_lea.hbm %s5, %s1853
          %s1856 = sshll.u32 %s1846, 4
          %s1857 = int_to_ptr.vmem [resolvable:$true] %s1856
          %1859 = dma.vmem_to_hbm [thread:$0]  %s1857, 128, %s1854, %s1843
        $region64: #{spamics_forward.15} parent=39 // pred_fallthru
          _
      $region40: #{spamics_forward.15} parent=5 // pred_fallthru
        _
      %p1860 = scmp.le.s32.totalorder 2, %s21
      // Predicated region
      $region65: #{spamics_forward.15} parent=5 // pred_check
        %p1861 = pneg %p1860
      $region66: #{spamics_forward.15} parent=5 // pred_check_branch
        %1863 = sbr.rel (%p1861) target = $region68
      $region67: #{spamics_forward.15} parent=5 // pred_region
        %s1864 = ssub.s32 %s21, 2
        // Predicated region
        $region69: #{spamics_forward.15} parent=67 // pred_check
          %p1865 = pneg %p170
        $region70: #{spamics_forward.15} parent=67 // pred_check_branch
          %1867 = sbr.rel (%p1865) target = $region72
        $region71: #{spamics_forward.15} parent=67 // pred_region
          %s1868 = sand.u32 %s155, 1
          %s1869 = scalar_lea.sflag [#allocation4], %s1868
          %s1870 = sand.u32 %s155, 1
          %s1871 = smul.addr %s1870, 8
          %s1872 = scalar_lea.vmem [#allocation11], %s1871
          %1873 = dma.done %s1869, 128
        $region72: #{spamics_forward.15} parent=67 // pred_fallthru
          _
      $region68: #{spamics_forward.15} parent=5 // pred_fallthru
        _
    $region6: #{spamics_forward.15} parent=1 // loop_footer
      %s25 = sadd.s32 1, %s21
    $region7: #{spamics_forward.15} parent=1 // loop_footer_branch
      %20 = sbr.rel target = $region3
    $region8: #{spamics_forward.15} parent=1 // loop_exit
      _
    %1874 = vsyncpa [#allocation3], 1
    %s1875 = scalar_lea.sflag [#allocation3], 1
    %1876 = vsyncpa %s1875, 1
    %1877 = vsyncpa [#allocation6], 1
    %s1878 = scalar_lea.sflag [#allocation6], 1
    %1879 = vsyncpa %s1878, 1
    %1880 = vsyncpa [#allocation9], 1
    %s1881 = scalar_lea.sflag [#allocation9], 1
    %1882 = vsyncpa %s1881, 1
    %1883 = vsyncpa [#allocation4], 1
    %s1884 = scalar_lea.sflag [#allocation4], 1
    %1885 = vsyncpa %s1884, 1

</llo_original>
